<compile_context>
chip_gen: v7x
topology: tpu7x:2x2x1
jax: 0.10.0
libtpu: 0.0.40
codegen_flags: <defaults>
</compile_context>

<pallas_src>
import numpy as np
import jax
import jax.numpy as jnp
from jax.experimental import pallas as pl
from jax.experimental.pallas import tpu as pltpu

OFFSETS = [0, 99, 198, 270, 336]
DIMS = [(9, 11), (9, 11), (9, 8), (6, 11)]
BLOCK = 336
N_BLOCKS = 9
OUT_DIM = N_BLOCKS * BLOCK          # 3024 (output_dim of the Decoder)

SEGW = 11                           # max softmax segment width (8-wide segs padded to 11)
NSEGP = 384                         # 297 segments padded to 3*128 (lane-dense)
PAD_OUT = SEGW * NSEGP              # 4224 = 33*128
NEG = -1e30                         # pad-column bias: exp underflows to exactly 0


def _round_up(v, m):
    return ((v + m - 1) // m) * m


def _build_segment_tables():
    """Enumerate the 297 contiguous softmax segments and the padded-column maps."""
    seg_start, seg_len = [], []
    for i in range(N_BLOCKS):
        for j in range(4):
            r, c = DIMS[j]
            base = i * BLOCK + OFFSETS[j]
            for rr in range(r):
                seg_start.append(base + rr * c)
                seg_len.append(c)
    n_seg = len(seg_start)                                  # 297
    col_src = np.full((PAD_OUT,), -1, dtype=np.int64)       # padded col -> original col
    inv_idx = np.zeros((OUT_DIM,), dtype=np.int32)          # original col -> padded col
    for s in range(n_seg):
        for c in range(seg_len[s]):
            p = c * NSEGP + s
            o = seg_start[s] + c
            col_src[p] = o
            inv_idx[o] = p
    return np.asarray(seg_start), np.asarray(seg_len), col_src, inv_idx


# ----------------------------- fused Pallas kernel -------------------------- #

def _make_decoder_kernel(recompute_exp):
    def kernel(x_ref, w1_ref, b1_ref, w2_ref, b2_ref, w3_ref, b3_ref, o_ref):
        # MLP front: bf16 MXU matmuls, f32 accumulation, f32 biases/ReLU.
        h = jnp.dot(x_ref[...].astype(jnp.bfloat16), w1_ref[...],
                    preferred_element_type=jnp.float32) + b1_ref[...]
        h = jnp.maximum(h, 0.0)
        h = jnp.dot(h.astype(jnp.bfloat16), w2_ref[...],
                    preferred_element_type=jnp.float32) + b2_ref[...]
        h = jnp.maximum(h, 0.0)
        hb = h.astype(jnp.bfloat16)

        # 3rd matmul streamed chunk-by-chunk straight into o_ref; the running
        # per-segment max is fused into the same pass (no (tb, 4224) temp).
        m = None
        for c in range(SEGW):
            lo, hi = c * NSEGP, (c + 1) * NSEGP
            zc = jnp.dot(hb, w3_ref[:, lo:hi],
                         preferred_element_type=jnp.float32) + b3_ref[:, lo:hi]
            o_ref[:, lo:hi] = zc
            m = zc if m is None else jnp.maximum(m, zc)

        if recompute_exp:
            # v5e variant: one store pass total after z; exp recomputed on the
            # otherwise-idle EUP (vst is the binding slot on v5e).
            denom = None
            for c in range(SEGW):
                lo, hi = c * NSEGP, (c + 1) * NSEGP
                e = jnp.exp(o_ref[:, lo:hi] - m)          # pad lanes -> exp(-1e30) == 0
                denom = e if denom is None else denom + e
            inv = pl.reciprocal(denom, approx=True)
            inv = inv * (2.0 - denom * inv)               # one Newton step (~1e-6)
            for c in range(SEGW):
                lo, hi = c * NSEGP, (c + 1) * NSEGP
                o_ref[:, lo:hi] = jnp.exp(o_ref[:, lo:hi] - m) * inv
        else:
            # v6e/v7x variant: exp written in place while accumulating denom,
            # then one in-place scaling pass (no 11 live exp chunks).
            denom = None
            for c in range(SEGW):
                lo, hi = c * NSEGP, (c + 1) * NSEGP
                e = jnp.exp(o_ref[:, lo:hi] - m)
                o_ref[:, lo:hi] = e
                denom = e if denom is None else denom + e
            inv = pl.reciprocal(denom, approx=True)
            inv = inv * (2.0 - denom * inv)
            for c in range(SEGW):
                lo, hi = c * NSEGP, (c + 1) * NSEGP
                o_ref[:, lo:hi] = o_ref[:, lo:hi] * inv
    return kernel


# ------------------------------ Decoder wrapper ------------------------------ #

def _init_linear(key, fan_in, fan_out):
    kw, kb = jax.random.split(key)
    bound = 1.0 / np.sqrt(fan_in)
    w = jax.random.uniform(kw, (fan_in, fan_out), jnp.float32, -bound, bound)
    b = jax.random.uniform(kb, (1, fan_out), jnp.float32, -bound, bound)
    return w, b


def _tpu_generation():
    try:
        kind = jax.devices()[0].device_kind.lower()
    except Exception:
        return "unknown"
    if "v7" in kind:
        return "v7"
    if "v6" in kind:
        return "v6"
    if "v5" in kind:
        return "v5"
    return "unknown"


_GEN_CONFIG = {
    # v7x: half the VMEM of v5e/v6e -> conservative tile + limit, 2 TCs/chip.
    "v7":      dict(tb_cap=128, vmem_limit=32 * 1024 * 1024, recompute_exp=False,
                    split_for_cores=True),
    "v6":      dict(tb_cap=256, vmem_limit=96 * 1024 * 1024, recompute_exp=False,
                    split_for_cores=False),
    "v5":      dict(tb_cap=256, vmem_limit=96 * 1024 * 1024, recompute_exp=True,
                    split_for_cores=False),
    "unknown": dict(tb_cap=128, vmem_limit=32 * 1024 * 1024, recompute_exp=False,
                    split_for_cores=False),
}


class PallasDecoder:
    def __init__(self, z_dim, hidden_dim, output_dim, key):
        assert output_dim == OUT_DIM, "mySoftmax hardcodes output_dim = 9*336 = 3024"
        k1, k2, k3 = jax.random.split(key, 3)
        self.w1, self.b1 = _init_linear(k1, z_dim, hidden_dim)       # f32 (reference)
        self.w2, self.b2 = _init_linear(k2, hidden_dim, hidden_dim)
        self.w3, self.b3 = _init_linear(k3, hidden_dim, output_dim)
        self.z_dim, self.hidden_dim = z_dim, hidden_dim

        self.seg_start, self.seg_len, col_src, inv_idx = _build_segment_tables()
        self.inv_idx = jnp.asarray(inv_idx)

        # Fold the segment gather into the last Linear: permute + pad its columns
        # once at init so the kernel's 3rd matmul emits the padded softmax layout.
        w3_np = np.asarray(self.w3, dtype=np.float32)
        b3_np = np.asarray(self.b3, dtype=np.float32).reshape(-1)
        w3p = np.zeros((hidden_dim, PAD_OUT), dtype=np.float32)
        b3p = np.full((1, PAD_OUT), NEG, dtype=np.float32)
        valid = col_src >= 0
        w3p[:, valid] = w3_np[:, col_src[valid]]
        b3p[0, valid] = b3_np[col_src[valid]]

        # bf16 weights for the MXU (biases stay f32 -- the -1e30 pad bias must
        # stay finite in f32, never become -inf).
        self.w1_k = self.w1.astype(jnp.bfloat16)
        self.w2_k = self.w2.astype(jnp.bfloat16)
        self.w3_k = jnp.asarray(w3p, dtype=jnp.bfloat16)
        self.b3_k = jnp.asarray(b3p)

        gen = _tpu_generation()
        cfg = _GEN_CONFIG[gen]
        self._gen = gen
        self._tb_cap = cfg["tb_cap"]
        self._vmem_limit = cfg["vmem_limit"]
        self._split_for_cores = cfg["split_for_cores"]
        self._kernel = _make_decoder_kernel(cfg["recompute_exp"])
        self._use_buffered = True   # drop to False if pl.Buffered(1) is rejected

        self._fwd = jax.jit(self._forward, static_argnums=(1,))

    def _choose_tile(self, B):
        b16 = _round_up(max(B, 1), 16)           # bf16 packs 16 rows per vreg
        if self._split_for_cores and B > 16:
            # >= 2 grid steps so both v7x TensorCores get work.
            tb = min(self._tb_cap, _round_up((B + 1) // 2, 16))
        else:
            tb = min(self._tb_cap, b16)
        b_pad = _round_up(B, tb)
        return tb, b_pad

    def _forward(self, x, use_buffered):
        B = x.shape[0]
        tb, b_pad = self._choose_tile(B)
        if b_pad != B:
            x = jnp.pad(x, ((0, b_pad - B), (0, 0)))

        zd, hd = self.z_dim, self.hidden_dim
        # Invariant operands don't need double-buffering: halves resident VMEM.
        wkw = {"pipeline_mode": pl.Buffered(1)} if use_buffered else {}

        out_padded = pl.pallas_call(
            self._kernel,
            out_shape=jax.ShapeDtypeStruct((b_pad, PAD_OUT), jnp.float32),
            grid_spec=pltpu.PrefetchScalarGridSpec(
                num_scalar_prefetch=0,
                grid=(b_pad // tb,),
                in_specs=[
                    pl.BlockSpec((tb, zd), lambda i: (i, 0)),        # x: tiled over batch
                    pl.BlockSpec((zd, hd), lambda i: (0, 0), **wkw), # weights: resident
                    pl.BlockSpec((1, hd), lambda i: (0, 0), **wkw),
                    pl.BlockSpec((hd, hd), lambda i: (0, 0), **wkw),
                    pl.BlockSpec((1, hd), lambda i: (0, 0), **wkw),
                    pl.BlockSpec((hd, PAD_OUT), lambda i: (0, 0), **wkw),
                    pl.BlockSpec((1, PAD_OUT), lambda i: (0, 0), **wkw),
                ],
                out_specs=pl.BlockSpec((tb, PAD_OUT), lambda i: (i, 0)),
            ),
            compiler_params=pltpu.CompilerParams(
                dimension_semantics=("parallel",),   # megacore sharding on v7x
                vmem_limit_bytes=self._vmem_limit,
            ),
        )(x, self.w1_k, self.b1, self.w2_k, self.b2, self.w3_k, self.b3_k)

        # Undo the column permutation/padding (select 3024 of 4224 columns).
        # TODO(synk): this inverse column permutation stays as one small XLA
        # gather; an arbitrary in-kernel lane scatter has no clean Pallas/Mosaic
        # equivalent.  Consumers that accept the padded segment-major layout
        # could read `out_padded` directly and skip it.
        return out_padded[:B, :][:, self.inv_idx]

    def __call__(self, x):
        if self._use_buffered:
            try:
                return self._fwd(x, True)
            except Exception:
                # This jax/libtpu rejected pipeline_mode=pl.Buffered(1); fall
                # back to default (double-buffered) resident weights.
                self._use_buffered = False
        return self._fwd(x, False)


# ------------------------------ pure-JAX reference --------------------------- #

def _reference(x, w1, b1, w2, b2, w3, b3):
    h = jnp.maximum(x @ w1 + b1, 0.0)
    h = jnp.maximum(h @ w2 + b2, 0.0)
    y = h @ w3 + b3
    pieces = []
    for i in range(N_BLOCKS):
        for j in range(4):
            r, c = DIMS[j]
            seg = y[:, i * BLOCK + OFFSETS[j]: i * BLOCK + OFFSETS[j + 1]]
            seg = jax.nn.softmax(seg.reshape(x.shape[0], r, c), axis=2)
            pieces.append(seg.reshape(x.shape[0], r * c))
    return jnp.concatenate(pieces, axis=1)


if __name__ == "__main__":
    key = jax.random.PRNGKey(0)
    kx, kp = jax.random.split(key)

    B, Z_DIM, HIDDEN = 2, 16, 32
    x = jax.random.normal(kx, (B, Z_DIM), dtype=jnp.float32)

    decoder = PallasDecoder(Z_DIM, HIDDEN, OUT_DIM, kp)
    out = jax.block_until_ready(decoder(x))
    assert out.shape == (B, OUT_DIM)

    ref = np.asarray(_reference(x, decoder.w1, decoder.b1, decoder.w2,
                                decoder.b2, decoder.w3, decoder.b3))
    out_np = np.asarray(out)

    # Matmuls run in bf16 (f32 accumulation), so compare against the f32
    # reference with a correspondingly loosened tolerance.
    np.testing.assert_allclose(out_np, ref, rtol=2e-2, atol=2e-2)

    # Structural invariant: every softmax segment sums to 1 (approx-recip + one
    # Newton step keeps this to ~1e-6).
    for start, length in zip(decoder.seg_start, decoder.seg_len):
        np.testing.assert_allclose(out_np[:, start:start + length].sum(axis=1),
                                   np.ones((B,), np.float32), rtol=5e-5, atol=5e-5)

    print("KERNEL_OK")
</pallas_src>

<mosaic_0001>
module attributes {stable_mosaic.version = 11 : i64} {
  func.func private @main(%arg0: i32) attributes {dimension_semantics = [#tpu.dimension_semantics<core_parallel>], iteration_bounds = array<i64: 2>, tpu.core_type = #tpu.core_type<sc_scalar_subcore>, window_params = []} {
    return
  }
}

module attributes {stable_mosaic.version = 11 : i64} {
  func.func private @main(%arg0: i32) attributes {dimension_semantics = [#tpu.dimension_semantics<core_parallel>], iteration_bounds = array<i64: 2>, tpu.core_type = #tpu.core_type<sc_scalar_subcore>, window_params = []} {
    return
  }
}

module attributes {stable_mosaic.version = 11 : i64} {
  func.func @kernel(%arg0: i32, %arg1: memref<16x16xf32, #tpu.memory_space<vmem>>, %arg2: memref<16x32xbf16, #tpu.memory_space<vmem>>, %arg3: memref<1x32xf32, #tpu.memory_space<vmem>>, %arg4: memref<32x32xbf16, #tpu.memory_space<vmem>>, %arg5: memref<1x32xf32, #tpu.memory_space<vmem>>, %arg6: memref<32x4224xbf16, #tpu.memory_space<vmem>>, %arg7: memref<1x4224xf32, #tpu.memory_space<vmem>>, %arg8: memref<16x4224xf32, #tpu.memory_space<vmem>>) attributes {dimension_semantics = [#tpu.dimension_semantics<parallel>], iteration_bounds = array<i64: 1>, scalar_prefetch = 0 : i64, scratch_operands = 0 : i64, tpu.core_type = #tpu.core_type<tc>, window_params = [{transform_indices = @transform_0, window_bounds = array<i64: 16, 16>}, {pipeline_mode = #tpu.pipeline_mode<synchronous>, transform_indices = @transform_1, window_bounds = array<i64: 16, 32>}, {pipeline_mode = #tpu.pipeline_mode<synchronous>, transform_indices = @transform_2, window_bounds = array<i64: 1, 32>}, {pipeline_mode = #tpu.pipeline_mode<synchronous>, transform_indices = @transform_3, window_bounds = array<i64: 32, 32>}, {pipeline_mode = #tpu.pipeline_mode<synchronous>, transform_indices = @transform_4, window_bounds = array<i64: 1, 32>}, {pipeline_mode = #tpu.pipeline_mode<synchronous>, transform_indices = @transform_5, window_bounds = array<i64: 32, 4224>}, {pipeline_mode = #tpu.pipeline_mode<synchronous>, transform_indices = @transform_6, window_bounds = array<i64: 1, 4224>}, {transform_indices = @transform_7, window_bounds = array<i64: 16, 4224>}]} {
    %c0 = arith.constant 0 : index
    %c0_0 = arith.constant 0 : index
    %0 = vector.load %arg1[%c0, %c0_0] : memref<16x16xf32, #tpu.memory_space<vmem>>, vector<16x16xf32>
    %1 = arith.truncf %0 : vector<16x16xf32> to vector<16x16xbf16>
    %c0_1 = arith.constant 0 : index
    %c0_2 = arith.constant 0 : index
    %2 = vector.load %arg2[%c0_1, %c0_2] : memref<16x32xbf16, #tpu.memory_space<vmem>>, vector<16x32xbf16>
    %cst = arith.constant dense<0.000000e+00> : vector<16x32xf32>
    %3 = tpu.matmul %1, %2, %cst {dimension_numbers = #tpu.dot_dimension_numbers<[1], [0], [0], [1], [0, 0, 1, 1], [], []>} : vector<16x16xbf16>, vector<16x32xbf16>, vector<16x32xf32> -> vector<16x32xf32>
    %c0_3 = arith.constant 0 : index
    %c0_4 = arith.constant 0 : index
    %4 = vector.load %arg3[%c0_3, %c0_4] : memref<1x32xf32, #tpu.memory_space<vmem>>, vector<1x32xf32>
    %5 = vector.broadcast %4 : vector<1x32xf32> to vector<16x32xf32>
    %6 = arith.addf %3, %5 : vector<16x32xf32>
    %cst_5 = arith.constant 0.000000e+00 : f32
    %7 = vector.broadcast %cst_5 : f32 to vector<16x32xf32>
    %8 = arith.maximumf %6, %7 : vector<16x32xf32>
    %9 = arith.truncf %8 : vector<16x32xf32> to vector<16x32xbf16>
    %c0_6 = arith.constant 0 : index
    %c0_7 = arith.constant 0 : index
    %10 = vector.load %arg4[%c0_6, %c0_7] : memref<32x32xbf16, #tpu.memory_space<vmem>>, vector<32x32xbf16>
    %cst_8 = arith.constant dense<0.000000e+00> : vector<16x32xf32>
    %11 = tpu.matmul %9, %10, %cst_8 {dimension_numbers = #tpu.dot_dimension_numbers<[1], [0], [0], [1], [0, 0, 1, 1], [], []>} : vector<16x32xbf16>, vector<32x32xbf16>, vector<16x32xf32> -> vector<16x32xf32>
    %c0_9 = arith.constant 0 : index
    %c0_10 = arith.constant 0 : index
    %12 = vector.load %arg5[%c0_9, %c0_10] : memref<1x32xf32, #tpu.memory_space<vmem>>, vector<1x32xf32>
    %13 = vector.broadcast %12 : vector<1x32xf32> to vector<16x32xf32>
    %14 = arith.addf %11, %13 : vector<16x32xf32>
    %cst_11 = arith.constant 0.000000e+00 : f32
    %15 = vector.broadcast %cst_11 : f32 to vector<16x32xf32>
    %16 = arith.maximumf %14, %15 : vector<16x32xf32>
    %17 = arith.truncf %16 : vector<16x32xf32> to vector<16x32xbf16>
    %c0_12 = arith.constant 0 : index
    %c0_13 = arith.constant 0 : index
    %18 = vector.load %arg6[%c0_12, %c0_13] : memref<32x4224xbf16, #tpu.memory_space<vmem>>, vector<32x384xbf16>
    %cst_14 = arith.constant dense<0.000000e+00> : vector<16x384xf32>
    %19 = tpu.matmul %17, %18, %cst_14 {dimension_numbers = #tpu.dot_dimension_numbers<[1], [0], [0], [1], [0, 0, 1, 1], [], []>} : vector<16x32xbf16>, vector<32x384xbf16>, vector<16x384xf32> -> vector<16x384xf32>
    %c0_15 = arith.constant 0 : index
    %c0_16 = arith.constant 0 : index
    %20 = vector.load %arg7[%c0_15, %c0_16] : memref<1x4224xf32, #tpu.memory_space<vmem>>, vector<1x384xf32>
    %21 = vector.broadcast %20 : vector<1x384xf32> to vector<16x384xf32>
    %22 = arith.addf %19, %21 : vector<16x384xf32>
    %c0_17 = arith.constant 0 : index
    %c0_18 = arith.constant 0 : index
    %23 = vector.load %arg8[%c0_17, %c0_18] : memref<16x4224xf32, #tpu.memory_space<vmem>>, vector<16x384xf32>
    tpu.vector_store %arg8[%c0_17, %c0_18], %22 {strides = array<i32>} : memref<16x4224xf32, #tpu.memory_space<vmem>>, vector<16x384xf32>,
    %c0_19 = arith.constant 0 : index
    %c384 = arith.constant 384 : index
    %24 = vector.load %arg6[%c0_19, %c384] : memref<32x4224xbf16, #tpu.memory_space<vmem>>, vector<32x384xbf16>
    %cst_20 = arith.constant dense<0.000000e+00> : vector<16x384xf32>
    %25 = tpu.matmul %17, %24, %cst_20 {dimension_numbers = #tpu.dot_dimension_numbers<[1], [0], [0], [1], [0, 0, 1, 1], [], []>} : vector<16x32xbf16>, vector<32x384xbf16>, vector<16x384xf32> -> vector<16x384xf32>
    %c0_21 = arith.constant 0 : index
    %c384_22 = arith.constant 384 : index
    %26 = vector.load %arg7[%c0_21, %c384_22] : memref<1x4224xf32, #tpu.memory_space<vmem>>, vector<1x384xf32>
    %27 = vector.broadcast %26 : vector<1x384xf32> to vector<16x384xf32>
    %28 = arith.addf %25, %27 : vector<16x384xf32>
    %c0_23 = arith.constant 0 : index
    %c384_24 = arith.constant 384 : index
    %29 = vector.load %arg8[%c0_23, %c384_24] : memref<16x4224xf32, #tpu.memory_space<vmem>>, vector<16x384xf32>
    tpu.vector_store %arg8[%c0_23, %c384_24], %28 {strides = array<i32>} : memref<16x4224xf32, #tpu.memory_space<vmem>>, vector<16x384xf32>,
    %30 = arith.maximumf %22, %28 : vector<16x384xf32>
    %c0_25 = arith.constant 0 : index
    %c768 = arith.constant 768 : index
    %31 = vector.load %arg6[%c0_25, %c768] : memref<32x4224xbf16, #tpu.memory_space<vmem>>, vector<32x384xbf16>
    %cst_26 = arith.constant dense<0.000000e+00> : vector<16x384xf32>
    %32 = tpu.matmul %17, %31, %cst_26 {dimension_numbers = #tpu.dot_dimension_numbers<[1], [0], [0], [1], [0, 0, 1, 1], [], []>} : vector<16x32xbf16>, vector<32x384xbf16>, vector<16x384xf32> -> vector<16x384xf32>
    %c0_27 = arith.constant 0 : index
    %c768_28 = arith.constant 768 : index
    %33 = vector.load %arg7[%c0_27, %c768_28] : memref<1x4224xf32, #tpu.memory_space<vmem>>, vector<1x384xf32>
    %34 = vector.broadcast %33 : vector<1x384xf32> to vector<16x384xf32>
    %35 = arith.addf %32, %34 : vector<16x384xf32>
    %c0_29 = arith.constant 0 : index
    %c768_30 = arith.constant 768 : index
    %36 = vector.load %arg8[%c0_29, %c768_30] : memref<16x4224xf32, #tpu.memory_space<vmem>>, vector<16x384xf32>
    tpu.vector_store %arg8[%c0_29, %c768_30], %35 {strides = array<i32>} : memref<16x4224xf32, #tpu.memory_space<vmem>>, vector<16x384xf32>,
    %37 = arith.maximumf %30, %35 : vector<16x384xf32>
    %c0_31 = arith.constant 0 : index
    %c1152 = arith.constant 1152 : index
    %38 = vector.load %arg6[%c0_31, %c1152] : memref<32x4224xbf16, #tpu.memory_space<vmem>>, vector<32x384xbf16>
    %cst_32 = arith.constant dense<0.000000e+00> : vector<16x384xf32>
    %39 = tpu.matmul %17, %38, %cst_32 {dimension_numbers = #tpu.dot_dimension_numbers<[1], [0], [0], [1], [0, 0, 1, 1], [], []>} : vector<16x32xbf16>, vector<32x384xbf16>, vector<16x384xf32> -> vector<16x384xf32>
    %c0_33 = arith.constant 0 : index
    %c1152_34 = arith.constant 1152 : index
    %40 = vector.load %arg7[%c0_33, %c1152_34] : memref<1x4224xf32, #tpu.memory_space<vmem>>, vector<1x384xf32>
    %41 = vector.broadcast %40 : vector<1x384xf32> to vector<16x384xf32>
    %42 = arith.addf %39, %41 : vector<16x384xf32>
    %c0_35 = arith.constant 0 : index
    %c1152_36 = arith.constant 1152 : index
    %43 = vector.load %arg8[%c0_35, %c1152_36] : memref<16x4224xf32, #tpu.memory_space<vmem>>, vector<16x384xf32>
    tpu.vector_store %arg8[%c0_35, %c1152_36], %42 {strides = array<i32>} : memref<16x4224xf32, #tpu.memory_space<vmem>>, vector<16x384xf32>,
    %44 = arith.maximumf %37, %42 : vector<16x384xf32>
    %c0_37 = arith.constant 0 : index
    %c1536 = arith.constant 1536 : index
    %45 = vector.load %arg6[%c0_37, %c1536] : memref<32x4224xbf16, #tpu.memory_space<vmem>>, vector<32x384xbf16>
    %cst_38 = arith.constant dense<0.000000e+00> : vector<16x384xf32>
    %46 = tpu.matmul %17, %45, %cst_38 {dimension_numbers = #tpu.dot_dimension_numbers<[1], [0], [0], [1], [0, 0, 1, 1], [], []>} : vector<16x32xbf16>, vector<32x384xbf16>, vector<16x384xf32> -> vector<16x384xf32>
    %c0_39 = arith.constant 0 : index
    %c1536_40 = arith.constant 1536 : index
    %47 = vector.load %arg7[%c0_39, %c1536_40] : memref<1x4224xf32, #tpu.memory_space<vmem>>, vector<1x384xf32>
    %48 = vector.broadcast %47 : vector<1x384xf32> to vector<16x384xf32>
    %49 = arith.addf %46, %48 : vector<16x384xf32>
    %c0_41 = arith.constant 0 : index
    %c1536_42 = arith.constant 1536 : index
    %50 = vector.load %arg8[%c0_41, %c1536_42] : memref<16x4224xf32, #tpu.memory_space<vmem>>, vector<16x384xf32>
    tpu.vector_store %arg8[%c0_41, %c1536_42], %49 {strides = array<i32>} : memref<16x4224xf32, #tpu.memory_space<vmem>>, vector<16x384xf32>,
    %51 = arith.maximumf %44, %49 : vector<16x384xf32>
    %c0_43 = arith.constant 0 : index
    %c1920 = arith.constant 1920 : index
    %52 = vector.load %arg6[%c0_43, %c1920] : memref<32x4224xbf16, #tpu.memory_space<vmem>>, vector<32x384xbf16>
    %cst_44 = arith.constant dense<0.000000e+00> : vector<16x384xf32>
    %53 = tpu.matmul %17, %52, %cst_44 {dimension_numbers = #tpu.dot_dimension_numbers<[1], [0], [0], [1], [0, 0, 1, 1], [], []>} : vector<16x32xbf16>, vector<32x384xbf16>, vector<16x384xf32> -> vector<16x384xf32>
    %c0_45 = arith.constant 0 : index
    %c1920_46 = arith.constant 1920 : index
    %54 = vector.load %arg7[%c0_45, %c1920_46] : memref<1x4224xf32, #tpu.memory_space<vmem>>, vector<1x384xf32>
    %55 = vector.broadcast %54 : vector<1x384xf32> to vector<16x384xf32>
    %56 = arith.addf %53, %55 : vector<16x384xf32>
    %c0_47 = arith.constant 0 : index
    %c1920_48 = arith.constant 1920 : index
    %57 = vector.load %arg8[%c0_47, %c1920_48] : memref<16x4224xf32, #tpu.memory_space<vmem>>, vector<16x384xf32>
    tpu.vector_store %arg8[%c0_47, %c1920_48], %56 {strides = array<i32>} : memref<16x4224xf32, #tpu.memory_space<vmem>>, vector<16x384xf32>,
    %58 = arith.maximumf %51, %56 : vector<16x384xf32>
    %c0_49 = arith.constant 0 : index
    %c2304 = arith.constant 2304 : index
    %59 = vector.load %arg6[%c0_49, %c2304] : memref<32x4224xbf16, #tpu.memory_space<vmem>>, vector<32x384xbf16>
    %cst_50 = arith.constant dense<0.000000e+00> : vector<16x384xf32>
    %60 = tpu.matmul %17, %59, %cst_50 {dimension_numbers = #tpu.dot_dimension_numbers<[1], [0], [0], [1], [0, 0, 1, 1], [], []>} : vector<16x32xbf16>, vector<32x384xbf16>, vector<16x384xf32> -> vector<16x384xf32>
    %c0_51 = arith.constant 0 : index
    %c2304_52 = arith.constant 2304 : index
    %61 = vector.load %arg7[%c0_51, %c2304_52] : memref<1x4224xf32, #tpu.memory_space<vmem>>, vector<1x384xf32>
    %62 = vector.broadcast %61 : vector<1x384xf32> to vector<16x384xf32>
    %63 = arith.addf %60, %62 : vector<16x384xf32>
    %c0_53 = arith.constant 0 : index
    %c2304_54 = arith.constant 2304 : index
    %64 = vector.load %arg8[%c0_53, %c2304_54] : memref<16x4224xf32, #tpu.memory_space<vmem>>, vector<16x384xf32>
    tpu.vector_store %arg8[%c0_53, %c2304_54], %63 {strides = array<i32>} : memref<16x4224xf32, #tpu.memory_space<vmem>>, vector<16x384xf32>,
    %65 = arith.maximumf %58, %63 : vector<16x384xf32>
    %c0_55 = arith.constant 0 : index
    %c2688 = arith.constant 2688 : index
    %66 = vector.load %arg6[%c0_55, %c2688] : memref<32x4224xbf16, #tpu.memory_space<vmem>>, vector<32x384xbf16>
    %cst_56 = arith.constant dense<0.000000e+00> : vector<16x384xf32>
    %67 = tpu.matmul %17, %66, %cst_56 {dimension_numbers = #tpu.dot_dimension_numbers<[1], [0], [0], [1], [0, 0, 1, 1], [], []>} : vector<16x32xbf16>, vector<32x384xbf16>, vector<16x384xf32> -> vector<16x384xf32>
    %c0_57 = arith.constant 0 : index
    %c2688_58 = arith.constant 2688 : index
    %68 = vector.load %arg7[%c0_57, %c2688_58] : memref<1x4224xf32, #tpu.memory_space<vmem>>, vector<1x384xf32>
    %69 = vector.broadcast %68 : vector<1x384xf32> to vector<16x384xf32>
    %70 = arith.addf %67, %69 : vector<16x384xf32>
    %c0_59 = arith.constant 0 : index
    %c2688_60 = arith.constant 2688 : index
    %71 = vector.load %arg8[%c0_59, %c2688_60] : memref<16x4224xf32, #tpu.memory_space<vmem>>, vector<16x384xf32>
    tpu.vector_store %arg8[%c0_59, %c2688_60], %70 {strides = array<i32>} : memref<16x4224xf32, #tpu.memory_space<vmem>>, vector<16x384xf32>,
    %72 = arith.maximumf %65, %70 : vector<16x384xf32>
    %c0_61 = arith.constant 0 : index
    %c3072 = arith.constant 3072 : index
    %73 = vector.load %arg6[%c0_61, %c3072] : memref<32x4224xbf16, #tpu.memory_space<vmem>>, vector<32x384xbf16>
    %cst_62 = arith.constant dense<0.000000e+00> : vector<16x384xf32>
    %74 = tpu.matmul %17, %73, %cst_62 {dimension_numbers = #tpu.dot_dimension_numbers<[1], [0], [0], [1], [0, 0, 1, 1], [], []>} : vector<16x32xbf16>, vector<32x384xbf16>, vector<16x384xf32> -> vector<16x384xf32>
    %c0_63 = arith.constant 0 : index
    %c3072_64 = arith.constant 3072 : index
    %75 = vector.load %arg7[%c0_63, %c3072_64] : memref<1x4224xf32, #tpu.memory_space<vmem>>, vector<1x384xf32>
    %76 = vector.broadcast %75 : vector<1x384xf32> to vector<16x384xf32>
    %77 = arith.addf %74, %76 : vector<16x384xf32>
    %c0_65 = arith.constant 0 : index
    %c3072_66 = arith.constant 3072 : index
    %78 = vector.load %arg8[%c0_65, %c3072_66] : memref<16x4224xf32, #tpu.memory_space<vmem>>, vector<16x384xf32>
    tpu.vector_store %arg8[%c0_65, %c3072_66], %77 {strides = array<i32>} : memref<16x4224xf32, #tpu.memory_space<vmem>>, vector<16x384xf32>,
    %79 = arith.maximumf %72, %77 : vector<16x384xf32>
    %c0_67 = arith.constant 0 : index
    %c3456 = arith.constant 3456 : index
    %80 = vector.load %arg6[%c0_67, %c3456] : memref<32x4224xbf16, #tpu.memory_space<vmem>>, vector<32x384xbf16>
    %cst_68 = arith.constant dense<0.000000e+00> : vector<16x384xf32>
    %81 = tpu.matmul %17, %80, %cst_68 {dimension_numbers = #tpu.dot_dimension_numbers<[1], [0], [0], [1], [0, 0, 1, 1], [], []>} : vector<16x32xbf16>, vector<32x384xbf16>, vector<16x384xf32> -> vector<16x384xf32>
    %c0_69 = arith.constant 0 : index
    %c3456_70 = arith.constant 3456 : index
    %82 = vector.load %arg7[%c0_69, %c3456_70] : memref<1x4224xf32, #tpu.memory_space<vmem>>, vector<1x384xf32>
    %83 = vector.broadcast %82 : vector<1x384xf32> to vector<16x384xf32>
    %84 = arith.addf %81, %83 : vector<16x384xf32>
    %c0_71 = arith.constant 0 : index
    %c3456_72 = arith.constant 3456 : index
    %85 = vector.load %arg8[%c0_71, %c3456_72] : memref<16x4224xf32, #tpu.memory_space<vmem>>, vector<16x384xf32>
    tpu.vector_store %arg8[%c0_71, %c3456_72], %84 {strides = array<i32>} : memref<16x4224xf32, #tpu.memory_space<vmem>>, vector<16x384xf32>,
    %86 = arith.maximumf %79, %84 : vector<16x384xf32>
    %c0_73 = arith.constant 0 : index
    %c3840 = arith.constant 3840 : index
    %87 = vector.load %arg6[%c0_73, %c3840] : memref<32x4224xbf16, #tpu.memory_space<vmem>>, vector<32x384xbf16>
    %cst_74 = arith.constant dense<0.000000e+00> : vector<16x384xf32>
    %88 = tpu.matmul %17, %87, %cst_74 {dimension_numbers = #tpu.dot_dimension_numbers<[1], [0], [0], [1], [0, 0, 1, 1], [], []>} : vector<16x32xbf16>, vector<32x384xbf16>, vector<16x384xf32> -> vector<16x384xf32>
    %c0_75 = arith.constant 0 : index
    %c3840_76 = arith.constant 3840 : index
    %89 = vector.load %arg7[%c0_75, %c3840_76] : memref<1x4224xf32, #tpu.memory_space<vmem>>, vector<1x384xf32>
    %90 = vector.broadcast %89 : vector<1x384xf32> to vector<16x384xf32>
    %91 = arith.addf %88, %90 : vector<16x384xf32>
    %c0_77 = arith.constant 0 : index
    %c3840_78 = arith.constant 3840 : index
    %92 = vector.load %arg8[%c0_77, %c3840_78] : memref<16x4224xf32, #tpu.memory_space<vmem>>, vector<16x384xf32>
    tpu.vector_store %arg8[%c0_77, %c3840_78], %91 {strides = array<i32>} : memref<16x4224xf32, #tpu.memory_space<vmem>>, vector<16x384xf32>,
    %93 = arith.maximumf %86, %91 : vector<16x384xf32>
    %c0_79 = arith.constant 0 : index
    %c0_80 = arith.constant 0 : index
    %94 = vector.load %arg8[%c0_79, %c0_80] : memref<16x4224xf32, #tpu.memory_space<vmem>>, vector<16x384xf32>
    %95 = arith.subf %94, %93 : vector<16x384xf32>
    %96 = math.exp %95 : vector<16x384xf32>
    %c0_81 = arith.constant 0 : index
    %c0_82 = arith.constant 0 : index
    %97 = vector.load %arg8[%c0_81, %c0_82] : memref<16x4224xf32, #tpu.memory_space<vmem>>, vector<16x384xf32>
    tpu.vector_store %arg8[%c0_81, %c0_82], %96 {strides = array<i32>} : memref<16x4224xf32, #tpu.memory_space<vmem>>, vector<16x384xf32>,
    %c0_83 = arith.constant 0 : index
    %c384_84 = arith.constant 384 : index
    %98 = vector.load %arg8[%c0_83, %c384_84] : memref<16x4224xf32, #tpu.memory_space<vmem>>, vector<16x384xf32>
    %99 = arith.subf %98, %93 : vector<16x384xf32>
    %100 = math.exp %99 : vector<16x384xf32>
    %c0_85 = arith.constant 0 : index
    %c384_86 = arith.constant 384 : index
    %101 = vector.load %arg8[%c0_85, %c384_86] : memref<16x4224xf32, #tpu.memory_space<vmem>>, vector<16x384xf32>
    tpu.vector_store %arg8[%c0_85, %c384_86], %100 {strides = array<i32>} : memref<16x4224xf32, #tpu.memory_space<vmem>>, vector<16x384xf32>,
    %102 = arith.addf %96, %100 : vector<16x384xf32>
    %c0_87 = arith.constant 0 : index
    %c768_88 = arith.constant 768 : index
    %103 = vector.load %arg8[%c0_87, %c768_88] : memref<16x4224xf32, #tpu.memory_space<vmem>>, vector<16x384xf32>
    %104 = arith.subf %103, %93 : vector<16x384xf32>
    %105 = math.exp %104 : vector<16x384xf32>
    %c0_89 = arith.constant 0 : index
    %c768_90 = arith.constant 768 : index
    %106 = vector.load %arg8[%c0_89, %c768_90] : memref<16x4224xf32, #tpu.memory_space<vmem>>, vector<16x384xf32>
    tpu.vector_store %arg8[%c0_89, %c768_90], %105 {strides = array<i32>} : memref<16x4224xf32, #tpu.memory_space<vmem>>, vector<16x384xf32>,
    %107 = arith.addf %102, %105 : vector<16x384xf32>
    %c0_91 = arith.constant 0 : index
    %c1152_92 = arith.constant 1152 : index
    %108 = vector.load %arg8[%c0_91, %c1152_92] : memref<16x4224xf32, #tpu.memory_space<vmem>>, vector<16x384xf32>
    %109 = arith.subf %108, %93 : vector<16x384xf32>
    %110 = math.exp %109 : vector<16x384xf32>
    %c0_93 = arith.constant 0 : index
    %c1152_94 = arith.constant 1152 : index
    %111 = vector.load %arg8[%c0_93, %c1152_94] : memref<16x4224xf32, #tpu.memory_space<vmem>>, vector<16x384xf32>
    tpu.vector_store %arg8[%c0_93, %c1152_94], %110 {strides = array<i32>} : memref<16x4224xf32, #tpu.memory_space<vmem>>, vector<16x384xf32>,
    %112 = arith.addf %107, %110 : vector<16x384xf32>
    %c0_95 = arith.constant 0 : index
    %c1536_96 = arith.constant 1536 : index
    %113 = vector.load %arg8[%c0_95, %c1536_96] : memref<16x4224xf32, #tpu.memory_space<vmem>>, vector<16x384xf32>
    %114 = arith.subf %113, %93 : vector<16x384xf32>
    %115 = math.exp %114 : vector<16x384xf32>
    %c0_97 = arith.constant 0 : index
    %c1536_98 = arith.constant 1536 : index
    %116 = vector.load %arg8[%c0_97, %c1536_98] : memref<16x4224xf32, #tpu.memory_space<vmem>>, vector<16x384xf32>
    tpu.vector_store %arg8[%c0_97, %c1536_98], %115 {strides = array<i32>} : memref<16x4224xf32, #tpu.memory_space<vmem>>, vector<16x384xf32>,
    %117 = arith.addf %112, %115 : vector<16x384xf32>
    %c0_99 = arith.constant 0 : index
    %c1920_100 = arith.constant 1920 : index
    %118 = vector.load %arg8[%c0_99, %c1920_100] : memref<16x4224xf32, #tpu.memory_space<vmem>>, vector<16x384xf32>
    %119 = arith.subf %118, %93 : vector<16x384xf32>
    %120 = math.exp %119 : vector<16x384xf32>
    %c0_101 = arith.constant 0 : index
    %c1920_102 = arith.constant 1920 : index
    %121 = vector.load %arg8[%c0_101, %c1920_102] : memref<16x4224xf32, #tpu.memory_space<vmem>>, vector<16x384xf32>
    tpu.vector_store %arg8[%c0_101, %c1920_102], %120 {strides = array<i32>} : memref<16x4224xf32, #tpu.memory_space<vmem>>, vector<16x384xf32>,
    %122 = arith.addf %117, %120 : vector<16x384xf32>
    %c0_103 = arith.constant 0 : index
    %c2304_104 = arith.constant 2304 : index
    %123 = vector.load %arg8[%c0_103, %c2304_104] : memref<16x4224xf32, #tpu.memory_space<vmem>>, vector<16x384xf32>
    %124 = arith.subf %123, %93 : vector<16x384xf32>
    %125 = math.exp %124 : vector<16x384xf32>
    %c0_105 = arith.constant 0 : index
    %c2304_106 = arith.constant 2304 : index
    %126 = vector.load %arg8[%c0_105, %c2304_106] : memref<16x4224xf32, #tpu.memory_space<vmem>>, vector<16x384xf32>
    tpu.vector_store %arg8[%c0_105, %c2304_106], %125 {strides = array<i32>} : memref<16x4224xf32, #tpu.memory_space<vmem>>, vector<16x384xf32>,
    %127 = arith.addf %122, %125 : vector<16x384xf32>
    %c0_107 = arith.constant 0 : index
    %c2688_108 = arith.constant 2688 : index
    %128 = vector.load %arg8[%c0_107, %c2688_108] : memref<16x4224xf32, #tpu.memory_space<vmem>>, vector<16x384xf32>
    %129 = arith.subf %128, %93 : vector<16x384xf32>
    %130 = math.exp %129 : vector<16x384xf32>
    %c0_109 = arith.constant 0 : index
    %c2688_110 = arith.constant 2688 : index
    %131 = vector.load %arg8[%c0_109, %c2688_110] : memref<16x4224xf32, #tpu.memory_space<vmem>>, vector<16x384xf32>
    tpu.vector_store %arg8[%c0_109, %c2688_110], %130 {strides = array<i32>} : memref<16x4224xf32, #tpu.memory_space<vmem>>, vector<16x384xf32>,
    %132 = arith.addf %127, %130 : vector<16x384xf32>
    %c0_111 = arith.constant 0 : index
    %c3072_112 = arith.constant 3072 : index
    %133 = vector.load %arg8[%c0_111, %c3072_112] : memref<16x4224xf32, #tpu.memory_space<vmem>>, vector<16x384xf32>
    %134 = arith.subf %133, %93 : vector<16x384xf32>
    %135 = math.exp %134 : vector<16x384xf32>
    %c0_113 = arith.constant 0 : index
    %c3072_114 = arith.constant 3072 : index
    %136 = vector.load %arg8[%c0_113, %c3072_114] : memref<16x4224xf32, #tpu.memory_space<vmem>>, vector<16x384xf32>
    tpu.vector_store %arg8[%c0_113, %c3072_114], %135 {strides = array<i32>} : memref<16x4224xf32, #tpu.memory_space<vmem>>, vector<16x384xf32>,
    %137 = arith.addf %132, %135 : vector<16x384xf32>
    %c0_115 = arith.constant 0 : index
    %c3456_116 = arith.constant 3456 : index
    %138 = vector.load %arg8[%c0_115, %c3456_116] : memref<16x4224xf32, #tpu.memory_space<vmem>>, vector<16x384xf32>
    %139 = arith.subf %138, %93 : vector<16x384xf32>
    %140 = math.exp %139 : vector<16x384xf32>
    %c0_117 = arith.constant 0 : index
    %c3456_118 = arith.constant 3456 : index
    %141 = vector.load %arg8[%c0_117, %c3456_118] : memref<16x4224xf32, #tpu.memory_space<vmem>>, vector<16x384xf32>
    tpu.vector_store %arg8[%c0_117, %c3456_118], %140 {strides = array<i32>} : memref<16x4224xf32, #tpu.memory_space<vmem>>, vector<16x384xf32>,
    %142 = arith.addf %137, %140 : vector<16x384xf32>
    %c0_119 = arith.constant 0 : index
    %c3840_120 = arith.constant 3840 : index
    %143 = vector.load %arg8[%c0_119, %c3840_120] : memref<16x4224xf32, #tpu.memory_space<vmem>>, vector<16x384xf32>
    %144 = arith.subf %143, %93 : vector<16x384xf32>
    %145 = math.exp %144 : vector<16x384xf32>
    %c0_121 = arith.constant 0 : index
    %c3840_122 = arith.constant 3840 : index
    %146 = vector.load %arg8[%c0_121, %c3840_122] : memref<16x4224xf32, #tpu.memory_space<vmem>>, vector<16x384xf32>
    tpu.vector_store %arg8[%c0_121, %c3840_122], %145 {strides = array<i32>} : memref<16x4224xf32, #tpu.memory_space<vmem>>, vector<16x384xf32>,
    %147 = arith.addf %142, %145 : vector<16x384xf32>
    %148 = tpu.reciprocal %147 {approx = true} : vector<16x384xf32> -> vector<16x384xf32>
    %149 = arith.mulf %147, %148 : vector<16x384xf32>
    %cst_123 = arith.constant 2.000000e+00 : f32
    %150 = vector.broadcast %cst_123 : f32 to vector<16x384xf32>
    %151 = arith.subf %150, %149 : vector<16x384xf32>
    %152 = arith.mulf %148, %151 : vector<16x384xf32>
    %c0_124 = arith.constant 0 : index
    %c0_125 = arith.constant 0 : index
    %153 = vector.load %arg8[%c0_124, %c0_125] : memref<16x4224xf32, #tpu.memory_space<vmem>>, vector<16x384xf32>
    %154 = arith.mulf %153, %152 : vector<16x384xf32>
    %c0_126 = arith.constant 0 : index
    %c0_127 = arith.constant 0 : index
    %155 = vector.load %arg8[%c0_126, %c0_127] : memref<16x4224xf32, #tpu.memory_space<vmem>>, vector<16x384xf32>
    tpu.vector_store %arg8[%c0_126, %c0_127], %154 {strides = array<i32>} : memref<16x4224xf32, #tpu.memory_space<vmem>>, vector<16x384xf32>,
    %c0_128 = arith.constant 0 : index
    %c384_129 = arith.constant 384 : index
    %156 = vector.load %arg8[%c0_128, %c384_129] : memref<16x4224xf32, #tpu.memory_space<vmem>>, vector<16x384xf32>
    %157 = arith.mulf %156, %152 : vector<16x384xf32>
    %c0_130 = arith.constant 0 : index
    %c384_131 = arith.constant 384 : index
    %158 = vector.load %arg8[%c0_130, %c384_131] : memref<16x4224xf32, #tpu.memory_space<vmem>>, vector<16x384xf32>
    tpu.vector_store %arg8[%c0_130, %c384_131], %157 {strides = array<i32>} : memref<16x4224xf32, #tpu.memory_space<vmem>>, vector<16x384xf32>,
    %c0_132 = arith.constant 0 : index
    %c768_133 = arith.constant 768 : index
    %159 = vector.load %arg8[%c0_132, %c768_133] : memref<16x4224xf32, #tpu.memory_space<vmem>>, vector<16x384xf32>
    %160 = arith.mulf %159, %152 : vector<16x384xf32>
    %c0_134 = arith.constant 0 : index
    %c768_135 = arith.constant 768 : index
    %161 = vector.load %arg8[%c0_134, %c768_135] : memref<16x4224xf32, #tpu.memory_space<vmem>>, vector<16x384xf32>
    tpu.vector_store %arg8[%c0_134, %c768_135], %160 {strides = array<i32>} : memref<16x4224xf32, #tpu.memory_space<vmem>>, vector<16x384xf32>,
    %c0_136 = arith.constant 0 : index
    %c1152_137 = arith.constant 1152 : index
    %162 = vector.load %arg8[%c0_136, %c1152_137] : memref<16x4224xf32, #tpu.memory_space<vmem>>, vector<16x384xf32>
    %163 = arith.mulf %162, %152 : vector<16x384xf32>
    %c0_138 = arith.constant 0 : index
    %c1152_139 = arith.constant 1152 : index
    %164 = vector.load %arg8[%c0_138, %c1152_139] : memref<16x4224xf32, #tpu.memory_space<vmem>>, vector<16x384xf32>
    tpu.vector_store %arg8[%c0_138, %c1152_139], %163 {strides = array<i32>} : memref<16x4224xf32, #tpu.memory_space<vmem>>, vector<16x384xf32>,
    %c0_140 = arith.constant 0 : index
    %c1536_141 = arith.constant 1536 : index
    %165 = vector.load %arg8[%c0_140, %c1536_141] : memref<16x4224xf32, #tpu.memory_space<vmem>>, vector<16x384xf32>
    %166 = arith.mulf %165, %152 : vector<16x384xf32>
    %c0_142 = arith.constant 0 : index
    %c1536_143 = arith.constant 1536 : index
    %167 = vector.load %arg8[%c0_142, %c1536_143] : memref<16x4224xf32, #tpu.memory_space<vmem>>, vector<16x384xf32>
    tpu.vector_store %arg8[%c0_142, %c1536_143], %166 {strides = array<i32>} : memref<16x4224xf32, #tpu.memory_space<vmem>>, vector<16x384xf32>,
    %c0_144 = arith.constant 0 : index
    %c1920_145 = arith.constant 1920 : index
    %168 = vector.load %arg8[%c0_144, %c1920_145] : memref<16x4224xf32, #tpu.memory_space<vmem>>, vector<16x384xf32>
    %169 = arith.mulf %168, %152 : vector<16x384xf32>
    %c0_146 = arith.constant 0 : index
    %c1920_147 = arith.constant 1920 : index
    %170 = vector.load %arg8[%c0_146, %c1920_147] : memref<16x4224xf32, #tpu.memory_space<vmem>>, vector<16x384xf32>
    tpu.vector_store %arg8[%c0_146, %c1920_147], %169 {strides = array<i32>} : memref<16x4224xf32, #tpu.memory_space<vmem>>, vector<16x384xf32>,
    %c0_148 = arith.constant 0 : index
    %c2304_149 = arith.constant 2304 : index
    %171 = vector.load %arg8[%c0_148, %c2304_149] : memref<16x4224xf32, #tpu.memory_space<vmem>>, vector<16x384xf32>
    %172 = arith.mulf %171, %152 : vector<16x384xf32>
    %c0_150 = arith.constant 0 : index
    %c2304_151 = arith.constant 2304 : index
    %173 = vector.load %arg8[%c0_150, %c2304_151] : memref<16x4224xf32, #tpu.memory_space<vmem>>, vector<16x384xf32>
    tpu.vector_store %arg8[%c0_150, %c2304_151], %172 {strides = array<i32>} : memref<16x4224xf32, #tpu.memory_space<vmem>>, vector<16x384xf32>,
    %c0_152 = arith.constant 0 : index
    %c2688_153 = arith.constant 2688 : index
    %174 = vector.load %arg8[%c0_152, %c2688_153] : memref<16x4224xf32, #tpu.memory_space<vmem>>, vector<16x384xf32>
    %175 = arith.mulf %174, %152 : vector<16x384xf32>
    %c0_154 = arith.constant 0 : index
    %c2688_155 = arith.constant 2688 : index
    %176 = vector.load %arg8[%c0_154, %c2688_155] : memref<16x4224xf32, #tpu.memory_space<vmem>>, vector<16x384xf32>
    tpu.vector_store %arg8[%c0_154, %c2688_155], %175 {strides = array<i32>} : memref<16x4224xf32, #tpu.memory_space<vmem>>, vector<16x384xf32>,
    %c0_156 = arith.constant 0 : index
    %c3072_157 = arith.constant 3072 : index
    %177 = vector.load %arg8[%c0_156, %c3072_157] : memref<16x4224xf32, #tpu.memory_space<vmem>>, vector<16x384xf32>
    %178 = arith.mulf %177, %152 : vector<16x384xf32>
    %c0_158 = arith.constant 0 : index
    %c3072_159 = arith.constant 3072 : index
    %179 = vector.load %arg8[%c0_158, %c3072_159] : memref<16x4224xf32, #tpu.memory_space<vmem>>, vector<16x384xf32>
    tpu.vector_store %arg8[%c0_158, %c3072_159], %178 {strides = array<i32>} : memref<16x4224xf32, #tpu.memory_space<vmem>>, vector<16x384xf32>,
    %c0_160 = arith.constant 0 : index
    %c3456_161 = arith.constant 3456 : index
    %180 = vector.load %arg8[%c0_160, %c3456_161] : memref<16x4224xf32, #tpu.memory_space<vmem>>, vector<16x384xf32>
    %181 = arith.mulf %180, %152 : vector<16x384xf32>
    %c0_162 = arith.constant 0 : index
    %c3456_163 = arith.constant 3456 : index
    %182 = vector.load %arg8[%c0_162, %c3456_163] : memref<16x4224xf32, #tpu.memory_space<vmem>>, vector<16x384xf32>
    tpu.vector_store %arg8[%c0_162, %c3456_163], %181 {strides = array<i32>} : memref<16x4224xf32, #tpu.memory_space<vmem>>, vector<16x384xf32>,
    %c0_164 = arith.constant 0 : index
    %c3840_165 = arith.constant 3840 : index
    %183 = vector.load %arg8[%c0_164, %c3840_165] : memref<16x4224xf32, #tpu.memory_space<vmem>>, vector<16x384xf32>
    %184 = arith.mulf %183, %152 : vector<16x384xf32>
    %c0_166 = arith.constant 0 : index
    %c3840_167 = arith.constant 3840 : index
    %185 = vector.load %arg8[%c0_166, %c3840_167] : memref<16x4224xf32, #tpu.memory_space<vmem>>, vector<16x384xf32>
    tpu.vector_store %arg8[%c0_166, %c3840_167], %184 {strides = array<i32>} : memref<16x4224xf32, #tpu.memory_space<vmem>>, vector<16x384xf32>,
    return
  }
  func.func @transform_0(%arg0: i32) -> (i32, i32) {
    %c0_i32 = arith.constant 0 : i32
    %c0_i32_0 = arith.constant 0 : i32
    return %arg0, %c0_i32 : i32, i32
  }
  func.func @transform_1(%arg0: i32) -> (i32, i32) {
    %c0_i32 = arith.constant 0 : i32
    %c0_i32_0 = arith.constant 0 : i32
    %c0_i32_1 = arith.constant 0 : i32
    return %c0_i32, %c0_i32_0 : i32, i32
  }
  func.func @transform_2(%arg0: i32) -> (i32, i32) {
    %c0_i32 = arith.constant 0 : i32
    %c0_i32_0 = arith.constant 0 : i32
    %c0_i32_1 = arith.constant 0 : i32
    return %c0_i32, %c0_i32_0 : i32, i32
  }
  func.func @transform_3(%arg0: i32) -> (i32, i32) {
    %c0_i32 = arith.constant 0 : i32
    %c0_i32_0 = arith.constant 0 : i32
    %c0_i32_1 = arith.constant 0 : i32
    return %c0_i32, %c0_i32_0 : i32, i32
  }
  func.func @transform_4(%arg0: i32) -> (i32, i32) {
    %c0_i32 = arith.constant 0 : i32
    %c0_i32_0 = arith.constant 0 : i32
    %c0_i32_1 = arith.constant 0 : i32
    return %c0_i32, %c0_i32_0 : i32, i32
  }
  func.func @transform_5(%arg0: i32) -> (i32, i32) {
    %c0_i32 = arith.constant 0 : i32
    %c0_i32_0 = arith.constant 0 : i32
    %c0_i32_1 = arith.constant 0 : i32
    return %c0_i32, %c0_i32_0 : i32, i32
  }
  func.func @transform_6(%arg0: i32) -> (i32, i32) {
    %c0_i32 = arith.constant 0 : i32
    %c0_i32_0 = arith.constant 0 : i32
    %c0_i32_1 = arith.constant 0 : i32
    return %c0_i32, %c0_i32_0 : i32, i32
  }
  func.func @transform_7(%arg0: i32) -> (i32, i32) {
    %c0_i32 = arith.constant 0 : i32
    %c0_i32_0 = arith.constant 0 : i32
    return %arg0, %c0_i32 : i32, i32
  }
}

module attributes {stable_mosaic.version = 11 : i64} {
  func.func private @main(%arg0: i32) attributes {dimension_semantics = [#tpu.dimension_semantics<core_parallel>], iteration_bounds = array<i64: 2>, tpu.core_type = #tpu.core_type<sc_scalar_subcore>, window_params = []} {
    return
  }
}

module attributes {stable_mosaic.version = 11 : i64} {
  func.func private @main(%arg0: i32) attributes {dimension_semantics = [#tpu.dimension_semantics<core_parallel>], iteration_bounds = array<i64: 2>, tpu.core_type = #tpu.core_type<sc_scalar_subcore>, window_params = []} {
    return
  }
}

module attributes {stable_mosaic.version = 11 : i64} {
  func.func @kernel(%arg0: i32, %arg1: memref<16x16xf32, #tpu.memory_space<vmem>>, %arg2: memref<16x32xbf16, #tpu.memory_space<vmem>>, %arg3: memref<1x32xf32, #tpu.memory_space<vmem>>, %arg4: memref<32x32xbf16, #tpu.memory_space<vmem>>, %arg5: memref<1x32xf32, #tpu.memory_space<vmem>>, %arg6: memref<32x4224xbf16, #tpu.memory_space<vmem>>, %arg7: memref<1x4224xf32, #tpu.memory_space<vmem>>, %arg8: memref<16x4224xf32, #tpu.memory_space<vmem>>) attributes {dimension_semantics = [#tpu.dimension_semantics<parallel>], iteration_bounds = array<i64: 1>, scalar_prefetch = 0 : i64, scratch_operands = 0 : i64, tpu.core_type = #tpu.core_type<tc>, window_params = [{transform_indices = @transform_0, window_bounds = array<i64: 16, 16>}, {pipeline_mode = #tpu.pipeline_mode<synchronous>, transform_indices = @transform_1, window_bounds = array<i64: 16, 32>}, {pipeline_mode = #tpu.pipeline_mode<synchronous>, transform_indices = @transform_2, window_bounds = array<i64: 1, 32>}, {pipeline_mode = #tpu.pipeline_mode<synchronous>, transform_indices = @transform_3, window_bounds = array<i64: 32, 32>}, {pipeline_mode = #tpu.pipeline_mode<synchronous>, transform_indices = @transform_4, window_bounds = array<i64: 1, 32>}, {pipeline_mode = #tpu.pipeline_mode<synchronous>, transform_indices = @transform_5, window_bounds = array<i64: 32, 4224>}, {pipeline_mode = #tpu.pipeline_mode<synchronous>, transform_indices = @transform_6, window_bounds = array<i64: 1, 4224>}, {transform_indices = @transform_7, window_bounds = array<i64: 16, 4224>}]} {
    %c0 = arith.constant 0 : index
    %c0_0 = arith.constant 0 : index
    %0 = vector.load %arg1[%c0, %c0_0] : memref<16x16xf32, #tpu.memory_space<vmem>>, vector<16x16xf32>
    %1 = arith.truncf %0 : vector<16x16xf32> to vector<16x16xbf16>
    %c0_1 = arith.constant 0 : index
    %c0_2 = arith.constant 0 : index
    %2 = vector.load %arg2[%c0_1, %c0_2] : memref<16x32xbf16, #tpu.memory_space<vmem>>, vector<16x32xbf16>
    %cst = arith.constant dense<0.000000e+00> : vector<16x32xf32>
    %3 = tpu.matmul %1, %2, %cst {dimension_numbers = #tpu.dot_dimension_numbers<[1], [0], [0], [1], [0, 0, 1, 1], [], []>} : vector<16x16xbf16>, vector<16x32xbf16>, vector<16x32xf32> -> vector<16x32xf32>
    %c0_3 = arith.constant 0 : index
    %c0_4 = arith.constant 0 : index
    %4 = vector.load %arg3[%c0_3, %c0_4] : memref<1x32xf32, #tpu.memory_space<vmem>>, vector<1x32xf32>
    %5 = vector.broadcast %4 : vector<1x32xf32> to vector<16x32xf32>
    %6 = arith.addf %3, %5 : vector<16x32xf32>
    %cst_5 = arith.constant 0.000000e+00 : f32
    %7 = vector.broadcast %cst_5 : f32 to vector<16x32xf32>
    %8 = arith.maximumf %6, %7 : vector<16x32xf32>
    %9 = arith.truncf %8 : vector<16x32xf32> to vector<16x32xbf16>
    %c0_6 = arith.constant 0 : index
    %c0_7 = arith.constant 0 : index
    %10 = vector.load %arg4[%c0_6, %c0_7] : memref<32x32xbf16, #tpu.memory_space<vmem>>, vector<32x32xbf16>
    %cst_8 = arith.constant dense<0.000000e+00> : vector<16x32xf32>
    %11 = tpu.matmul %9, %10, %cst_8 {dimension_numbers = #tpu.dot_dimension_numbers<[1], [0], [0], [1], [0, 0, 1, 1], [], []>} : vector<16x32xbf16>, vector<32x32xbf16>, vector<16x32xf32> -> vector<16x32xf32>
    %c0_9 = arith.constant 0 : index
    %c0_10 = arith.constant 0 : index
    %12 = vector.load %arg5[%c0_9, %c0_10] : memref<1x32xf32, #tpu.memory_space<vmem>>, vector<1x32xf32>
    %13 = vector.broadcast %12 : vector<1x32xf32> to vector<16x32xf32>
    %14 = arith.addf %11, %13 : vector<16x32xf32>
    %cst_11 = arith.constant 0.000000e+00 : f32
    %15 = vector.broadcast %cst_11 : f32 to vector<16x32xf32>
    %16 = arith.maximumf %14, %15 : vector<16x32xf32>
    %17 = arith.truncf %16 : vector<16x32xf32> to vector<16x32xbf16>
    %c0_12 = arith.constant 0 : index
    %c0_13 = arith.constant 0 : index
    %18 = vector.load %arg6[%c0_12, %c0_13] : memref<32x4224xbf16, #tpu.memory_space<vmem>>, vector<32x384xbf16>
    %cst_14 = arith.constant dense<0.000000e+00> : vector<16x384xf32>
    %19 = tpu.matmul %17, %18, %cst_14 {dimension_numbers = #tpu.dot_dimension_numbers<[1], [0], [0], [1], [0, 0, 1, 1], [], []>} : vector<16x32xbf16>, vector<32x384xbf16>, vector<16x384xf32> -> vector<16x384xf32>
    %c0_15 = arith.constant 0 : index
    %c0_16 = arith.constant 0 : index
    %20 = vector.load %arg7[%c0_15, %c0_16] : memref<1x4224xf32, #tpu.memory_space<vmem>>, vector<1x384xf32>
    %21 = vector.broadcast %20 : vector<1x384xf32> to vector<16x384xf32>
    %22 = arith.addf %19, %21 : vector<16x384xf32>
    %c0_17 = arith.constant 0 : index
    %c0_18 = arith.constant 0 : index
    %23 = vector.load %arg8[%c0_17, %c0_18] : memref<16x4224xf32, #tpu.memory_space<vmem>>, vector<16x384xf32>
    tpu.vector_store %arg8[%c0_17, %c0_18], %22 {strides = array<i32>} : memref<16x4224xf32, #tpu.memory_space<vmem>>, vector<16x384xf32>,
    %c0_19 = arith.constant 0 : index
    %c384 = arith.constant 384 : index
    %24 = vector.load %arg6[%c0_19, %c384] : memref<32x4224xbf16, #tpu.memory_space<vmem>>, vector<32x384xbf16>
    %cst_20 = arith.constant dense<0.000000e+00> : vector<16x384xf32>
    %25 = tpu.matmul %17, %24, %cst_20 {dimension_numbers = #tpu.dot_dimension_numbers<[1], [0], [0], [1], [0, 0, 1, 1], [], []>} : vector<16x32xbf16>, vector<32x384xbf16>, vector<16x384xf32> -> vector<16x384xf32>
    %c0_21 = arith.constant 0 : index
    %c384_22 = arith.constant 384 : index
    %26 = vector.load %arg7[%c0_21, %c384_22] : memref<1x4224xf32, #tpu.memory_space<vmem>>, vector<1x384xf32>
    %27 = vector.broadcast %26 : vector<1x384xf32> to vector<16x384xf32>
    %28 = arith.addf %25, %27 : vector<16x384xf32>
    %c0_23 = arith.constant 0 : index
    %c384_24 = arith.constant 384 : index
    %29 = vector.load %arg8[%c0_23, %c384_24] : memref<16x4224xf32, #tpu.memory_space<vmem>>, vector<16x384xf32>
    tpu.vector_store %arg8[%c0_23, %c384_24], %28 {strides = array<i32>} : memref<16x4224xf32, #tpu.memory_space<vmem>>, vector<16x384xf32>,
    %30 = arith.maximumf %22, %28 : vector<16x384xf32>
    %c0_25 = arith.constant 0 : index
    %c768 = arith.constant 768 : index
    %31 = vector.load %arg6[%c0_25, %c768] : memref<32x4224xbf16, #tpu.memory_space<vmem>>, vector<32x384xbf16>
    %cst_26 = arith.constant dense<0.000000e+00> : vector<16x384xf32>
    %32 = tpu.matmul %17, %31, %cst_26 {dimension_numbers = #tpu.dot_dimension_numbers<[1], [0], [0], [1], [0, 0, 1, 1], [], []>} : vector<16x32xbf16>, vector<32x384xbf16>, vector<16x384xf32> -> vector<16x384xf32>
    %c0_27 = arith.constant 0 : index
    %c768_28 = arith.constant 768 : index
    %33 = vector.load %arg7[%c0_27, %c768_28] : memref<1x4224xf32, #tpu.memory_space<vmem>>, vector<1x384xf32>
    %34 = vector.broadcast %33 : vector<1x384xf32> to vector<16x384xf32>
    %35 = arith.addf %32, %34 : vector<16x384xf32>
    %c0_29 = arith.constant 0 : index
    %c768_30 = arith.constant 768 : index
    %36 = vector.load %arg8[%c0_29, %c768_30] : memref<16x4224xf32, #tpu.memory_space<vmem>>, vector<16x384xf32>
    tpu.vector_store %arg8[%c0_29, %c768_30], %35 {strides = array<i32>} : memref<16x4224xf32, #tpu.memory_space<vmem>>, vector<16x384xf32>,
    %37 = arith.maximumf %30, %35 : vector<16x384xf32>
    %c0_31 = arith.constant 0 : index
    %c1152 = arith.constant 1152 : index
    %38 = vector.load %arg6[%c0_31, %c1152] : memref<32x4224xbf16, #tpu.memory_space<vmem>>, vector<32x384xbf16>
    %cst_32 = arith.constant dense<0.000000e+00> : vector<16x384xf32>
    %39 = tpu.matmul %17, %38, %cst_32 {dimension_numbers = #tpu.dot_dimension_numbers<[1], [0], [0], [1], [0, 0, 1, 1], [], []>} : vector<16x32xbf16>, vector<32x384xbf16>, vector<16x384xf32> -> vector<16x384xf32>
    %c0_33 = arith.constant 0 : index
    %c1152_34 = arith.constant 1152 : index
    %40 = vector.load %arg7[%c0_33, %c1152_34] : memref<1x4224xf32, #tpu.memory_space<vmem>>, vector<1x384xf32>
    %41 = vector.broadcast %40 : vector<1x384xf32> to vector<16x384xf32>
    %42 = arith.addf %39, %41 : vector<16x384xf32>
    %c0_35 = arith.constant 0 : index
    %c1152_36 = arith.constant 1152 : index
    %43 = vector.load %arg8[%c0_35, %c1152_36] : memref<16x4224xf32, #tpu.memory_space<vmem>>, vector<16x384xf32>
    tpu.vector_store %arg8[%c0_35, %c1152_36], %42 {strides = array<i32>} : memref<16x4224xf32, #tpu.memory_space<vmem>>, vector<16x384xf32>,
    %44 = arith.maximumf %37, %42 : vector<16x384xf32>
    %c0_37 = arith.constant 0 : index
    %c1536 = arith.constant 1536 : index
    %45 = vector.load %arg6[%c0_37, %c1536] : memref<32x4224xbf16, #tpu.memory_space<vmem>>, vector<32x384xbf16>
    %cst_38 = arith.constant dense<0.000000e+00> : vector<16x384xf32>
    %46 = tpu.matmul %17, %45, %cst_38 {dimension_numbers = #tpu.dot_dimension_numbers<[1], [0], [0], [1], [0, 0, 1, 1], [], []>} : vector<16x32xbf16>, vector<32x384xbf16>, vector<16x384xf32> -> vector<16x384xf32>
    %c0_39 = arith.constant 0 : index
    %c1536_40 = arith.constant 1536 : index
    %47 = vector.load %arg7[%c0_39, %c1536_40] : memref<1x4224xf32, #tpu.memory_space<vmem>>, vector<1x384xf32>
    %48 = vector.broadcast %47 : vector<1x384xf32> to vector<16x384xf32>
    %49 = arith.addf %46, %48 : vector<16x384xf32>
    %c0_41 = arith.constant 0 : index
    %c1536_42 = arith.constant 1536 : index
    %50 = vector.load %arg8[%c0_41, %c1536_42] : memref<16x4224xf32, #tpu.memory_space<vmem>>, vector<16x384xf32>
    tpu.vector_store %arg8[%c0_41, %c1536_42], %49 {strides = array<i32>} : memref<16x4224xf32, #tpu.memory_space<vmem>>, vector<16x384xf32>,
    %51 = arith.maximumf %44, %49 : vector<16x384xf32>
    %c0_43 = arith.constant 0 : index
    %c1920 = arith.constant 1920 : index
    %52 = vector.load %arg6[%c0_43, %c1920] : memref<32x4224xbf16, #tpu.memory_space<vmem>>, vector<32x384xbf16>
    %cst_44 = arith.constant dense<0.000000e+00> : vector<16x384xf32>
    %53 = tpu.matmul %17, %52, %cst_44 {dimension_numbers = #tpu.dot_dimension_numbers<[1], [0], [0], [1], [0, 0, 1, 1], [], []>} : vector<16x32xbf16>, vector<32x384xbf16>, vector<16x384xf32> -> vector<16x384xf32>
    %c0_45 = arith.constant 0 : index
    %c1920_46 = arith.constant 1920 : index
    %54 = vector.load %arg7[%c0_45, %c1920_46] : memref<1x4224xf32, #tpu.memory_space<vmem>>, vector<1x384xf32>
    %55 = vector.broadcast %54 : vector<1x384xf32> to vector<16x384xf32>
    %56 = arith.addf %53, %55 : vector<16x384xf32>
    %c0_47 = arith.constant 0 : index
    %c1920_48 = arith.constant 1920 : index
    %57 = vector.load %arg8[%c0_47, %c1920_48] : memref<16x4224xf32, #tpu.memory_space<vmem>>, vector<16x384xf32>
    tpu.vector_store %arg8[%c0_47, %c1920_48], %56 {strides = array<i32>} : memref<16x4224xf32, #tpu.memory_space<vmem>>, vector<16x384xf32>,
    %58 = arith.maximumf %51, %56 : vector<16x384xf32>
    %c0_49 = arith.constant 0 : index
    %c2304 = arith.constant 2304 : index
    %59 = vector.load %arg6[%c0_49, %c2304] : memref<32x4224xbf16, #tpu.memory_space<vmem>>, vector<32x384xbf16>
    %cst_50 = arith.constant dense<0.000000e+00> : vector<16x384xf32>
    %60 = tpu.matmul %17, %59, %cst_50 {dimension_numbers = #tpu.dot_dimension_numbers<[1], [0], [0], [1], [0, 0, 1, 1], [], []>} : vector<16x32xbf16>, vector<32x384xbf16>, vector<16x384xf32> -> vector<16x384xf32>
    %c0_51 = arith.constant 0 : index
    %c2304_52 = arith.constant 2304 : index
    %61 = vector.load %arg7[%c0_51, %c2304_52] : memref<1x4224xf32, #tpu.memory_space<vmem>>, vector<1x384xf32>
    %62 = vector.broadcast %61 : vector<1x384xf32> to vector<16x384xf32>
    %63 = arith.addf %60, %62 : vector<16x384xf32>
    %c0_53 = arith.constant 0 : index
    %c2304_54 = arith.constant 2304 : index
    %64 = vector.load %arg8[%c0_53, %c2304_54] : memref<16x4224xf32, #tpu.memory_space<vmem>>, vector<16x384xf32>
    tpu.vector_store %arg8[%c0_53, %c2304_54], %63 {strides = array<i32>} : memref<16x4224xf32, #tpu.memory_space<vmem>>, vector<16x384xf32>,
    %65 = arith.maximumf %58, %63 : vector<16x384xf32>
    %c0_55 = arith.constant 0 : index
    %c2688 = arith.constant 2688 : index
    %66 = vector.load %arg6[%c0_55, %c2688] : memref<32x4224xbf16, #tpu.memory_space<vmem>>, vector<32x384xbf16>
    %cst_56 = arith.constant dense<0.000000e+00> : vector<16x384xf32>
    %67 = tpu.matmul %17, %66, %cst_56 {dimension_numbers = #tpu.dot_dimension_numbers<[1], [0], [0], [1], [0, 0, 1, 1], [], []>} : vector<16x32xbf16>, vector<32x384xbf16>, vector<16x384xf32> -> vector<16x384xf32>
    %c0_57 = arith.constant 0 : index
    %c2688_58 = arith.constant 2688 : index
    %68 = vector.load %arg7[%c0_57, %c2688_58] : memref<1x4224xf32, #tpu.memory_space<vmem>>, vector<1x384xf32>
    %69 = vector.broadcast %68 : vector<1x384xf32> to vector<16x384xf32>
    %70 = arith.addf %67, %69 : vector<16x384xf32>
    %c0_59 = arith.constant 0 : index
    %c2688_60 = arith.constant 2688 : index
    %71 = vector.load %arg8[%c0_59, %c2688_60] : memref<16x4224xf32, #tpu.memory_space<vmem>>, vector<16x384xf32>
    tpu.vector_store %arg8[%c0_59, %c2688_60], %70 {strides = array<i32>} : memref<16x4224xf32, #tpu.memory_space<vmem>>, vector<16x384xf32>,
    %72 = arith.maximumf %65, %70 : vector<16x384xf32>
    %c0_61 = arith.constant 0 : index
    %c3072 = arith.constant 3072 : index
    %73 = vector.load %arg6[%c0_61, %c3072] : memref<32x4224xbf16, #tpu.memory_space<vmem>>, vector<32x384xbf16>
    %cst_62 = arith.constant dense<0.000000e+00> : vector<16x384xf32>
    %74 = tpu.matmul %17, %73, %cst_62 {dimension_numbers = #tpu.dot_dimension_numbers<[1], [0], [0], [1], [0, 0, 1, 1], [], []>} : vector<16x32xbf16>, vector<32x384xbf16>, vector<16x384xf32> -> vector<16x384xf32>
    %c0_63 = arith.constant 0 : index
    %c3072_64 = arith.constant 3072 : index
    %75 = vector.load %arg7[%c0_63, %c3072_64] : memref<1x4224xf32, #tpu.memory_space<vmem>>, vector<1x384xf32>
    %76 = vector.broadcast %75 : vector<1x384xf32> to vector<16x384xf32>
    %77 = arith.addf %74, %76 : vector<16x384xf32>
    %c0_65 = arith.constant 0 : index
    %c3072_66 = arith.constant 3072 : index
    %78 = vector.load %arg8[%c0_65, %c3072_66] : memref<16x4224xf32, #tpu.memory_space<vmem>>, vector<16x384xf32>
    tpu.vector_store %arg8[%c0_65, %c3072_66], %77 {strides = array<i32>} : memref<16x4224xf32, #tpu.memory_space<vmem>>, vector<16x384xf32>,
    %79 = arith.maximumf %72, %77 : vector<16x384xf32>
    %c0_67 = arith.constant 0 : index
    %c3456 = arith.constant 3456 : index
    %80 = vector.load %arg6[%c0_67, %c3456] : memref<32x4224xbf16, #tpu.memory_space<vmem>>, vector<32x384xbf16>
    %cst_68 = arith.constant dense<0.000000e+00> : vector<16x384xf32>
    %81 = tpu.matmul %17, %80, %cst_68 {dimension_numbers = #tpu.dot_dimension_numbers<[1], [0], [0], [1], [0, 0, 1, 1], [], []>} : vector<16x32xbf16>, vector<32x384xbf16>, vector<16x384xf32> -> vector<16x384xf32>
    %c0_69 = arith.constant 0 : index
    %c3456_70 = arith.constant 3456 : index
    %82 = vector.load %arg7[%c0_69, %c3456_70] : memref<1x4224xf32, #tpu.memory_space<vmem>>, vector<1x384xf32>
    %83 = vector.broadcast %82 : vector<1x384xf32> to vector<16x384xf32>
    %84 = arith.addf %81, %83 : vector<16x384xf32>
    %c0_71 = arith.constant 0 : index
    %c3456_72 = arith.constant 3456 : index
    %85 = vector.load %arg8[%c0_71, %c3456_72] : memref<16x4224xf32, #tpu.memory_space<vmem>>, vector<16x384xf32>
    tpu.vector_store %arg8[%c0_71, %c3456_72], %84 {strides = array<i32>} : memref<16x4224xf32, #tpu.memory_space<vmem>>, vector<16x384xf32>,
    %86 = arith.maximumf %79, %84 : vector<16x384xf32>
    %c0_73 = arith.constant 0 : index
    %c3840 = arith.constant 3840 : index
    %87 = vector.load %arg6[%c0_73, %c3840] : memref<32x4224xbf16, #tpu.memory_space<vmem>>, vector<32x384xbf16>
    %cst_74 = arith.constant dense<0.000000e+00> : vector<16x384xf32>
    %88 = tpu.matmul %17, %87, %cst_74 {dimension_numbers = #tpu.dot_dimension_numbers<[1], [0], [0], [1], [0, 0, 1, 1], [], []>} : vector<16x32xbf16>, vector<32x384xbf16>, vector<16x384xf32> -> vector<16x384xf32>
    %c0_75 = arith.constant 0 : index
    %c3840_76 = arith.constant 3840 : index
    %89 = vector.load %arg7[%c0_75, %c3840_76] : memref<1x4224xf32, #tpu.memory_space<vmem>>, vector<1x384xf32>
    %90 = vector.broadcast %89 : vector<1x384xf32> to vector<16x384xf32>
    %91 = arith.addf %88, %90 : vector<16x384xf32>
    %c0_77 = arith.constant 0 : index
    %c3840_78 = arith.constant 3840 : index
    %92 = vector.load %arg8[%c0_77, %c3840_78] : memref<16x4224xf32, #tpu.memory_space<vmem>>, vector<16x384xf32>
    tpu.vector_store %arg8[%c0_77, %c3840_78], %91 {strides = array<i32>} : memref<16x4224xf32, #tpu.memory_space<vmem>>, vector<16x384xf32>,
    %93 = arith.maximumf %86, %91 : vector<16x384xf32>
    %c0_79 = arith.constant 0 : index
    %c0_80 = arith.constant 0 : index
    %94 = vector.load %arg8[%c0_79, %c0_80] : memref<16x4224xf32, #tpu.memory_space<vmem>>, vector<16x384xf32>
    %95 = arith.subf %94, %93 : vector<16x384xf32>
    %96 = math.exp %95 : vector<16x384xf32>
    %c0_81 = arith.constant 0 : index
    %c0_82 = arith.constant 0 : index
    %97 = vector.load %arg8[%c0_81, %c0_82] : memref<16x4224xf32, #tpu.memory_space<vmem>>, vector<16x384xf32>
    tpu.vector_store %arg8[%c0_81, %c0_82], %96 {strides = array<i32>} : memref<16x4224xf32, #tpu.memory_space<vmem>>, vector<16x384xf32>,
    %c0_83 = arith.constant 0 : index
    %c384_84 = arith.constant 384 : index
    %98 = vector.load %arg8[%c0_83, %c384_84] : memref<16x4224xf32, #tpu.memory_space<vmem>>, vector<16x384xf32>
    %99 = arith.subf %98, %93 : vector<16x384xf32>
    %100 = math.exp %99 : vector<16x384xf32>
    %c0_85 = arith.constant 0 : index
    %c384_86 = arith.constant 384 : index
    %101 = vector.load %arg8[%c0_85, %c384_86] : memref<16x4224xf32, #tpu.memory_space<vmem>>, vector<16x384xf32>
    tpu.vector_store %arg8[%c0_85, %c384_86], %100 {strides = array<i32>} : memref<16x4224xf32, #tpu.memory_space<vmem>>, vector<16x384xf32>,
    %102 = arith.addf %96, %100 : vector<16x384xf32>
    %c0_87 = arith.constant 0 : index
    %c768_88 = arith.constant 768 : index
    %103 = vector.load %arg8[%c0_87, %c768_88] : memref<16x4224xf32, #tpu.memory_space<vmem>>, vector<16x384xf32>
    %104 = arith.subf %103, %93 : vector<16x384xf32>
    %105 = math.exp %104 : vector<16x384xf32>
    %c0_89 = arith.constant 0 : index
    %c768_90 = arith.constant 768 : index
    %106 = vector.load %arg8[%c0_89, %c768_90] : memref<16x4224xf32, #tpu.memory_space<vmem>>, vector<16x384xf32>
    tpu.vector_store %arg8[%c0_89, %c768_90], %105 {strides = array<i32>} : memref<16x4224xf32, #tpu.memory_space<vmem>>, vector<16x384xf32>,
    %107 = arith.addf %102, %105 : vector<16x384xf32>
    %c0_91 = arith.constant 0 : index
    %c1152_92 = arith.constant 1152 : index
    %108 = vector.load %arg8[%c0_91, %c1152_92] : memref<16x4224xf32, #tpu.memory_space<vmem>>, vector<16x384xf32>
    %109 = arith.subf %108, %93 : vector<16x384xf32>
    %110 = math.exp %109 : vector<16x384xf32>
    %c0_93 = arith.constant 0 : index
    %c1152_94 = arith.constant 1152 : index
    %111 = vector.load %arg8[%c0_93, %c1152_94] : memref<16x4224xf32, #tpu.memory_space<vmem>>, vector<16x384xf32>
    tpu.vector_store %arg8[%c0_93, %c1152_94], %110 {strides = array<i32>} : memref<16x4224xf32, #tpu.memory_space<vmem>>, vector<16x384xf32>,
    %112 = arith.addf %107, %110 : vector<16x384xf32>
    %c0_95 = arith.constant 0 : index
    %c1536_96 = arith.constant 1536 : index
    %113 = vector.load %arg8[%c0_95, %c1536_96] : memref<16x4224xf32, #tpu.memory_space<vmem>>, vector<16x384xf32>
    %114 = arith.subf %113, %93 : vector<16x384xf32>
    %115 = math.exp %114 : vector<16x384xf32>
    %c0_97 = arith.constant 0 : index
    %c1536_98 = arith.constant 1536 : index
    %116 = vector.load %arg8[%c0_97, %c1536_98] : memref<16x4224xf32, #tpu.memory_space<vmem>>, vector<16x384xf32>
    tpu.vector_store %arg8[%c0_97, %c1536_98], %115 {strides = array<i32>} : memref<16x4224xf32, #tpu.memory_space<vmem>>, vector<16x384xf32>,
    %117 = arith.addf %112, %115 : vector<16x384xf32>
    %c0_99 = arith.constant 0 : index
    %c1920_100 = arith.constant 1920 : index
    %118 = vector.load %arg8[%c0_99, %c1920_100] : memref<16x4224xf32, #tpu.memory_space<vmem>>, vector<16x384xf32>
    %119 = arith.subf %118, %93 : vector<16x384xf32>
    %120 = math.exp %119 : vector<16x384xf32>
    %c0_101 = arith.constant 0 : index
    %c1920_102 = arith.constant 1920 : index
    %121 = vector.load %arg8[%c0_101, %c1920_102] : memref<16x4224xf32, #tpu.memory_space<vmem>>, vector<16x384xf32>
    tpu.vector_store %arg8[%c0_101, %c1920_102], %120 {strides = array<i32>} : memref<16x4224xf32, #tpu.memory_space<vmem>>, vector<16x384xf32>,
    %122 = arith.addf %117, %120 : vector<16x384xf32>
    %c0_103 = arith.constant 0 : index
    %c2304_104 = arith.constant 2304 : index
    %123 = vector.load %arg8[%c0_103, %c2304_104] : memref<16x4224xf32, #tpu.memory_space<vmem>>, vector<16x384xf32>
    %124 = arith.subf %123, %93 : vector<16x384xf32>
    %125 = math.exp %124 : vector<16x384xf32>
    %c0_105 = arith.constant 0 : index
    %c2304_106 = arith.constant 2304 : index
    %126 = vector.load %arg8[%c0_105, %c2304_106] : memref<16x4224xf32, #tpu.memory_space<vmem>>, vector<16x384xf32>
    tpu.vector_store %arg8[%c0_105, %c2304_106], %125 {strides = array<i32>} : memref<16x4224xf32, #tpu.memory_space<vmem>>, vector<16x384xf32>,
    %127 = arith.addf %122, %125 : vector<16x384xf32>
    %c0_107 = arith.constant 0 : index
    %c2688_108 = arith.constant 2688 : index
    %128 = vector.load %arg8[%c0_107, %c2688_108] : memref<16x4224xf32, #tpu.memory_space<vmem>>, vector<16x384xf32>
    %129 = arith.subf %128, %93 : vector<16x384xf32>
    %130 = math.exp %129 : vector<16x384xf32>
    %c0_109 = arith.constant 0 : index
    %c2688_110 = arith.constant 2688 : index
    %131 = vector.load %arg8[%c0_109, %c2688_110] : memref<16x4224xf32, #tpu.memory_space<vmem>>, vector<16x384xf32>
    tpu.vector_store %arg8[%c0_109, %c2688_110], %130 {strides = array<i32>} : memref<16x4224xf32, #tpu.memory_space<vmem>>, vector<16x384xf32>,
    %132 = arith.addf %127, %130 : vector<16x384xf32>
    %c0_111 = arith.constant 0 : index
    %c3072_112 = arith.constant 3072 : index
    %133 = vector.load %arg8[%c0_111, %c3072_112] : memref<16x4224xf32, #tpu.memory_space<vmem>>, vector<16x384xf32>
    %134 = arith.subf %133, %93 : vector<16x384xf32>
    %135 = math.exp %134 : vector<16x384xf32>
    %c0_113 = arith.constant 0 : index
    %c3072_114 = arith.constant 3072 : index
    %136 = vector.load %arg8[%c0_113, %c3072_114] : memref<16x4224xf32, #tpu.memory_space<vmem>>, vector<16x384xf32>
    tpu.vector_store %arg8[%c0_113, %c3072_114], %135 {strides = array<i32>} : memref<16x4224xf32, #tpu.memory_space<vmem>>, vector<16x384xf32>,
    %137 = arith.addf %132, %135 : vector<16x384xf32>
    %c0_115 = arith.constant 0 : index
    %c3456_116 = arith.constant 3456 : index
    %138 = vector.load %arg8[%c0_115, %c3456_116] : memref<16x4224xf32, #tpu.memory_space<vmem>>, vector<16x384xf32>
    %139 = arith.subf %138, %93 : vector<16x384xf32>
    %140 = math.exp %139 : vector<16x384xf32>
    %c0_117 = arith.constant 0 : index
    %c3456_118 = arith.constant 3456 : index
    %141 = vector.load %arg8[%c0_117, %c3456_118] : memref<16x4224xf32, #tpu.memory_space<vmem>>, vector<16x384xf32>
    tpu.vector_store %arg8[%c0_117, %c3456_118], %140 {strides = array<i32>} : memref<16x4224xf32, #tpu.memory_space<vmem>>, vector<16x384xf32>,
    %142 = arith.addf %137, %140 : vector<16x384xf32>
    %c0_119 = arith.constant 0 : index
    %c3840_120 = arith.constant 3840 : index
    %143 = vector.load %arg8[%c0_119, %c3840_120] : memref<16x4224xf32, #tpu.memory_space<vmem>>, vector<16x384xf32>
    %144 = arith.subf %143, %93 : vector<16x384xf32>
    %145 = math.exp %144 : vector<16x384xf32>
    %c0_121 = arith.constant 0 : index
    %c3840_122 = arith.constant 3840 : index
    %146 = vector.load %arg8[%c0_121, %c3840_122] : memref<16x4224xf32, #tpu.memory_space<vmem>>, vector<16x384xf32>
    tpu.vector_store %arg8[%c0_121, %c3840_122], %145 {strides = array<i32>} : memref<16x4224xf32, #tpu.memory_space<vmem>>, vector<16x384xf32>,
    %147 = arith.addf %142, %145 : vector<16x384xf32>
    %148 = tpu.reciprocal %147 {approx = true} : vector<16x384xf32> -> vector<16x384xf32>
    %149 = arith.mulf %147, %148 : vector<16x384xf32>
    %cst_123 = arith.constant 2.000000e+00 : f32
    %150 = vector.broadcast %cst_123 : f32 to vector<16x384xf32>
    %151 = arith.subf %150, %149 : vector<16x384xf32>
    %152 = arith.mulf %148, %151 : vector<16x384xf32>
    %c0_124 = arith.constant 0 : index
    %c0_125 = arith.constant 0 : index
    %153 = vector.load %arg8[%c0_124, %c0_125] : memref<16x4224xf32, #tpu.memory_space<vmem>>, vector<16x384xf32>
    %154 = arith.mulf %153, %152 : vector<16x384xf32>
    %c0_126 = arith.constant 0 : index
    %c0_127 = arith.constant 0 : index
    %155 = vector.load %arg8[%c0_126, %c0_127] : memref<16x4224xf32, #tpu.memory_space<vmem>>, vector<16x384xf32>
    tpu.vector_store %arg8[%c0_126, %c0_127], %154 {strides = array<i32>} : memref<16x4224xf32, #tpu.memory_space<vmem>>, vector<16x384xf32>,
    %c0_128 = arith.constant 0 : index
    %c384_129 = arith.constant 384 : index
    %156 = vector.load %arg8[%c0_128, %c384_129] : memref<16x4224xf32, #tpu.memory_space<vmem>>, vector<16x384xf32>
    %157 = arith.mulf %156, %152 : vector<16x384xf32>
    %c0_130 = arith.constant 0 : index
    %c384_131 = arith.constant 384 : index
    %158 = vector.load %arg8[%c0_130, %c384_131] : memref<16x4224xf32, #tpu.memory_space<vmem>>, vector<16x384xf32>
    tpu.vector_store %arg8[%c0_130, %c384_131], %157 {strides = array<i32>} : memref<16x4224xf32, #tpu.memory_space<vmem>>, vector<16x384xf32>,
    %c0_132 = arith.constant 0 : index
    %c768_133 = arith.constant 768 : index
    %159 = vector.load %arg8[%c0_132, %c768_133] : memref<16x4224xf32, #tpu.memory_space<vmem>>, vector<16x384xf32>
    %160 = arith.mulf %159, %152 : vector<16x384xf32>
    %c0_134 = arith.constant 0 : index
    %c768_135 = arith.constant 768 : index
    %161 = vector.load %arg8[%c0_134, %c768_135] : memref<16x4224xf32, #tpu.memory_space<vmem>>, vector<16x384xf32>
    tpu.vector_store %arg8[%c0_134, %c768_135], %160 {strides = array<i32>} : memref<16x4224xf32, #tpu.memory_space<vmem>>, vector<16x384xf32>,
    %c0_136 = arith.constant 0 : index
    %c1152_137 = arith.constant 1152 : index
    %162 = vector.load %arg8[%c0_136, %c1152_137] : memref<16x4224xf32, #tpu.memory_space<vmem>>, vector<16x384xf32>
    %163 = arith.mulf %162, %152 : vector<16x384xf32>
    %c0_138 = arith.constant 0 : index
    %c1152_139 = arith.constant 1152 : index
    %164 = vector.load %arg8[%c0_138, %c1152_139] : memref<16x4224xf32, #tpu.memory_space<vmem>>, vector<16x384xf32>
    tpu.vector_store %arg8[%c0_138, %c1152_139], %163 {strides = array<i32>} : memref<16x4224xf32, #tpu.memory_space<vmem>>, vector<16x384xf32>,
    %c0_140 = arith.constant 0 : index
    %c1536_141 = arith.constant 1536 : index
    %165 = vector.load %arg8[%c0_140, %c1536_141] : memref<16x4224xf32, #tpu.memory_space<vmem>>, vector<16x384xf32>
    %166 = arith.mulf %165, %152 : vector<16x384xf32>
    %c0_142 = arith.constant 0 : index
    %c1536_143 = arith.constant 1536 : index
    %167 = vector.load %arg8[%c0_142, %c1536_143] : memref<16x4224xf32, #tpu.memory_space<vmem>>, vector<16x384xf32>
    tpu.vector_store %arg8[%c0_142, %c1536_143], %166 {strides = array<i32>} : memref<16x4224xf32, #tpu.memory_space<vmem>>, vector<16x384xf32>,
    %c0_144 = arith.constant 0 : index
    %c1920_145 = arith.constant 1920 : index
    %168 = vector.load %arg8[%c0_144, %c1920_145] : memref<16x4224xf32, #tpu.memory_space<vmem>>, vector<16x384xf32>
    %169 = arith.mulf %168, %152 : vector<16x384xf32>
    %c0_146 = arith.constant 0 : index
    %c1920_147 = arith.constant 1920 : index
    %170 = vector.load %arg8[%c0_146, %c1920_147] : memref<16x4224xf32, #tpu.memory_space<vmem>>, vector<16x384xf32>
    tpu.vector_store %arg8[%c0_146, %c1920_147], %169 {strides = array<i32>} : memref<16x4224xf32, #tpu.memory_space<vmem>>, vector<16x384xf32>,
    %c0_148 = arith.constant 0 : index
    %c2304_149 = arith.constant 2304 : index
    %171 = vector.load %arg8[%c0_148, %c2304_149] : memref<16x4224xf32, #tpu.memory_space<vmem>>, vector<16x384xf32>
    %172 = arith.mulf %171, %152 : vector<16x384xf32>
    %c0_150 = arith.constant 0 : index
    %c2304_151 = arith.constant 2304 : index
    %173 = vector.load %arg8[%c0_150, %c2304_151] : memref<16x4224xf32, #tpu.memory_space<vmem>>, vector<16x384xf32>
    tpu.vector_store %arg8[%c0_150, %c2304_151], %172 {strides = array<i32>} : memref<16x4224xf32, #tpu.memory_space<vmem>>, vector<16x384xf32>,
    %c0_152 = arith.constant 0 : index
    %c2688_153 = arith.constant 2688 : index
    %174 = vector.load %arg8[%c0_152, %c2688_153] : memref<16x4224xf32, #tpu.memory_space<vmem>>, vector<16x384xf32>
    %175 = arith.mulf %174, %152 : vector<16x384xf32>
    %c0_154 = arith.constant 0 : index
    %c2688_155 = arith.constant 2688 : index
    %176 = vector.load %arg8[%c0_154, %c2688_155] : memref<16x4224xf32, #tpu.memory_space<vmem>>, vector<16x384xf32>
    tpu.vector_store %arg8[%c0_154, %c2688_155], %175 {strides = array<i32>} : memref<16x4224xf32, #tpu.memory_space<vmem>>, vector<16x384xf32>,
    %c0_156 = arith.constant 0 : index
    %c3072_157 = arith.constant 3072 : index
    %177 = vector.load %arg8[%c0_156, %c3072_157] : memref<16x4224xf32, #tpu.memory_space<vmem>>, vector<16x384xf32>
    %178 = arith.mulf %177, %152 : vector<16x384xf32>
    %c0_158 = arith.constant 0 : index
    %c3072_159 = arith.constant 3072 : index
    %179 = vector.load %arg8[%c0_158, %c3072_159] : memref<16x4224xf32, #tpu.memory_space<vmem>>, vector<16x384xf32>
    tpu.vector_store %arg8[%c0_158, %c3072_159], %178 {strides = array<i32>} : memref<16x4224xf32, #tpu.memory_space<vmem>>, vector<16x384xf32>,
    %c0_160 = arith.constant 0 : index
    %c3456_161 = arith.constant 3456 : index
    %180 = vector.load %arg8[%c0_160, %c3456_161] : memref<16x4224xf32, #tpu.memory_space<vmem>>, vector<16x384xf32>
    %181 = arith.mulf %180, %152 : vector<16x384xf32>
    %c0_162 = arith.constant 0 : index
    %c3456_163 = arith.constant 3456 : index
    %182 = vector.load %arg8[%c0_162, %c3456_163] : memref<16x4224xf32, #tpu.memory_space<vmem>>, vector<16x384xf32>
    tpu.vector_store %arg8[%c0_162, %c3456_163], %181 {strides = array<i32>} : memref<16x4224xf32, #tpu.memory_space<vmem>>, vector<16x384xf32>,
    %c0_164 = arith.constant 0 : index
    %c3840_165 = arith.constant 3840 : index
    %183 = vector.load %arg8[%c0_164, %c3840_165] : memref<16x4224xf32, #tpu.memory_space<vmem>>, vector<16x384xf32>
    %184 = arith.mulf %183, %152 : vector<16x384xf32>
    %c0_166 = arith.constant 0 : index
    %c3840_167 = arith.constant 3840 : index
    %185 = vector.load %arg8[%c0_166, %c3840_167] : memref<16x4224xf32, #tpu.memory_space<vmem>>, vector<16x384xf32>
    tpu.vector_store %arg8[%c0_166, %c3840_167], %184 {strides = array<i32>} : memref<16x4224xf32, #tpu.memory_space<vmem>>, vector<16x384xf32>,
    return
  }
  func.func @transform_0(%arg0: i32) -> (i32, i32) {
    %c0_i32 = arith.constant 0 : i32
    %c0_i32_0 = arith.constant 0 : i32
    return %arg0, %c0_i32 : i32, i32
  }
  func.func @transform_1(%arg0: i32) -> (i32, i32) {
    %c0_i32 = arith.constant 0 : i32
    %c0_i32_0 = arith.constant 0 : i32
    %c0_i32_1 = arith.constant 0 : i32
    return %c0_i32, %c0_i32_0 : i32, i32
  }
  func.func @transform_2(%arg0: i32) -> (i32, i32) {
    %c0_i32 = arith.constant 0 : i32
    %c0_i32_0 = arith.constant 0 : i32
    %c0_i32_1 = arith.constant 0 : i32
    return %c0_i32, %c0_i32_0 : i32, i32
  }
  func.func @transform_3(%arg0: i32) -> (i32, i32) {
    %c0_i32 = arith.constant 0 : i32
    %c0_i32_0 = arith.constant 0 : i32
    %c0_i32_1 = arith.constant 0 : i32
    return %c0_i32, %c0_i32_0 : i32, i32
  }
  func.func @transform_4(%arg0: i32) -> (i32, i32) {
    %c0_i32 = arith.constant 0 : i32
    %c0_i32_0 = arith.constant 0 : i32
    %c0_i32_1 = arith.constant 0 : i32
    return %c0_i32, %c0_i32_0 : i32, i32
  }
  func.func @transform_5(%arg0: i32) -> (i32, i32) {
    %c0_i32 = arith.constant 0 : i32
    %c0_i32_0 = arith.constant 0 : i32
    %c0_i32_1 = arith.constant 0 : i32
    return %c0_i32, %c0_i32_0 : i32, i32
  }
  func.func @transform_6(%arg0: i32) -> (i32, i32) {
    %c0_i32 = arith.constant 0 : i32
    %c0_i32_0 = arith.constant 0 : i32
    %c0_i32_1 = arith.constant 0 : i32
    return %c0_i32, %c0_i32_0 : i32, i32
  }
  func.func @transform_7(%arg0: i32) -> (i32, i32) {
    %c0_i32 = arith.constant 0 : i32
    %c0_i32_0 = arith.constant 0 : i32
    return %arg0, %c0_i32 : i32, i32
  }
}

</mosaic_0001>

<llo_original>
// kernel: _forward.1
$region0: #{_forward.1}
  #allocation0 [shape = 'u32[]', space=smem, size = 0x4, offset = 0x4, fixed_abs, tag = 'smem constant byte address 0x4 - core index']
  #allocation1 [shape = 'u32[144,128]{1,0:T(1,128)}', space=vmem, size = 0x12000, scoped, tag = 'internal scratch']
  %s0 = inlined_call_operand.vmem [shape: f32[16,16], index: 0, kind: input, shape index: {}]
  %s1 = inlined_call_operand.hbm [shape: bf16[16,32], index: 1, kind: input, shape index: {}]
  %s2 = inlined_call_operand.hbm [shape: f32[1,32], index: 2, kind: input, shape index: {}]
  %s3 = inlined_call_operand.hbm [shape: bf16[32,32], index: 3, kind: input, shape index: {}]
  %s4 = inlined_call_operand.hbm [shape: f32[1,32], index: 4, kind: input, shape index: {}]
  %s5 = inlined_call_operand.vmem [shape: bf16[32,4224], index: 5, kind: input, shape index: {}]
  %s6 = inlined_call_operand.hbm [shape: f32[1,4224], index: 6, kind: input, shape index: {}]
  %s7 = inlined_call_operand.vmem [shape: f32[16,4224], index: 7, kind: output, shape index: {}]
  %s8 = sld [smem:[#allocation0]]
  $region58: #{_forward.1} parent=0
    _
  %s10 = ssub.s32 1, %s8
  %s11 = scalar_select 0, %s10, %s8
  $region1: #{_forward.1} parent=0
    #allocation2 [shape = 'u8[4096]{0}', space=vmem, size = 0x1000, scoped, tag = 'input window, operand 1, single buffered']
    #allocation3 [shape = 's32[1]{0}', space=sflag, size = 0x4, scoped, tag = 'scoped memory for _forward.1']
    #allocation4 [shape = 'u8[512]{0}', space=vmem, size = 0x400, scoped, tag = 'input window, operand 2, single buffered']
    #allocation5 [shape = 's32[1]{0}', space=sflag, size = 0x4, scoped, tag = 'scoped memory for _forward.1']
    #allocation6 [shape = 'u8[8192]{0}', space=vmem, size = 0x2000, scoped, tag = 'input window, operand 3, single buffered']
    #allocation7 [shape = 'u8[512]{0}', space=vmem, size = 0x400, scoped, tag = 'input window, operand 4, single buffered']
    #allocation8 [shape = 's32[1]{0}', space=sflag, size = 0x4, scoped, tag = 'scoped memory for _forward.1']
    #allocation9 [shape = 'u8[16896]{0}', space=vmem, size = 0x4400, scoped, tag = 'input window, operand 6, single buffered']
    %12 = vsyncpa [#allocation3], 0
    %13 = vsyncpa [#allocation5], 0
    %14 = vsyncpa [#allocation8], 0
    // Predicated region
    $region2: #{_forward.1} parent=1 // pred_check
      _
    $region3: #{_forward.1} parent=1 // pred_check_branch
      %16 = sbr.rel (0) target = $region5
    $region4: #{_forward.1} parent=1 // pred_region
      _
    $region5: #{_forward.1} parent=1 // pred_fallthru
      _
    // Predicated region
    $region6: #{_forward.1} parent=1 // pred_check
      _
    $region7: #{_forward.1} parent=1 // pred_check_branch
      %18 = sbr.rel (0) target = $region9
    $region8: #{_forward.1} parent=1 // pred_region
      %s20 = ssub.s32 128, 128
      %21 = vsyncadd [#allocation3], %s20
      %s22 = sshll.u32 [#allocation2], 4
      %s23 = int_to_ptr.vmem [resolvable:$true] %s22
      %28 = dma.hbm_to_vmem [thread:$0]  %s1, 128, %s23, [#allocation3], 64, 64, 4
    $region9: #{_forward.1} parent=1 // pred_fallthru
      _
    // Predicated region
    $region10: #{_forward.1} parent=1 // pred_check
      _
    $region11: #{_forward.1} parent=1 // pred_check_branch
      %30 = sbr.rel (0) target = $region13
    $region12: #{_forward.1} parent=1 // pred_region
      %s32 = ssub.s32 16, 16
      %33 = vsyncadd [#allocation5], %s32
      %s35 = sshll.u32 [#allocation4], 4
      %s36 = int_to_ptr.vmem [resolvable:$true] %s35
      %38 = dma.hbm_to_vmem [thread:$0]  %s2, 16, %s36, [#allocation5]
    $region13: #{_forward.1} parent=1 // pred_fallthru
      _
    // Predicated region
    $region14: #{_forward.1} parent=1 // pred_check
      _
    $region15: #{_forward.1} parent=1 // pred_check_branch
      %40 = sbr.rel (0) target = $region17
    $region16: #{_forward.1} parent=1 // pred_region
      %s42 = ssub.s32 256, 256
      %43 = vsyncadd [#allocation5], %s42
      %s44 = sshll.u32 [#allocation6], 4
      %s45 = int_to_ptr.vmem [resolvable:$true] %s44
      %50 = dma.hbm_to_vmem [thread:$0]  %s3, 256, %s45, [#allocation5], 64, 64, 4
    $region17: #{_forward.1} parent=1 // pred_fallthru
      _
    // Predicated region
    $region18: #{_forward.1} parent=1 // pred_check
      _
    $region19: #{_forward.1} parent=1 // pred_check_branch
      %52 = sbr.rel (0) target = $region21
    $region20: #{_forward.1} parent=1 // pred_region
      %s54 = ssub.s32 16, 16
      %55 = vsyncadd [#allocation8], %s54
      %s57 = sshll.u32 [#allocation7], 4
      %s58 = int_to_ptr.vmem [resolvable:$true] %s57
      %60 = dma.hbm_to_vmem [thread:$0]  %s4, 16, %s58, [#allocation8]
    $region21: #{_forward.1} parent=1 // pred_fallthru
      _
    // Predicated region
    $region22: #{_forward.1} parent=1 // pred_check
      _
    $region23: #{_forward.1} parent=1 // pred_check_branch
      %62 = sbr.rel (0) target = $region25
    $region24: #{_forward.1} parent=1 // pred_region
      _
    $region25: #{_forward.1} parent=1 // pred_fallthru
      _
    // Predicated region
    $region26: #{_forward.1} parent=1 // pred_check
      _
    $region27: #{_forward.1} parent=1 // pred_check_branch
      %64 = sbr.rel (0) target = $region29
    $region28: #{_forward.1} parent=1 // pred_region
      %s66 = ssub.s32 528, 528
      %67 = vsyncadd [#allocation8], %s66
      %s69 = sshll.u32 [#allocation9], 4
      %s70 = int_to_ptr.vmem [resolvable:$true] %s69
      %72 = dma.hbm_to_vmem [thread:$0]  %s6, 528, %s70, [#allocation8]
    $region29: #{_forward.1} parent=1 // pred_fallthru
      _
    // Predicated region
    $region30: #{_forward.1} parent=1 // pred_check
      _
    $region31: #{_forward.1} parent=1 // pred_check_branch
      %74 = sbr.rel (0) target = $region33
    $region32: #{_forward.1} parent=1 // pred_region
      %75 = dma.done [#allocation3], 128
    $region33: #{_forward.1} parent=1 // pred_fallthru
      _
    // Predicated region
    $region34: #{_forward.1} parent=1 // pred_check
      _
    $region35: #{_forward.1} parent=1 // pred_check_branch
      %77 = sbr.rel (0) target = $region37
    $region36: #{_forward.1} parent=1 // pred_region
      %78 = dma.done [#allocation5], 16
    $region37: #{_forward.1} parent=1 // pred_fallthru
      _
    // Predicated region
    $region38: #{_forward.1} parent=1 // pred_check
      _
    $region39: #{_forward.1} parent=1 // pred_check_branch
      %80 = sbr.rel (0) target = $region41
    $region40: #{_forward.1} parent=1 // pred_region
      %81 = dma.done [#allocation5], 256
    $region41: #{_forward.1} parent=1 // pred_fallthru
      _
    // Predicated region
    $region42: #{_forward.1} parent=1 // pred_check
      _
    $region43: #{_forward.1} parent=1 // pred_check_branch
      %83 = sbr.rel (0) target = $region45
    $region44: #{_forward.1} parent=1 // pred_region
      %84 = dma.done [#allocation8], 16
    $region45: #{_forward.1} parent=1 // pred_fallthru
      _
    // Predicated region
    $region46: #{_forward.1} parent=1 // pred_check
      _
    $region47: #{_forward.1} parent=1 // pred_check_branch
      %86 = sbr.rel (0) target = $region49
    $region48: #{_forward.1} parent=1 // pred_region
      %87 = dma.done [#allocation8], 528
    $region49: #{_forward.1} parent=1 // pred_fallthru
      _
    %v89 = vld [vmem:[%s0] sm:$0xff]
    %v90 = vld [vmem:[%s0 + $0x8] sm:$0xff]
    %v91 = vpack.c.bf16 %v90, %v89
    %v92 = vld [vmem:[#allocation2] sm:$0xf]
    %v93 = vld [vmem:[#allocation2 + $0x4] sm:$0xf]
    %v94 = vld [vmem:[#allocation4] sm:$0x1]
    %v96 = vlaneseq
    %v97 = vshrl.u32 %v96, 7
    %v98 = vsub.s32 0, %v97
    %v99 = vrot.slane %v94, %v98
    %v103 = vunpack.c.l.b16 %v92
    %v104 = vunpack.c.l.b16 %v93
    %v105 = vpack.c.b16 %v104, %v103
    %vm107 = vcmask 130048
    %v109 = vsel %vm107, %v91, 0
    %111 = vmatprep.subr.bf16.mxu0 0
    %112 = vmatpush1.bf16.msra.mxu0 %v105
    %113 = vmatprep.subr.bf16.mxu0 0
    %114 = vmatpush1.bf16.msra.mxu0 0
    %115 = vmatprep.subr.bf16.mxu0 0
    %116 = vmatpush1.bf16.msra.mxu0 0
    %117 = vmatprep.subr.bf16.mxu0 0
    %118 = vmatpush1.bf16.msra.mxu0 0
    %119 = vmatprep.subr.bf16.mxu0 0
    %120 = vmatpush1.bf16.msra.mxu0 0
    %121 = vmatprep.subr.bf16.mxu0 0
    %122 = vmatpush1.bf16.msra.mxu0 0
    %123 = vmatprep.subr.bf16.mxu0 0
    %124 = vmatpush1.bf16.msra.mxu0 0
    %125 = vmatprep.subr.bf16.mxu0 0
    %126 = vmatpush1.bf16.msra.mxu0 0
    %127 = vmatprep.subr.bf16.mxu0 0
    %128 = vmatpush1.bf16.msra.mxu0 0
    %129 = vmatprep.subr.bf16.mxu0 0
    %130 = vmatpush1.bf16.msra.mxu0 0
    %131 = vmatprep.subr.bf16.mxu0 0
    %132 = vmatpush1.bf16.msra.mxu0 0
    %133 = vmatprep.subr.bf16.mxu0 0
    %134 = vmatpush1.bf16.msra.mxu0 0
    %135 = vmatprep.subr.bf16.mxu0 0
    %136 = vmatpush1.bf16.msra.mxu0 0
    %137 = vmatprep.subr.bf16.mxu0 0
    %138 = vmatpush1.bf16.msra.mxu0 0
    %139 = vmatprep.subr.bf16.mxu0 0
    %140 = vmatpush1.bf16.msra.mxu0 0
    %141 = vmatprep.subr.bf16.mxu0 0
    %142 = vmatpush1.bf16.msra.mxu0 0
    %143 = vmatprep.mubr.bf16.mxu0 0
    %144 = vmatmul.mubr.bf16.gmra.mrb[0].mxu0 %v109
    %v145 = vpop.f32.mrb[0].mxu0
    %v146 = vadd.f32 %v99, %v145
    %v147 = vpop.f32.mrb[0].mxu0
    %v148 = vpop.f32.mrb[0].mxu0
    %v149 = vadd.f32 %v99, %v148
    %v150 = vpop.f32.mrb[0].mxu0
    %151 = vdwg.mxu0
    %v152 = vmax.f32 %v146, 0.0
    %v153 = vmax.f32 %v149, 0.0
    %v154 = vpack.c.bf16 %v153, %v152
    %v155 = vld [vmem:[#allocation6] sm:$0xf]
    %v156 = vld [vmem:[#allocation6 + $0x4] sm:$0xf]
    %v157 = vld [vmem:[#allocation6 + $0x8] sm:$0xf]
    %v158 = vld [vmem:[#allocation6 + $0xc] sm:$0xf]
    %v159 = vld [vmem:[#allocation7] sm:$0x1]
    %v161 = vlaneseq
    %v162 = vshrl.u32 %v161, 7
    %v163 = vsub.s32 0, %v162
    %v164 = vrot.slane %v159, %v163
    %v170 = vunpack.c.l.b16 %v155
    %v171 = vunpack.c.l.b16 %v156
    %v172 = vunpack.c.l.b16 %v157
    %v173 = vunpack.c.l.b16 %v158
    %v174 = vpack.c.b16 %v171, %v170
    %v175 = vpack.c.b16 %v173, %v172
    %vm178 = vcmask 261120
    %v180 = vsel %vm178, %v154, 0
    %182 = vmatprep.subr.bf16.mxu0 0
    %183 = vmatpush1.bf16.msra.mxu0 %v174
    %184 = vmatprep.subr.bf16.mxu0 0
    %185 = vmatpush1.bf16.msra.mxu0 %v175
    %186 = vmatprep.subr.bf16.mxu0 0
    %187 = vmatpush1.bf16.msra.mxu0 0
    %188 = vmatprep.subr.bf16.mxu0 0
    %189 = vmatpush1.bf16.msra.mxu0 0
    %190 = vmatprep.subr.bf16.mxu0 0
    %191 = vmatpush1.bf16.msra.mxu0 0
    %192 = vmatprep.subr.bf16.mxu0 0
    %193 = vmatpush1.bf16.msra.mxu0 0
    %194 = vmatprep.subr.bf16.mxu0 0
    %195 = vmatpush1.bf16.msra.mxu0 0
    %196 = vmatprep.subr.bf16.mxu0 0
    %197 = vmatpush1.bf16.msra.mxu0 0
    %198 = vmatprep.subr.bf16.mxu0 0
    %199 = vmatpush1.bf16.msra.mxu0 0
    %200 = vmatprep.subr.bf16.mxu0 0
    %201 = vmatpush1.bf16.msra.mxu0 0
    %202 = vmatprep.subr.bf16.mxu0 0
    %203 = vmatpush1.bf16.msra.mxu0 0
    %204 = vmatprep.subr.bf16.mxu0 0
    %205 = vmatpush1.bf16.msra.mxu0 0
    %206 = vmatprep.subr.bf16.mxu0 0
    %207 = vmatpush1.bf16.msra.mxu0 0
    %208 = vmatprep.subr.bf16.mxu0 0
    %209 = vmatpush1.bf16.msra.mxu0 0
    %210 = vmatprep.subr.bf16.mxu0 0
    %211 = vmatpush1.bf16.msra.mxu0 0
    %212 = vmatprep.subr.bf16.mxu0 0
    %213 = vmatpush1.bf16.msra.mxu0 0
    %214 = vmatprep.mubr.bf16.mxu0 0
    %215 = vmatmul.mubr.bf16.gmra.mrb[0].mxu0 %v180
    %v216 = vpop.f32.mrb[0].mxu0
    %v217 = vadd.f32 %v164, %v216
    %v218 = vpop.f32.mrb[0].mxu0
    %v219 = vpop.f32.mrb[0].mxu0
    %v220 = vadd.f32 %v164, %v219
    %v221 = vpop.f32.mrb[0].mxu0
    %222 = vdwg.mxu0
    %v223 = vmax.f32 %v217, 0.0
    %v224 = vmax.f32 %v220, 0.0
    %v225 = vpack.c.bf16 %v224, %v223
    %v226 = vld [vmem:[%s5] sm:$0xff]
    %v227 = vld [vmem:[%s5 + $0x8] sm:$0xf]
    %v228 = vld [vmem:[%s5 + $0x84] sm:$0xff]
    %v229 = vld [vmem:[%s5 + $0x8c] sm:$0xf]
    %v230 = vld [vmem:[%s5 + $0x108] sm:$0xff]
    %v231 = vld [vmem:[%s5 + $0x110] sm:$0xf]
    %v232 = vld [vmem:[%s5 + $0x18c] sm:$0xff]
    %v233 = vld [vmem:[%s5 + $0x194] sm:$0xf]
    %v234 = vld [vmem:[#allocation9] sm:$0x7]
    %v236 = vlaneseq
    %v237 = vshrl.u32 %v236, 7
    %v238 = vsub.s32 0, %v237
    %v239 = vrot.slane %v234, %v238
    %v240 = vlaneseq
    %v241 = vshrl.u32 %v240, 7
    %v242 = vsub.s32 1, %v241
    %v243 = vrot.slane %v234, %v242
    %v244 = vlaneseq
    %v245 = vshrl.u32 %v244, 7
    %v246 = vsub.s32 2, %v245
    %v247 = vrot.slane %v234, %v246
    %v259 = vunpack.c.l.b16 %v226
    %v260 = vunpack.c.h.b16 %v226
    %v261 = vunpack.c.l.b16 %v227
    %v262 = vunpack.c.l.b16 %v228
    %v263 = vunpack.c.h.b16 %v228
    %v264 = vunpack.c.l.b16 %v229
    %v265 = vunpack.c.l.b16 %v230
    %v266 = vunpack.c.h.b16 %v230
    %v267 = vunpack.c.l.b16 %v231
    %v268 = vunpack.c.l.b16 %v232
    %v269 = vunpack.c.h.b16 %v232
    %v270 = vunpack.c.l.b16 %v233
    %v271 = vpack.c.b16 %v262, %v259
    %v272 = vpack.c.b16 %v263, %v260
    %v273 = vpack.c.b16 %v264, %v261
    %v274 = vpack.c.b16 %v268, %v265
    %v275 = vpack.c.b16 %v269, %v266
    %v276 = vpack.c.b16 %v270, %v267
    %v284 = vsel %vm178, %v225, 0
    %286 = vmatprep.subr.bf16.mxu0 %v272
    %287 = vmatpush1.bf16.msra.mxu0 %v271
    %288 = vmatprep.subr.bf16.mxu0 %v275
    %289 = vmatpush1.bf16.msra.mxu0 %v274
    %290 = vmatprep.subr.bf16.mxu0 0
    %291 = vmatpush1.bf16.msra.mxu0 0
    %292 = vmatprep.subr.bf16.mxu0 0
    %293 = vmatpush1.bf16.msra.mxu0 0
    %294 = vmatprep.subr.bf16.mxu0 0
    %295 = vmatpush1.bf16.msra.mxu0 0
    %296 = vmatprep.subr.bf16.mxu0 0
    %297 = vmatpush1.bf16.msra.mxu0 0
    %298 = vmatprep.subr.bf16.mxu0 0
    %299 = vmatpush1.bf16.msra.mxu0 0
    %300 = vmatprep.subr.bf16.mxu0 0
    %301 = vmatpush1.bf16.msra.mxu0 0
    %302 = vmatprep.subr.bf16.mxu0 0
    %303 = vmatpush1.bf16.msra.mxu0 0
    %304 = vmatprep.subr.bf16.mxu0 0
    %305 = vmatpush1.bf16.msra.mxu0 0
    %306 = vmatprep.subr.bf16.mxu0 0
    %307 = vmatpush1.bf16.msra.mxu0 0
    %308 = vmatprep.subr.bf16.mxu0 0
    %309 = vmatpush1.bf16.msra.mxu0 0
    %310 = vmatprep.subr.bf16.mxu0 0
    %311 = vmatpush1.bf16.msra.mxu0 0
    %312 = vmatprep.subr.bf16.mxu0 0
    %313 = vmatpush1.bf16.msra.mxu0 0
    %314 = vmatprep.subr.bf16.mxu0 0
    %315 = vmatpush1.bf16.msra.mxu0 0
    %316 = vmatprep.subr.bf16.mxu0 0
    %317 = vmatpush1.bf16.msra.mxu0 0
    %318 = vmatprep.mubr.bf16.mxu0 0
    %319 = vmatmul.mubr.bf16.gmra.mrb[0].mxu0 %v284
    %v320 = vpop.f32.mrb[0].mxu0
    %v321 = vadd.f32 %v239, %v320
    %v322 = vpop.f32.mrb[0].mxu0
    %v323 = vadd.f32 %v243, %v322
    %v324 = vpop.f32.mrb[0].mxu0
    %v325 = vadd.f32 %v239, %v324
    %v326 = vpop.f32.mrb[0].mxu0
    %v327 = vadd.f32 %v243, %v326
    %328 = vdwg.mxu0
    %329 = vmatprep.subr.bf16.mxu0 0
    %330 = vmatpush1.bf16.msra.mxu0 %v273
    %331 = vmatprep.subr.bf16.mxu0 0
    %332 = vmatpush1.bf16.msra.mxu0 %v276
    %333 = vmatprep.subr.bf16.mxu0 0
    %334 = vmatpush1.bf16.msra.mxu0 0
    %335 = vmatprep.subr.bf16.mxu0 0
    %336 = vmatpush1.bf16.msra.mxu0 0
    %337 = vmatprep.subr.bf16.mxu0 0
    %338 = vmatpush1.bf16.msra.mxu0 0
    %339 = vmatprep.subr.bf16.mxu0 0
    %340 = vmatpush1.bf16.msra.mxu0 0
    %341 = vmatprep.subr.bf16.mxu0 0
    %342 = vmatpush1.bf16.msra.mxu0 0
    %343 = vmatprep.subr.bf16.mxu0 0
    %344 = vmatpush1.bf16.msra.mxu0 0
    %345 = vmatprep.subr.bf16.mxu0 0
    %346 = vmatpush1.bf16.msra.mxu0 0
    %347 = vmatprep.subr.bf16.mxu0 0
    %348 = vmatpush1.bf16.msra.mxu0 0
    %349 = vmatprep.subr.bf16.mxu0 0
    %350 = vmatpush1.bf16.msra.mxu0 0
    %351 = vmatprep.subr.bf16.mxu0 0
    %352 = vmatpush1.bf16.msra.mxu0 0
    %353 = vmatprep.subr.bf16.mxu0 0
    %354 = vmatpush1.bf16.msra.mxu0 0
    %355 = vmatprep.subr.bf16.mxu0 0
    %356 = vmatpush1.bf16.msra.mxu0 0
    %357 = vmatprep.subr.bf16.mxu0 0
    %358 = vmatpush1.bf16.msra.mxu0 0
    %359 = vmatprep.subr.bf16.mxu0 0
    %360 = vmatpush1.bf16.msra.mxu0 0
    %361 = vmatprep.mubr.bf16.mxu0 0
    %362 = vmatmul.mubr.bf16.gmra.mrb[0].mxu0 %v284
    %v363 = vpop.f32.mrb[0].mxu0
    %v364 = vadd.f32 %v247, %v363
    %v365 = vpop.f32.mrb[0].mxu0
    %v366 = vpop.f32.mrb[0].mxu0
    %v367 = vadd.f32 %v247, %v366
    %v368 = vpop.f32.mrb[0].mxu0
    %369 = vdwg.mxu0
    %370 = vst [vmem:[%s7] sm:$0xff] %v321
    %371 = vst [vmem:[%s7 + $0x8] sm:$0xff] %v323
    %372 = vst [vmem:[%s7 + $0x10] sm:$0xff] %v364
    %373 = vst [vmem:[%s7 + $0x108] sm:$0xff] %v325
    %374 = vst [vmem:[%s7 + $0x110] sm:$0xff] %v327
    %375 = vst [vmem:[%s7 + $0x118] sm:$0xff] %v367
    %v376 = vld [vmem:[%s5 + $0xc] sm:$0xff]
    %v377 = vld [vmem:[%s5 + $0x14] sm:$0xf]
    %v378 = vld [vmem:[%s5 + $0x90] sm:$0xff]
    %v379 = vld [vmem:[%s5 + $0x98] sm:$0xf]
    %v380 = vld [vmem:[%s5 + $0x114] sm:$0xff]
    %v381 = vld [vmem:[%s5 + $0x11c] sm:$0xf]
    %v382 = vld [vmem:[%s5 + $0x198] sm:$0xff]
    %v383 = vld [vmem:[%s5 + $0x1a0] sm:$0xf]
    %v384 = vld [vmem:[#allocation9 + $0x3] sm:$0x7]
    %v386 = vlaneseq
    %v387 = vshrl.u32 %v386, 7
    %v388 = vsub.s32 0, %v387
    %v389 = vrot.slane %v384, %v388
    %v390 = vlaneseq
    %v391 = vshrl.u32 %v390, 7
    %v392 = vsub.s32 1, %v391
    %v393 = vrot.slane %v384, %v392
    %v394 = vlaneseq
    %v395 = vshrl.u32 %v394, 7
    %v396 = vsub.s32 2, %v395
    %v397 = vrot.slane %v384, %v396
    %v409 = vunpack.c.l.b16 %v376
    %v410 = vunpack.c.h.b16 %v376
    %v411 = vunpack.c.l.b16 %v377
    %v412 = vunpack.c.l.b16 %v378
    %v413 = vunpack.c.h.b16 %v378
    %v414 = vunpack.c.l.b16 %v379
    %v415 = vunpack.c.l.b16 %v380
    %v416 = vunpack.c.h.b16 %v380
    %v417 = vunpack.c.l.b16 %v381
    %v418 = vunpack.c.l.b16 %v382
    %v419 = vunpack.c.h.b16 %v382
    %v420 = vunpack.c.l.b16 %v383
    %v421 = vpack.c.b16 %v412, %v409
    %v422 = vpack.c.b16 %v413, %v410
    %v423 = vpack.c.b16 %v414, %v411
    %v424 = vpack.c.b16 %v418, %v415
    %v425 = vpack.c.b16 %v419, %v416
    %v426 = vpack.c.b16 %v420, %v417
    %433 = vmatprep.subr.bf16.mxu0 %v422
    %434 = vmatpush1.bf16.msra.mxu0 %v421
    %435 = vmatprep.subr.bf16.mxu0 %v425
    %436 = vmatpush1.bf16.msra.mxu0 %v424
    %437 = vmatprep.subr.bf16.mxu0 0
    %438 = vmatpush1.bf16.msra.mxu0 0
    %439 = vmatprep.subr.bf16.mxu0 0
    %440 = vmatpush1.bf16.msra.mxu0 0
    %441 = vmatprep.subr.bf16.mxu0 0
    %442 = vmatpush1.bf16.msra.mxu0 0
    %443 = vmatprep.subr.bf16.mxu0 0
    %444 = vmatpush1.bf16.msra.mxu0 0
    %445 = vmatprep.subr.bf16.mxu0 0
    %446 = vmatpush1.bf16.msra.mxu0 0
    %447 = vmatprep.subr.bf16.mxu0 0
    %448 = vmatpush1.bf16.msra.mxu0 0
    %449 = vmatprep.subr.bf16.mxu0 0
    %450 = vmatpush1.bf16.msra.mxu0 0
    %451 = vmatprep.subr.bf16.mxu0 0
    %452 = vmatpush1.bf16.msra.mxu0 0
    %453 = vmatprep.subr.bf16.mxu0 0
    %454 = vmatpush1.bf16.msra.mxu0 0
    %455 = vmatprep.subr.bf16.mxu0 0
    %456 = vmatpush1.bf16.msra.mxu0 0
    %457 = vmatprep.subr.bf16.mxu0 0
    %458 = vmatpush1.bf16.msra.mxu0 0
    %459 = vmatprep.subr.bf16.mxu0 0
    %460 = vmatpush1.bf16.msra.mxu0 0
    %461 = vmatprep.subr.bf16.mxu0 0
    %462 = vmatpush1.bf16.msra.mxu0 0
    %463 = vmatprep.subr.bf16.mxu0 0
    %464 = vmatpush1.bf16.msra.mxu0 0
    %465 = vmatprep.mubr.bf16.mxu0 0
    %466 = vmatmul.mubr.bf16.gmra.mrb[0].mxu0 %v284
    %v467 = vpop.f32.mrb[0].mxu0
    %v468 = vadd.f32 %v389, %v467
    %v469 = vpop.f32.mrb[0].mxu0
    %v470 = vadd.f32 %v393, %v469
    %v471 = vpop.f32.mrb[0].mxu0
    %v472 = vadd.f32 %v389, %v471
    %v473 = vpop.f32.mrb[0].mxu0
    %v474 = vadd.f32 %v393, %v473
    %475 = vdwg.mxu0
    %476 = vmatprep.subr.bf16.mxu0 0
    %477 = vmatpush1.bf16.msra.mxu0 %v423
    %478 = vmatprep.subr.bf16.mxu0 0
    %479 = vmatpush1.bf16.msra.mxu0 %v426
    %480 = vmatprep.subr.bf16.mxu0 0
    %481 = vmatpush1.bf16.msra.mxu0 0
    %482 = vmatprep.subr.bf16.mxu0 0
    %483 = vmatpush1.bf16.msra.mxu0 0
    %484 = vmatprep.subr.bf16.mxu0 0
    %485 = vmatpush1.bf16.msra.mxu0 0
    %486 = vmatprep.subr.bf16.mxu0 0
    %487 = vmatpush1.bf16.msra.mxu0 0
    %488 = vmatprep.subr.bf16.mxu0 0
    %489 = vmatpush1.bf16.msra.mxu0 0
    %490 = vmatprep.subr.bf16.mxu0 0
    %491 = vmatpush1.bf16.msra.mxu0 0
    %492 = vmatprep.subr.bf16.mxu0 0
    %493 = vmatpush1.bf16.msra.mxu0 0
    %494 = vmatprep.subr.bf16.mxu0 0
    %495 = vmatpush1.bf16.msra.mxu0 0
    %496 = vmatprep.subr.bf16.mxu0 0
    %497 = vmatpush1.bf16.msra.mxu0 0
    %498 = vmatprep.subr.bf16.mxu0 0
    %499 = vmatpush1.bf16.msra.mxu0 0
    %500 = vmatprep.subr.bf16.mxu0 0
    %501 = vmatpush1.bf16.msra.mxu0 0
    %502 = vmatprep.subr.bf16.mxu0 0
    %503 = vmatpush1.bf16.msra.mxu0 0
    %504 = vmatprep.subr.bf16.mxu0 0
    %505 = vmatpush1.bf16.msra.mxu0 0
    %506 = vmatprep.subr.bf16.mxu0 0
    %507 = vmatpush1.bf16.msra.mxu0 0
    %508 = vmatprep.mubr.bf16.mxu0 0
    %509 = vmatmul.mubr.bf16.gmra.mrb[0].mxu0 %v284
    %v510 = vpop.f32.mrb[0].mxu0
    %v511 = vadd.f32 %v397, %v510
    %v512 = vpop.f32.mrb[0].mxu0
    %v513 = vpop.f32.mrb[0].mxu0
    %v514 = vadd.f32 %v397, %v513
    %v515 = vpop.f32.mrb[0].mxu0
    %516 = vdwg.mxu0
    %517 = vst [vmem:[%s7 + $0x18] sm:$0xff] %v468
    %518 = vst [vmem:[%s7 + $0x20] sm:$0xff] %v470
    %519 = vst [vmem:[%s7 + $0x28] sm:$0xff] %v511
    %520 = vst [vmem:[%s7 + $0x120] sm:$0xff] %v472
    %521 = vst [vmem:[%s7 + $0x128] sm:$0xff] %v474
    %522 = vst [vmem:[%s7 + $0x130] sm:$0xff] %v514
    %v523 = vmax.f32 %v321, %v468
    %v524 = vmax.f32 %v323, %v470
    %v525 = vmax.f32 %v364, %v511
    %v526 = vmax.f32 %v325, %v472
    %v527 = vmax.f32 %v327, %v474
    %v528 = vmax.f32 %v367, %v514
    %v529 = vld [vmem:[%s5 + $0x18] sm:$0xff]
    %v530 = vld [vmem:[%s5 + $0x20] sm:$0xf]
    %v531 = vld [vmem:[%s5 + $0x9c] sm:$0xff]
    %v532 = vld [vmem:[%s5 + $0xa4] sm:$0xf]
    %v533 = vld [vmem:[%s5 + $0x120] sm:$0xff]
    %v534 = vld [vmem:[%s5 + $0x128] sm:$0xf]
    %v535 = vld [vmem:[%s5 + $0x1a4] sm:$0xff]
    %v536 = vld [vmem:[%s5 + $0x1ac] sm:$0xf]
    %v537 = vld [vmem:[#allocation9 + $0x6] sm:$0x7]
    %v539 = vlaneseq
    %v540 = vshrl.u32 %v539, 7
    %v541 = vsub.s32 0, %v540
    %v542 = vrot.slane %v537, %v541
    %v543 = vlaneseq
    %v544 = vshrl.u32 %v543, 7
    %v545 = vsub.s32 1, %v544
    %v546 = vrot.slane %v537, %v545
    %v547 = vlaneseq
    %v548 = vshrl.u32 %v547, 7
    %v549 = vsub.s32 2, %v548
    %v550 = vrot.slane %v537, %v549
    %v562 = vunpack.c.l.b16 %v529
    %v563 = vunpack.c.h.b16 %v529
    %v564 = vunpack.c.l.b16 %v530
    %v565 = vunpack.c.l.b16 %v531
    %v566 = vunpack.c.h.b16 %v531
    %v567 = vunpack.c.l.b16 %v532
    %v568 = vunpack.c.l.b16 %v533
    %v569 = vunpack.c.h.b16 %v533
    %v570 = vunpack.c.l.b16 %v534
    %v571 = vunpack.c.l.b16 %v535
    %v572 = vunpack.c.h.b16 %v535
    %v573 = vunpack.c.l.b16 %v536
    %v574 = vpack.c.b16 %v565, %v562
    %v575 = vpack.c.b16 %v566, %v563
    %v576 = vpack.c.b16 %v567, %v564
    %v577 = vpack.c.b16 %v571, %v568
    %v578 = vpack.c.b16 %v572, %v569
    %v579 = vpack.c.b16 %v573, %v570
    %586 = vmatprep.subr.bf16.mxu0 %v575
    %587 = vmatpush1.bf16.msra.mxu0 %v574
    %588 = vmatprep.subr.bf16.mxu0 %v578
    %589 = vmatpush1.bf16.msra.mxu0 %v577
    %590 = vmatprep.subr.bf16.mxu0 0
    %591 = vmatpush1.bf16.msra.mxu0 0
    %592 = vmatprep.subr.bf16.mxu0 0
    %593 = vmatpush1.bf16.msra.mxu0 0
    %594 = vmatprep.subr.bf16.mxu0 0
    %595 = vmatpush1.bf16.msra.mxu0 0
    %596 = vmatprep.subr.bf16.mxu0 0
    %597 = vmatpush1.bf16.msra.mxu0 0
    %598 = vmatprep.subr.bf16.mxu0 0
    %599 = vmatpush1.bf16.msra.mxu0 0
    %600 = vmatprep.subr.bf16.mxu0 0
    %601 = vmatpush1.bf16.msra.mxu0 0
    %602 = vmatprep.subr.bf16.mxu0 0
    %603 = vmatpush1.bf16.msra.mxu0 0
    %604 = vmatprep.subr.bf16.mxu0 0
    %605 = vmatpush1.bf16.msra.mxu0 0
    %606 = vmatprep.subr.bf16.mxu0 0
    %607 = vmatpush1.bf16.msra.mxu0 0
    %608 = vmatprep.subr.bf16.mxu0 0
    %609 = vmatpush1.bf16.msra.mxu0 0
    %610 = vmatprep.subr.bf16.mxu0 0
    %611 = vmatpush1.bf16.msra.mxu0 0
    %612 = vmatprep.subr.bf16.mxu0 0
    %613 = vmatpush1.bf16.msra.mxu0 0
    %614 = vmatprep.subr.bf16.mxu0 0
    %615 = vmatpush1.bf16.msra.mxu0 0
    %616 = vmatprep.subr.bf16.mxu0 0
    %617 = vmatpush1.bf16.msra.mxu0 0
    %618 = vmatprep.mubr.bf16.mxu0 0
    %619 = vmatmul.mubr.bf16.gmra.mrb[0].mxu0 %v284
    %v620 = vpop.f32.mrb[0].mxu0
    %v621 = vadd.f32 %v542, %v620
    %v622 = vpop.f32.mrb[0].mxu0
    %v623 = vadd.f32 %v546, %v622
    %v624 = vpop.f32.mrb[0].mxu0
    %v625 = vadd.f32 %v542, %v624
    %v626 = vpop.f32.mrb[0].mxu0
    %v627 = vadd.f32 %v546, %v626
    %628 = vdwg.mxu0
    %629 = vmatprep.subr.bf16.mxu0 0
    %630 = vmatpush1.bf16.msra.mxu0 %v576
    %631 = vmatprep.subr.bf16.mxu0 0
    %632 = vmatpush1.bf16.msra.mxu0 %v579
    %633 = vmatprep.subr.bf16.mxu0 0
    %634 = vmatpush1.bf16.msra.mxu0 0
    %635 = vmatprep.subr.bf16.mxu0 0
    %636 = vmatpush1.bf16.msra.mxu0 0
    %637 = vmatprep.subr.bf16.mxu0 0
    %638 = vmatpush1.bf16.msra.mxu0 0
    %639 = vmatprep.subr.bf16.mxu0 0
    %640 = vmatpush1.bf16.msra.mxu0 0
    %641 = vmatprep.subr.bf16.mxu0 0
    %642 = vmatpush1.bf16.msra.mxu0 0
    %643 = vmatprep.subr.bf16.mxu0 0
    %644 = vmatpush1.bf16.msra.mxu0 0
    %645 = vmatprep.subr.bf16.mxu0 0
    %646 = vmatpush1.bf16.msra.mxu0 0
    %647 = vmatprep.subr.bf16.mxu0 0
    %648 = vmatpush1.bf16.msra.mxu0 0
    %649 = vmatprep.subr.bf16.mxu0 0
    %650 = vmatpush1.bf16.msra.mxu0 0
    %651 = vmatprep.subr.bf16.mxu0 0
    %652 = vmatpush1.bf16.msra.mxu0 0
    %653 = vmatprep.subr.bf16.mxu0 0
    %654 = vmatpush1.bf16.msra.mxu0 0
    %655 = vmatprep.subr.bf16.mxu0 0
    %656 = vmatpush1.bf16.msra.mxu0 0
    %657 = vmatprep.subr.bf16.mxu0 0
    %658 = vmatpush1.bf16.msra.mxu0 0
    %659 = vmatprep.subr.bf16.mxu0 0
    %660 = vmatpush1.bf16.msra.mxu0 0
    %661 = vmatprep.mubr.bf16.mxu0 0
    %662 = vmatmul.mubr.bf16.gmra.mrb[0].mxu0 %v284
    %v663 = vpop.f32.mrb[0].mxu0
    %v664 = vadd.f32 %v550, %v663
    %v665 = vpop.f32.mrb[0].mxu0
    %v666 = vpop.f32.mrb[0].mxu0
    %v667 = vadd.f32 %v550, %v666
    %v668 = vpop.f32.mrb[0].mxu0
    %669 = vdwg.mxu0
    %670 = vst [vmem:[%s7 + $0x30] sm:$0xff] %v621
    %671 = vst [vmem:[%s7 + $0x38] sm:$0xff] %v623
    %672 = vst [vmem:[%s7 + $0x40] sm:$0xff] %v664
    %673 = vst [vmem:[%s7 + $0x138] sm:$0xff] %v625
    %674 = vst [vmem:[%s7 + $0x140] sm:$0xff] %v627
    %675 = vst [vmem:[%s7 + $0x148] sm:$0xff] %v667
    %v676 = vmax.f32 %v523, %v621
    %v677 = vmax.f32 %v524, %v623
    %v678 = vmax.f32 %v525, %v664
    %v679 = vmax.f32 %v526, %v625
    %v680 = vmax.f32 %v527, %v627
    %v681 = vmax.f32 %v528, %v667
    %v682 = vld [vmem:[%s5 + $0x24] sm:$0xff]
    %v683 = vld [vmem:[%s5 + $0x2c] sm:$0xf]
    %v684 = vld [vmem:[%s5 + $0xa8] sm:$0xff]
    %v685 = vld [vmem:[%s5 + $0xb0] sm:$0xf]
    %v686 = vld [vmem:[%s5 + $0x12c] sm:$0xff]
    %v687 = vld [vmem:[%s5 + $0x134] sm:$0xf]
    %v688 = vld [vmem:[%s5 + $0x1b0] sm:$0xff]
    %v689 = vld [vmem:[%s5 + $0x1b8] sm:$0xf]
    %v690 = vld [vmem:[#allocation9 + $0x9] sm:$0x7]
    %v692 = vlaneseq
    %v693 = vshrl.u32 %v692, 7
    %v694 = vsub.s32 0, %v693
    %v695 = vrot.slane %v690, %v694
    %v696 = vlaneseq
    %v697 = vshrl.u32 %v696, 7
    %v698 = vsub.s32 1, %v697
    %v699 = vrot.slane %v690, %v698
    %v700 = vlaneseq
    %v701 = vshrl.u32 %v700, 7
    %v702 = vsub.s32 2, %v701
    %v703 = vrot.slane %v690, %v702
    %v715 = vunpack.c.l.b16 %v682
    %v716 = vunpack.c.h.b16 %v682
    %v717 = vunpack.c.l.b16 %v683
    %v718 = vunpack.c.l.b16 %v684
    %v719 = vunpack.c.h.b16 %v684
    %v720 = vunpack.c.l.b16 %v685
    %v721 = vunpack.c.l.b16 %v686
    %v722 = vunpack.c.h.b16 %v686
    %v723 = vunpack.c.l.b16 %v687
    %v724 = vunpack.c.l.b16 %v688
    %v725 = vunpack.c.h.b16 %v688
    %v726 = vunpack.c.l.b16 %v689
    %v727 = vpack.c.b16 %v718, %v715
    %v728 = vpack.c.b16 %v719, %v716
    %v729 = vpack.c.b16 %v720, %v717
    %v730 = vpack.c.b16 %v724, %v721
    %v731 = vpack.c.b16 %v725, %v722
    %v732 = vpack.c.b16 %v726, %v723
    %739 = vmatprep.subr.bf16.mxu0 %v728
    %740 = vmatpush1.bf16.msra.mxu0 %v727
    %741 = vmatprep.subr.bf16.mxu0 %v731
    %742 = vmatpush1.bf16.msra.mxu0 %v730
    %743 = vmatprep.subr.bf16.mxu0 0
    %744 = vmatpush1.bf16.msra.mxu0 0
    %745 = vmatprep.subr.bf16.mxu0 0
    %746 = vmatpush1.bf16.msra.mxu0 0
    %747 = vmatprep.subr.bf16.mxu0 0
    %748 = vmatpush1.bf16.msra.mxu0 0
    %749 = vmatprep.subr.bf16.mxu0 0
    %750 = vmatpush1.bf16.msra.mxu0 0
    %751 = vmatprep.subr.bf16.mxu0 0
    %752 = vmatpush1.bf16.msra.mxu0 0
    %753 = vmatprep.subr.bf16.mxu0 0
    %754 = vmatpush1.bf16.msra.mxu0 0
    %755 = vmatprep.subr.bf16.mxu0 0
    %756 = vmatpush1.bf16.msra.mxu0 0
    %757 = vmatprep.subr.bf16.mxu0 0
    %758 = vmatpush1.bf16.msra.mxu0 0
    %759 = vmatprep.subr.bf16.mxu0 0
    %760 = vmatpush1.bf16.msra.mxu0 0
    %761 = vmatprep.subr.bf16.mxu0 0
    %762 = vmatpush1.bf16.msra.mxu0 0
    %763 = vmatprep.subr.bf16.mxu0 0
    %764 = vmatpush1.bf16.msra.mxu0 0
    %765 = vmatprep.subr.bf16.mxu0 0
    %766 = vmatpush1.bf16.msra.mxu0 0
    %767 = vmatprep.subr.bf16.mxu0 0
    %768 = vmatpush1.bf16.msra.mxu0 0
    %769 = vmatprep.subr.bf16.mxu0 0
    %770 = vmatpush1.bf16.msra.mxu0 0
    %771 = vmatprep.mubr.bf16.mxu0 0
    %772 = vmatmul.mubr.bf16.gmra.mrb[0].mxu0 %v284
    %v773 = vpop.f32.mrb[0].mxu0
    %v774 = vadd.f32 %v695, %v773
    %v775 = vpop.f32.mrb[0].mxu0
    %v776 = vadd.f32 %v699, %v775
    %v777 = vpop.f32.mrb[0].mxu0
    %v778 = vadd.f32 %v695, %v777
    %v779 = vpop.f32.mrb[0].mxu0
    %v780 = vadd.f32 %v699, %v779
    %781 = vdwg.mxu0
    %782 = vmatprep.subr.bf16.mxu0 0
    %783 = vmatpush1.bf16.msra.mxu0 %v729
    %784 = vmatprep.subr.bf16.mxu0 0
    %785 = vmatpush1.bf16.msra.mxu0 %v732
    %786 = vmatprep.subr.bf16.mxu0 0
    %787 = vmatpush1.bf16.msra.mxu0 0
    %788 = vmatprep.subr.bf16.mxu0 0
    %789 = vmatpush1.bf16.msra.mxu0 0
    %790 = vmatprep.subr.bf16.mxu0 0
    %791 = vmatpush1.bf16.msra.mxu0 0
    %792 = vmatprep.subr.bf16.mxu0 0
    %793 = vmatpush1.bf16.msra.mxu0 0
    %794 = vmatprep.subr.bf16.mxu0 0
    %795 = vmatpush1.bf16.msra.mxu0 0
    %796 = vmatprep.subr.bf16.mxu0 0
    %797 = vmatpush1.bf16.msra.mxu0 0
    %798 = vmatprep.subr.bf16.mxu0 0
    %799 = vmatpush1.bf16.msra.mxu0 0
    %800 = vmatprep.subr.bf16.mxu0 0
    %801 = vmatpush1.bf16.msra.mxu0 0
    %802 = vmatprep.subr.bf16.mxu0 0
    %803 = vmatpush1.bf16.msra.mxu0 0
    %804 = vmatprep.subr.bf16.mxu0 0
    %805 = vmatpush1.bf16.msra.mxu0 0
    %806 = vmatprep.subr.bf16.mxu0 0
    %807 = vmatpush1.bf16.msra.mxu0 0
    %808 = vmatprep.subr.bf16.mxu0 0
    %809 = vmatpush1.bf16.msra.mxu0 0
    %810 = vmatprep.subr.bf16.mxu0 0
    %811 = vmatpush1.bf16.msra.mxu0 0
    %812 = vmatprep.subr.bf16.mxu0 0
    %813 = vmatpush1.bf16.msra.mxu0 0
    %814 = vmatprep.mubr.bf16.mxu0 0
    %815 = vmatmul.mubr.bf16.gmra.mrb[0].mxu0 %v284
    %v816 = vpop.f32.mrb[0].mxu0
    %v817 = vadd.f32 %v703, %v816
    %v818 = vpop.f32.mrb[0].mxu0
    %v819 = vpop.f32.mrb[0].mxu0
    %v820 = vadd.f32 %v703, %v819
    %v821 = vpop.f32.mrb[0].mxu0
    %822 = vdwg.mxu0
    %823 = vst [vmem:[%s7 + $0x48] sm:$0xff] %v774
    %824 = vst [vmem:[%s7 + $0x50] sm:$0xff] %v776
    %825 = vst [vmem:[%s7 + $0x58] sm:$0xff] %v817
    %826 = vst [vmem:[%s7 + $0x150] sm:$0xff] %v778
    %827 = vst [vmem:[%s7 + $0x158] sm:$0xff] %v780
    %828 = vst [vmem:[%s7 + $0x160] sm:$0xff] %v820
    %v829 = vmax.f32 %v676, %v774
    %v830 = vmax.f32 %v677, %v776
    %v831 = vmax.f32 %v678, %v817
    %v832 = vmax.f32 %v679, %v778
    %v833 = vmax.f32 %v680, %v780
    %v834 = vmax.f32 %v681, %v820
    %v835 = vld [vmem:[%s5 + $0x30] sm:$0xff]
    %v836 = vld [vmem:[%s5 + $0x38] sm:$0xf]
    %v837 = vld [vmem:[%s5 + $0xb4] sm:$0xff]
    %v838 = vld [vmem:[%s5 + $0xbc] sm:$0xf]
    %v839 = vld [vmem:[%s5 + $0x138] sm:$0xff]
    %v840 = vld [vmem:[%s5 + $0x140] sm:$0xf]
    %v841 = vld [vmem:[%s5 + $0x1bc] sm:$0xff]
    %v842 = vld [vmem:[%s5 + $0x1c4] sm:$0xf]
    %v843 = vld [vmem:[#allocation9 + $0xc] sm:$0x7]
    %v845 = vlaneseq
    %v846 = vshrl.u32 %v845, 7
    %v847 = vsub.s32 0, %v846
    %v848 = vrot.slane %v843, %v847
    %v849 = vlaneseq
    %v850 = vshrl.u32 %v849, 7
    %v851 = vsub.s32 1, %v850
    %v852 = vrot.slane %v843, %v851
    %v853 = vlaneseq
    %v854 = vshrl.u32 %v853, 7
    %v855 = vsub.s32 2, %v854
    %v856 = vrot.slane %v843, %v855
    %v868 = vunpack.c.l.b16 %v835
    %v869 = vunpack.c.h.b16 %v835
    %v870 = vunpack.c.l.b16 %v836
    %v871 = vunpack.c.l.b16 %v837
    %v872 = vunpack.c.h.b16 %v837
    %v873 = vunpack.c.l.b16 %v838
    %v874 = vunpack.c.l.b16 %v839
    %v875 = vunpack.c.h.b16 %v839
    %v876 = vunpack.c.l.b16 %v840
    %v877 = vunpack.c.l.b16 %v841
    %v878 = vunpack.c.h.b16 %v841
    %v879 = vunpack.c.l.b16 %v842
    %v880 = vpack.c.b16 %v871, %v868
    %v881 = vpack.c.b16 %v872, %v869
    %v882 = vpack.c.b16 %v873, %v870
    %v883 = vpack.c.b16 %v877, %v874
    %v884 = vpack.c.b16 %v878, %v875
    %v885 = vpack.c.b16 %v879, %v876
    %892 = vmatprep.subr.bf16.mxu0 %v881
    %893 = vmatpush1.bf16.msra.mxu0 %v880
    %894 = vmatprep.subr.bf16.mxu0 %v884
    %895 = vmatpush1.bf16.msra.mxu0 %v883
    %896 = vmatprep.subr.bf16.mxu0 0
    %897 = vmatpush1.bf16.msra.mxu0 0
    %898 = vmatprep.subr.bf16.mxu0 0
    %899 = vmatpush1.bf16.msra.mxu0 0
    %900 = vmatprep.subr.bf16.mxu0 0
    %901 = vmatpush1.bf16.msra.mxu0 0
    %902 = vmatprep.subr.bf16.mxu0 0
    %903 = vmatpush1.bf16.msra.mxu0 0
    %904 = vmatprep.subr.bf16.mxu0 0
    %905 = vmatpush1.bf16.msra.mxu0 0
    %906 = vmatprep.subr.bf16.mxu0 0
    %907 = vmatpush1.bf16.msra.mxu0 0
    %908 = vmatprep.subr.bf16.mxu0 0
    %909 = vmatpush1.bf16.msra.mxu0 0
    %910 = vmatprep.subr.bf16.mxu0 0
    %911 = vmatpush1.bf16.msra.mxu0 0
    %912 = vmatprep.subr.bf16.mxu0 0
    %913 = vmatpush1.bf16.msra.mxu0 0
    %914 = vmatprep.subr.bf16.mxu0 0
    %915 = vmatpush1.bf16.msra.mxu0 0
    %916 = vmatprep.subr.bf16.mxu0 0
    %917 = vmatpush1.bf16.msra.mxu0 0
    %918 = vmatprep.subr.bf16.mxu0 0
    %919 = vmatpush1.bf16.msra.mxu0 0
    %920 = vmatprep.subr.bf16.mxu0 0
    %921 = vmatpush1.bf16.msra.mxu0 0
    %922 = vmatprep.subr.bf16.mxu0 0
    %923 = vmatpush1.bf16.msra.mxu0 0
    %924 = vmatprep.mubr.bf16.mxu0 0
    %925 = vmatmul.mubr.bf16.gmra.mrb[0].mxu0 %v284
    %v926 = vpop.f32.mrb[0].mxu0
    %v927 = vadd.f32 %v848, %v926
    %v928 = vpop.f32.mrb[0].mxu0
    %v929 = vadd.f32 %v852, %v928
    %v930 = vpop.f32.mrb[0].mxu0
    %v931 = vadd.f32 %v848, %v930
    %v932 = vpop.f32.mrb[0].mxu0
    %v933 = vadd.f32 %v852, %v932
    %934 = vdwg.mxu0
    %935 = vmatprep.subr.bf16.mxu0 0
    %936 = vmatpush1.bf16.msra.mxu0 %v882
    %937 = vmatprep.subr.bf16.mxu0 0
    %938 = vmatpush1.bf16.msra.mxu0 %v885
    %939 = vmatprep.subr.bf16.mxu0 0
    %940 = vmatpush1.bf16.msra.mxu0 0
    %941 = vmatprep.subr.bf16.mxu0 0
    %942 = vmatpush1.bf16.msra.mxu0 0
    %943 = vmatprep.subr.bf16.mxu0 0
    %944 = vmatpush1.bf16.msra.mxu0 0
    %945 = vmatprep.subr.bf16.mxu0 0
    %946 = vmatpush1.bf16.msra.mxu0 0
    %947 = vmatprep.subr.bf16.mxu0 0
    %948 = vmatpush1.bf16.msra.mxu0 0
    %949 = vmatprep.subr.bf16.mxu0 0
    %950 = vmatpush1.bf16.msra.mxu0 0
    %951 = vmatprep.subr.bf16.mxu0 0
    %952 = vmatpush1.bf16.msra.mxu0 0
    %953 = vmatprep.subr.bf16.mxu0 0
    %954 = vmatpush1.bf16.msra.mxu0 0
    %955 = vmatprep.subr.bf16.mxu0 0
    %956 = vmatpush1.bf16.msra.mxu0 0
    %957 = vmatprep.subr.bf16.mxu0 0
    %958 = vmatpush1.bf16.msra.mxu0 0
    %959 = vmatprep.subr.bf16.mxu0 0
    %960 = vmatpush1.bf16.msra.mxu0 0
    %961 = vmatprep.subr.bf16.mxu0 0
    %962 = vmatpush1.bf16.msra.mxu0 0
    %963 = vmatprep.subr.bf16.mxu0 0
    %964 = vmatpush1.bf16.msra.mxu0 0
    %965 = vmatprep.subr.bf16.mxu0 0
    %966 = vmatpush1.bf16.msra.mxu0 0
    %967 = vmatprep.mubr.bf16.mxu0 0
    %968 = vmatmul.mubr.bf16.gmra.mrb[0].mxu0 %v284
    %v969 = vpop.f32.mrb[0].mxu0
    %v970 = vadd.f32 %v856, %v969
    %v971 = vpop.f32.mrb[0].mxu0
    %v972 = vpop.f32.mrb[0].mxu0
    %v973 = vadd.f32 %v856, %v972
    %v974 = vpop.f32.mrb[0].mxu0
    %975 = vdwg.mxu0
    %976 = vst [vmem:[%s7 + $0x60] sm:$0xff] %v927
    %977 = vst [vmem:[%s7 + $0x68] sm:$0xff] %v929
    %978 = vst [vmem:[%s7 + $0x70] sm:$0xff] %v970
    %979 = vst [vmem:[%s7 + $0x168] sm:$0xff] %v931
    %980 = vst [vmem:[%s7 + $0x170] sm:$0xff] %v933
    %981 = vst [vmem:[%s7 + $0x178] sm:$0xff] %v973
    %v982 = vmax.f32 %v829, %v927
    %v983 = vmax.f32 %v830, %v929
    %v984 = vmax.f32 %v831, %v970
    %v985 = vmax.f32 %v832, %v931
    %v986 = vmax.f32 %v833, %v933
    %v987 = vmax.f32 %v834, %v973
    %v988 = vld [vmem:[%s5 + $0x3c] sm:$0xff]
    %v989 = vld [vmem:[%s5 + $0x44] sm:$0xf]
    %v990 = vld [vmem:[%s5 + $0xc0] sm:$0xff]
    %v991 = vld [vmem:[%s5 + $0xc8] sm:$0xf]
    %v992 = vld [vmem:[%s5 + $0x144] sm:$0xff]
    %v993 = vld [vmem:[%s5 + $0x14c] sm:$0xf]
    %v994 = vld [vmem:[%s5 + $0x1c8] sm:$0xff]
    %v995 = vld [vmem:[%s5 + $0x1d0] sm:$0xf]
    %v996 = vld [vmem:[#allocation9 + $0xf] sm:$0x7]
    %v998 = vlaneseq
    %v999 = vshrl.u32 %v998, 7
    %v1000 = vsub.s32 0, %v999
    %v1001 = vrot.slane %v996, %v1000
    %v1002 = vlaneseq
    %v1003 = vshrl.u32 %v1002, 7
    %v1004 = vsub.s32 1, %v1003
    %v1005 = vrot.slane %v996, %v1004
    %v1006 = vlaneseq
    %v1007 = vshrl.u32 %v1006, 7
    %v1008 = vsub.s32 2, %v1007
    %v1009 = vrot.slane %v996, %v1008
    %v1021 = vunpack.c.l.b16 %v988
    %v1022 = vunpack.c.h.b16 %v988
    %v1023 = vunpack.c.l.b16 %v989
    %v1024 = vunpack.c.l.b16 %v990
    %v1025 = vunpack.c.h.b16 %v990
    %v1026 = vunpack.c.l.b16 %v991
    %v1027 = vunpack.c.l.b16 %v992
    %v1028 = vunpack.c.h.b16 %v992
    %v1029 = vunpack.c.l.b16 %v993
    %v1030 = vunpack.c.l.b16 %v994
    %v1031 = vunpack.c.h.b16 %v994
    %v1032 = vunpack.c.l.b16 %v995
    %v1033 = vpack.c.b16 %v1024, %v1021
    %v1034 = vpack.c.b16 %v1025, %v1022
    %v1035 = vpack.c.b16 %v1026, %v1023
    %v1036 = vpack.c.b16 %v1030, %v1027
    %v1037 = vpack.c.b16 %v1031, %v1028
    %v1038 = vpack.c.b16 %v1032, %v1029
    %1045 = vmatprep.subr.bf16.mxu0 %v1034
    %1046 = vmatpush1.bf16.msra.mxu0 %v1033
    %1047 = vmatprep.subr.bf16.mxu0 %v1037
    %1048 = vmatpush1.bf16.msra.mxu0 %v1036
    %1049 = vmatprep.subr.bf16.mxu0 0
    %1050 = vmatpush1.bf16.msra.mxu0 0
    %1051 = vmatprep.subr.bf16.mxu0 0
    %1052 = vmatpush1.bf16.msra.mxu0 0
    %1053 = vmatprep.subr.bf16.mxu0 0
    %1054 = vmatpush1.bf16.msra.mxu0 0
    %1055 = vmatprep.subr.bf16.mxu0 0
    %1056 = vmatpush1.bf16.msra.mxu0 0
    %1057 = vmatprep.subr.bf16.mxu0 0
    %1058 = vmatpush1.bf16.msra.mxu0 0
    %1059 = vmatprep.subr.bf16.mxu0 0
    %1060 = vmatpush1.bf16.msra.mxu0 0
    %1061 = vmatprep.subr.bf16.mxu0 0
    %1062 = vmatpush1.bf16.msra.mxu0 0
    %1063 = vmatprep.subr.bf16.mxu0 0
    %1064 = vmatpush1.bf16.msra.mxu0 0
    %1065 = vmatprep.subr.bf16.mxu0 0
    %1066 = vmatpush1.bf16.msra.mxu0 0
    %1067 = vmatprep.subr.bf16.mxu0 0
    %1068 = vmatpush1.bf16.msra.mxu0 0
    %1069 = vmatprep.subr.bf16.mxu0 0
    %1070 = vmatpush1.bf16.msra.mxu0 0
    %1071 = vmatprep.subr.bf16.mxu0 0
    %1072 = vmatpush1.bf16.msra.mxu0 0
    %1073 = vmatprep.subr.bf16.mxu0 0
    %1074 = vmatpush1.bf16.msra.mxu0 0
    %1075 = vmatprep.subr.bf16.mxu0 0
    %1076 = vmatpush1.bf16.msra.mxu0 0
    %1077 = vmatprep.mubr.bf16.mxu0 0
    %1078 = vmatmul.mubr.bf16.gmra.mrb[0].mxu0 %v284
    %v1079 = vpop.f32.mrb[0].mxu0
    %v1080 = vadd.f32 %v1001, %v1079
    %v1081 = vpop.f32.mrb[0].mxu0
    %v1082 = vadd.f32 %v1005, %v1081
    %v1083 = vpop.f32.mrb[0].mxu0
    %v1084 = vadd.f32 %v1001, %v1083
    %v1085 = vpop.f32.mrb[0].mxu0
    %v1086 = vadd.f32 %v1005, %v1085
    %1087 = vdwg.mxu0
    %1088 = vmatprep.subr.bf16.mxu0 0
    %1089 = vmatpush1.bf16.msra.mxu0 %v1035
    %1090 = vmatprep.subr.bf16.mxu0 0
    %1091 = vmatpush1.bf16.msra.mxu0 %v1038
    %1092 = vmatprep.subr.bf16.mxu0 0
    %1093 = vmatpush1.bf16.msra.mxu0 0
    %1094 = vmatprep.subr.bf16.mxu0 0
    %1095 = vmatpush1.bf16.msra.mxu0 0
    %1096 = vmatprep.subr.bf16.mxu0 0
    %1097 = vmatpush1.bf16.msra.mxu0 0
    %1098 = vmatprep.subr.bf16.mxu0 0
    %1099 = vmatpush1.bf16.msra.mxu0 0
    %1100 = vmatprep.subr.bf16.mxu0 0
    %1101 = vmatpush1.bf16.msra.mxu0 0
    %1102 = vmatprep.subr.bf16.mxu0 0
    %1103 = vmatpush1.bf16.msra.mxu0 0
    %1104 = vmatprep.subr.bf16.mxu0 0
    %1105 = vmatpush1.bf16.msra.mxu0 0
    %1106 = vmatprep.subr.bf16.mxu0 0
    %1107 = vmatpush1.bf16.msra.mxu0 0
    %1108 = vmatprep.subr.bf16.mxu0 0
    %1109 = vmatpush1.bf16.msra.mxu0 0
    %1110 = vmatprep.subr.bf16.mxu0 0
    %1111 = vmatpush1.bf16.msra.mxu0 0
    %1112 = vmatprep.subr.bf16.mxu0 0
    %1113 = vmatpush1.bf16.msra.mxu0 0
    %1114 = vmatprep.subr.bf16.mxu0 0
    %1115 = vmatpush1.bf16.msra.mxu0 0
    %1116 = vmatprep.subr.bf16.mxu0 0
    %1117 = vmatpush1.bf16.msra.mxu0 0
    %1118 = vmatprep.subr.bf16.mxu0 0
    %1119 = vmatpush1.bf16.msra.mxu0 0
    %1120 = vmatprep.mubr.bf16.mxu0 0
    %1121 = vmatmul.mubr.bf16.gmra.mrb[0].mxu0 %v284
    %v1122 = vpop.f32.mrb[0].mxu0
    %v1123 = vadd.f32 %v1009, %v1122
    %v1124 = vpop.f32.mrb[0].mxu0
    %v1125 = vpop.f32.mrb[0].mxu0
    %v1126 = vadd.f32 %v1009, %v1125
    %v1127 = vpop.f32.mrb[0].mxu0
    %1128 = vdwg.mxu0
    %1129 = vst [vmem:[%s7 + $0x78] sm:$0xff] %v1080
    %1130 = vst [vmem:[%s7 + $0x80] sm:$0xff] %v1082
    %1131 = vst [vmem:[%s7 + $0x88] sm:$0xff] %v1123
    %1132 = vst [vmem:[%s7 + $0x180] sm:$0xff] %v1084
    %1133 = vst [vmem:[%s7 + $0x188] sm:$0xff] %v1086
    %1134 = vst [vmem:[%s7 + $0x190] sm:$0xff] %v1126
    %v1135 = vmax.f32 %v982, %v1080
    %v1136 = vmax.f32 %v983, %v1082
    %v1137 = vmax.f32 %v984, %v1123
    %v1138 = vmax.f32 %v985, %v1084
    %v1139 = vmax.f32 %v986, %v1086
    %v1140 = vmax.f32 %v987, %v1126
    %v1141 = vld [vmem:[%s5 + $0x48] sm:$0xff]
    %v1142 = vld [vmem:[%s5 + $0x50] sm:$0xf]
    %v1143 = vld [vmem:[%s5 + $0xcc] sm:$0xff]
    %v1144 = vld [vmem:[%s5 + $0xd4] sm:$0xf]
    %v1145 = vld [vmem:[%s5 + $0x150] sm:$0xff]
    %v1146 = vld [vmem:[%s5 + $0x158] sm:$0xf]
    %v1147 = vld [vmem:[%s5 + $0x1d4] sm:$0xff]
    %v1148 = vld [vmem:[%s5 + $0x1dc] sm:$0xf]
    %v1149 = vld [vmem:[#allocation9 + $0x12] sm:$0x7]
    %v1151 = vlaneseq
    %v1152 = vshrl.u32 %v1151, 7
    %v1153 = vsub.s32 0, %v1152
    %v1154 = vrot.slane %v1149, %v1153
    %v1155 = vlaneseq
    %v1156 = vshrl.u32 %v1155, 7
    %v1157 = vsub.s32 1, %v1156
    %v1158 = vrot.slane %v1149, %v1157
    %v1159 = vlaneseq
    %v1160 = vshrl.u32 %v1159, 7
    %v1161 = vsub.s32 2, %v1160
    %v1162 = vrot.slane %v1149, %v1161
    %v1174 = vunpack.c.l.b16 %v1141
    %v1175 = vunpack.c.h.b16 %v1141
    %v1176 = vunpack.c.l.b16 %v1142
    %v1177 = vunpack.c.l.b16 %v1143
    %v1178 = vunpack.c.h.b16 %v1143
    %v1179 = vunpack.c.l.b16 %v1144
    %v1180 = vunpack.c.l.b16 %v1145
    %v1181 = vunpack.c.h.b16 %v1145
    %v1182 = vunpack.c.l.b16 %v1146
    %v1183 = vunpack.c.l.b16 %v1147
    %v1184 = vunpack.c.h.b16 %v1147
    %v1185 = vunpack.c.l.b16 %v1148
    %v1186 = vpack.c.b16 %v1177, %v1174
    %v1187 = vpack.c.b16 %v1178, %v1175
    %v1188 = vpack.c.b16 %v1179, %v1176
    %v1189 = vpack.c.b16 %v1183, %v1180
    %v1190 = vpack.c.b16 %v1184, %v1181
    %v1191 = vpack.c.b16 %v1185, %v1182
    %1198 = vmatprep.subr.bf16.mxu0 %v1187
    %1199 = vmatpush1.bf16.msra.mxu0 %v1186
    %1200 = vmatprep.subr.bf16.mxu0 %v1190
    %1201 = vmatpush1.bf16.msra.mxu0 %v1189
    %1202 = vmatprep.subr.bf16.mxu0 0
    %1203 = vmatpush1.bf16.msra.mxu0 0
    %1204 = vmatprep.subr.bf16.mxu0 0
    %1205 = vmatpush1.bf16.msra.mxu0 0
    %1206 = vmatprep.subr.bf16.mxu0 0
    %1207 = vmatpush1.bf16.msra.mxu0 0
    %1208 = vmatprep.subr.bf16.mxu0 0
    %1209 = vmatpush1.bf16.msra.mxu0 0
    %1210 = vmatprep.subr.bf16.mxu0 0
    %1211 = vmatpush1.bf16.msra.mxu0 0
    %1212 = vmatprep.subr.bf16.mxu0 0
    %1213 = vmatpush1.bf16.msra.mxu0 0
    %1214 = vmatprep.subr.bf16.mxu0 0
    %1215 = vmatpush1.bf16.msra.mxu0 0
    %1216 = vmatprep.subr.bf16.mxu0 0
    %1217 = vmatpush1.bf16.msra.mxu0 0
    %1218 = vmatprep.subr.bf16.mxu0 0
    %1219 = vmatpush1.bf16.msra.mxu0 0
    %1220 = vmatprep.subr.bf16.mxu0 0
    %1221 = vmatpush1.bf16.msra.mxu0 0
    %1222 = vmatprep.subr.bf16.mxu0 0
    %1223 = vmatpush1.bf16.msra.mxu0 0
    %1224 = vmatprep.subr.bf16.mxu0 0
    %1225 = vmatpush1.bf16.msra.mxu0 0
    %1226 = vmatprep.subr.bf16.mxu0 0
    %1227 = vmatpush1.bf16.msra.mxu0 0
    %1228 = vmatprep.subr.bf16.mxu0 0
    %1229 = vmatpush1.bf16.msra.mxu0 0
    %1230 = vmatprep.mubr.bf16.mxu0 0
    %1231 = vmatmul.mubr.bf16.gmra.mrb[0].mxu0 %v284
    %v1232 = vpop.f32.mrb[0].mxu0
    %v1233 = vadd.f32 %v1154, %v1232
    %v1234 = vpop.f32.mrb[0].mxu0
    %v1235 = vadd.f32 %v1158, %v1234
    %v1236 = vpop.f32.mrb[0].mxu0
    %v1237 = vadd.f32 %v1154, %v1236
    %v1238 = vpop.f32.mrb[0].mxu0
    %v1239 = vadd.f32 %v1158, %v1238
    %1240 = vdwg.mxu0
    %1241 = vmatprep.subr.bf16.mxu0 0
    %1242 = vmatpush1.bf16.msra.mxu0 %v1188
    %1243 = vmatprep.subr.bf16.mxu0 0
    %1244 = vmatpush1.bf16.msra.mxu0 %v1191
    %1245 = vmatprep.subr.bf16.mxu0 0
    %1246 = vmatpush1.bf16.msra.mxu0 0
    %1247 = vmatprep.subr.bf16.mxu0 0
    %1248 = vmatpush1.bf16.msra.mxu0 0
    %1249 = vmatprep.subr.bf16.mxu0 0
    %1250 = vmatpush1.bf16.msra.mxu0 0
    %1251 = vmatprep.subr.bf16.mxu0 0
    %1252 = vmatpush1.bf16.msra.mxu0 0
    %1253 = vmatprep.subr.bf16.mxu0 0
    %1254 = vmatpush1.bf16.msra.mxu0 0
    %1255 = vmatprep.subr.bf16.mxu0 0
    %1256 = vmatpush1.bf16.msra.mxu0 0
    %1257 = vmatprep.subr.bf16.mxu0 0
    %1258 = vmatpush1.bf16.msra.mxu0 0
    %1259 = vmatprep.subr.bf16.mxu0 0
    %1260 = vmatpush1.bf16.msra.mxu0 0
    %1261 = vmatprep.subr.bf16.mxu0 0
    %1262 = vmatpush1.bf16.msra.mxu0 0
    %1263 = vmatprep.subr.bf16.mxu0 0
    %1264 = vmatpush1.bf16.msra.mxu0 0
    %1265 = vmatprep.subr.bf16.mxu0 0
    %1266 = vmatpush1.bf16.msra.mxu0 0
    %1267 = vmatprep.subr.bf16.mxu0 0
    %1268 = vmatpush1.bf16.msra.mxu0 0
    %1269 = vmatprep.subr.bf16.mxu0 0
    %1270 = vmatpush1.bf16.msra.mxu0 0
    %1271 = vmatprep.subr.bf16.mxu0 0
    %1272 = vmatpush1.bf16.msra.mxu0 0
    %1273 = vmatprep.mubr.bf16.mxu0 0
    %1274 = vmatmul.mubr.bf16.gmra.mrb[0].mxu0 %v284
    %v1275 = vpop.f32.mrb[0].mxu0
    %v1276 = vadd.f32 %v1162, %v1275
    %v1277 = vpop.f32.mrb[0].mxu0
    %v1278 = vpop.f32.mrb[0].mxu0
    %v1279 = vadd.f32 %v1162, %v1278
    %v1280 = vpop.f32.mrb[0].mxu0
    %1281 = vdwg.mxu0
    %1282 = vst [vmem:[%s7 + $0x90] sm:$0xff] %v1233
    %1283 = vst [vmem:[%s7 + $0x98] sm:$0xff] %v1235
    %1284 = vst [vmem:[%s7 + $0xa0] sm:$0xff] %v1276
    %1285 = vst [vmem:[%s7 + $0x198] sm:$0xff] %v1237
    %1286 = vst [vmem:[%s7 + $0x1a0] sm:$0xff] %v1239
    %1287 = vst [vmem:[%s7 + $0x1a8] sm:$0xff] %v1279
    %v1288 = vmax.f32 %v1135, %v1233
    %v1289 = vmax.f32 %v1136, %v1235
    %v1290 = vmax.f32 %v1137, %v1276
    %v1291 = vmax.f32 %v1138, %v1237
    %v1292 = vmax.f32 %v1139, %v1239
    %v1293 = vmax.f32 %v1140, %v1279
    %v1294 = vld [vmem:[%s5 + $0x54] sm:$0xff]
    %v1295 = vld [vmem:[%s5 + $0x5c] sm:$0xf]
    %v1296 = vld [vmem:[%s5 + $0xd8] sm:$0xff]
    %v1297 = vld [vmem:[%s5 + $0xe0] sm:$0xf]
    %v1298 = vld [vmem:[%s5 + $0x15c] sm:$0xff]
    %v1299 = vld [vmem:[%s5 + $0x164] sm:$0xf]
    %v1300 = vld [vmem:[%s5 + $0x1e0] sm:$0xff]
    %v1301 = vld [vmem:[%s5 + $0x1e8] sm:$0xf]
    %v1302 = vld [vmem:[#allocation9 + $0x15] sm:$0x7]
    %v1304 = vlaneseq
    %v1305 = vshrl.u32 %v1304, 7
    %v1306 = vsub.s32 0, %v1305
    %v1307 = vrot.slane %v1302, %v1306
    %v1308 = vlaneseq
    %v1309 = vshrl.u32 %v1308, 7
    %v1310 = vsub.s32 1, %v1309
    %v1311 = vrot.slane %v1302, %v1310
    %v1312 = vlaneseq
    %v1313 = vshrl.u32 %v1312, 7
    %v1314 = vsub.s32 2, %v1313
    %v1315 = vrot.slane %v1302, %v1314
    %v1327 = vunpack.c.l.b16 %v1294
    %v1328 = vunpack.c.h.b16 %v1294
    %v1329 = vunpack.c.l.b16 %v1295
    %v1330 = vunpack.c.l.b16 %v1296
    %v1331 = vunpack.c.h.b16 %v1296
    %v1332 = vunpack.c.l.b16 %v1297
    %v1333 = vunpack.c.l.b16 %v1298
    %v1334 = vunpack.c.h.b16 %v1298
    %v1335 = vunpack.c.l.b16 %v1299
    %v1336 = vunpack.c.l.b16 %v1300
    %v1337 = vunpack.c.h.b16 %v1300
    %v1338 = vunpack.c.l.b16 %v1301
    %v1339 = vpack.c.b16 %v1330, %v1327
    %v1340 = vpack.c.b16 %v1331, %v1328
    %v1341 = vpack.c.b16 %v1332, %v1329
    %v1342 = vpack.c.b16 %v1336, %v1333
    %v1343 = vpack.c.b16 %v1337, %v1334
    %v1344 = vpack.c.b16 %v1338, %v1335
    %1351 = vmatprep.subr.bf16.mxu0 %v1340
    %1352 = vmatpush1.bf16.msra.mxu0 %v1339
    %1353 = vmatprep.subr.bf16.mxu0 %v1343
    %1354 = vmatpush1.bf16.msra.mxu0 %v1342
    %1355 = vmatprep.subr.bf16.mxu0 0
    %1356 = vmatpush1.bf16.msra.mxu0 0
    %1357 = vmatprep.subr.bf16.mxu0 0
    %1358 = vmatpush1.bf16.msra.mxu0 0
    %1359 = vmatprep.subr.bf16.mxu0 0
    %1360 = vmatpush1.bf16.msra.mxu0 0
    %1361 = vmatprep.subr.bf16.mxu0 0
    %1362 = vmatpush1.bf16.msra.mxu0 0
    %1363 = vmatprep.subr.bf16.mxu0 0
    %1364 = vmatpush1.bf16.msra.mxu0 0
    %1365 = vmatprep.subr.bf16.mxu0 0
    %1366 = vmatpush1.bf16.msra.mxu0 0
    %1367 = vmatprep.subr.bf16.mxu0 0
    %1368 = vmatpush1.bf16.msra.mxu0 0
    %1369 = vmatprep.subr.bf16.mxu0 0
    %1370 = vmatpush1.bf16.msra.mxu0 0
    %1371 = vmatprep.subr.bf16.mxu0 0
    %1372 = vmatpush1.bf16.msra.mxu0 0
    %1373 = vmatprep.subr.bf16.mxu0 0
    %1374 = vmatpush1.bf16.msra.mxu0 0
    %1375 = vmatprep.subr.bf16.mxu0 0
    %1376 = vmatpush1.bf16.msra.mxu0 0
    %1377 = vmatprep.subr.bf16.mxu0 0
    %1378 = vmatpush1.bf16.msra.mxu0 0
    %1379 = vmatprep.subr.bf16.mxu0 0
    %1380 = vmatpush1.bf16.msra.mxu0 0
    %1381 = vmatprep.subr.bf16.mxu0 0
    %1382 = vmatpush1.bf16.msra.mxu0 0
    %1383 = vmatprep.mubr.bf16.mxu0 0
    %1384 = vmatmul.mubr.bf16.gmra.mrb[0].mxu0 %v284
    %v1385 = vpop.f32.mrb[0].mxu0
    %v1386 = vadd.f32 %v1307, %v1385
    %v1387 = vpop.f32.mrb[0].mxu0
    %v1388 = vadd.f32 %v1311, %v1387
    %v1389 = vpop.f32.mrb[0].mxu0
    %v1390 = vadd.f32 %v1307, %v1389
    %v1391 = vpop.f32.mrb[0].mxu0
    %v1392 = vadd.f32 %v1311, %v1391
    %1393 = vdwg.mxu0
    %1394 = vmatprep.subr.bf16.mxu0 0
    %1395 = vmatpush1.bf16.msra.mxu0 %v1341
    %1396 = vmatprep.subr.bf16.mxu0 0
    %1397 = vmatpush1.bf16.msra.mxu0 %v1344
    %1398 = vmatprep.subr.bf16.mxu0 0
    %1399 = vmatpush1.bf16.msra.mxu0 0
    %1400 = vmatprep.subr.bf16.mxu0 0
    %1401 = vmatpush1.bf16.msra.mxu0 0
    %1402 = vmatprep.subr.bf16.mxu0 0
    %1403 = vmatpush1.bf16.msra.mxu0 0
    %1404 = vmatprep.subr.bf16.mxu0 0
    %1405 = vmatpush1.bf16.msra.mxu0 0
    %1406 = vmatprep.subr.bf16.mxu0 0
    %1407 = vmatpush1.bf16.msra.mxu0 0
    %1408 = vmatprep.subr.bf16.mxu0 0
    %1409 = vmatpush1.bf16.msra.mxu0 0
    %1410 = vmatprep.subr.bf16.mxu0 0
    %1411 = vmatpush1.bf16.msra.mxu0 0
    %1412 = vmatprep.subr.bf16.mxu0 0
    %1413 = vmatpush1.bf16.msra.mxu0 0
    %1414 = vmatprep.subr.bf16.mxu0 0
    %1415 = vmatpush1.bf16.msra.mxu0 0
    %1416 = vmatprep.subr.bf16.mxu0 0
    %1417 = vmatpush1.bf16.msra.mxu0 0
    %1418 = vmatprep.subr.bf16.mxu0 0
    %1419 = vmatpush1.bf16.msra.mxu0 0
    %1420 = vmatprep.subr.bf16.mxu0 0
    %1421 = vmatpush1.bf16.msra.mxu0 0
    %1422 = vmatprep.subr.bf16.mxu0 0
    %1423 = vmatpush1.bf16.msra.mxu0 0
    %1424 = vmatprep.subr.bf16.mxu0 0
    %1425 = vmatpush1.bf16.msra.mxu0 0
    %1426 = vmatprep.mubr.bf16.mxu0 0
    %1427 = vmatmul.mubr.bf16.gmra.mrb[0].mxu0 %v284
    %v1428 = vpop.f32.mrb[0].mxu0
    %v1429 = vadd.f32 %v1315, %v1428
    %v1430 = vpop.f32.mrb[0].mxu0
    %v1431 = vpop.f32.mrb[0].mxu0
    %v1432 = vadd.f32 %v1315, %v1431
    %v1433 = vpop.f32.mrb[0].mxu0
    %1434 = vdwg.mxu0
    %1435 = vst [vmem:[%s7 + $0xa8] sm:$0xff] %v1386
    %1436 = vst [vmem:[%s7 + $0xb0] sm:$0xff] %v1388
    %1437 = vst [vmem:[%s7 + $0xb8] sm:$0xff] %v1429
    %1438 = vst [vmem:[%s7 + $0x1b0] sm:$0xff] %v1390
    %1439 = vst [vmem:[%s7 + $0x1b8] sm:$0xff] %v1392
    %1440 = vst [vmem:[%s7 + $0x1c0] sm:$0xff] %v1432
    %v1441 = vmax.f32 %v1288, %v1386
    %v1442 = vmax.f32 %v1289, %v1388
    %v1443 = vmax.f32 %v1290, %v1429
    %v1444 = vmax.f32 %v1291, %v1390
    %v1445 = vmax.f32 %v1292, %v1392
    %v1446 = vmax.f32 %v1293, %v1432
    %v1447 = vld [vmem:[%s5 + $0x60] sm:$0xff]
    %v1448 = vld [vmem:[%s5 + $0x68] sm:$0xf]
    %v1449 = vld [vmem:[%s5 + $0xe4] sm:$0xff]
    %v1450 = vld [vmem:[%s5 + $0xec] sm:$0xf]
    %v1451 = vld [vmem:[%s5 + $0x168] sm:$0xff]
    %v1452 = vld [vmem:[%s5 + $0x170] sm:$0xf]
    %v1453 = vld [vmem:[%s5 + $0x1ec] sm:$0xff]
    %v1454 = vld [vmem:[%s5 + $0x1f4] sm:$0xf]
    %v1455 = vld [vmem:[#allocation9 + $0x18] sm:$0x7]
    %v1457 = vlaneseq
    %v1458 = vshrl.u32 %v1457, 7
    %v1459 = vsub.s32 0, %v1458
    %v1460 = vrot.slane %v1455, %v1459
    %v1461 = vlaneseq
    %v1462 = vshrl.u32 %v1461, 7
    %v1463 = vsub.s32 1, %v1462
    %v1464 = vrot.slane %v1455, %v1463
    %v1465 = vlaneseq
    %v1466 = vshrl.u32 %v1465, 7
    %v1467 = vsub.s32 2, %v1466
    %v1468 = vrot.slane %v1455, %v1467
    %v1480 = vunpack.c.l.b16 %v1447
    %v1481 = vunpack.c.h.b16 %v1447
    %v1482 = vunpack.c.l.b16 %v1448
    %v1483 = vunpack.c.l.b16 %v1449
    %v1484 = vunpack.c.h.b16 %v1449
    %v1485 = vunpack.c.l.b16 %v1450
    %v1486 = vunpack.c.l.b16 %v1451
    %v1487 = vunpack.c.h.b16 %v1451
    %v1488 = vunpack.c.l.b16 %v1452
    %v1489 = vunpack.c.l.b16 %v1453
    %v1490 = vunpack.c.h.b16 %v1453
    %v1491 = vunpack.c.l.b16 %v1454
    %v1492 = vpack.c.b16 %v1483, %v1480
    %v1493 = vpack.c.b16 %v1484, %v1481
    %v1494 = vpack.c.b16 %v1485, %v1482
    %v1495 = vpack.c.b16 %v1489, %v1486
    %v1496 = vpack.c.b16 %v1490, %v1487
    %v1497 = vpack.c.b16 %v1491, %v1488
    %1504 = vmatprep.subr.bf16.mxu0 %v1493
    %1505 = vmatpush1.bf16.msra.mxu0 %v1492
    %1506 = vmatprep.subr.bf16.mxu0 %v1496
    %1507 = vmatpush1.bf16.msra.mxu0 %v1495
    %1508 = vmatprep.subr.bf16.mxu0 0
    %1509 = vmatpush1.bf16.msra.mxu0 0
    %1510 = vmatprep.subr.bf16.mxu0 0
    %1511 = vmatpush1.bf16.msra.mxu0 0
    %1512 = vmatprep.subr.bf16.mxu0 0
    %1513 = vmatpush1.bf16.msra.mxu0 0
    %1514 = vmatprep.subr.bf16.mxu0 0
    %1515 = vmatpush1.bf16.msra.mxu0 0
    %1516 = vmatprep.subr.bf16.mxu0 0
    %1517 = vmatpush1.bf16.msra.mxu0 0
    %1518 = vmatprep.subr.bf16.mxu0 0
    %1519 = vmatpush1.bf16.msra.mxu0 0
    %1520 = vmatprep.subr.bf16.mxu0 0
    %1521 = vmatpush1.bf16.msra.mxu0 0
    %1522 = vmatprep.subr.bf16.mxu0 0
    %1523 = vmatpush1.bf16.msra.mxu0 0
    %1524 = vmatprep.subr.bf16.mxu0 0
    %1525 = vmatpush1.bf16.msra.mxu0 0
    %1526 = vmatprep.subr.bf16.mxu0 0
    %1527 = vmatpush1.bf16.msra.mxu0 0
    %1528 = vmatprep.subr.bf16.mxu0 0
    %1529 = vmatpush1.bf16.msra.mxu0 0
    %1530 = vmatprep.subr.bf16.mxu0 0
    %1531 = vmatpush1.bf16.msra.mxu0 0
    %1532 = vmatprep.subr.bf16.mxu0 0
    %1533 = vmatpush1.bf16.msra.mxu0 0
    %1534 = vmatprep.subr.bf16.mxu0 0
    %1535 = vmatpush1.bf16.msra.mxu0 0
    %1536 = vmatprep.mubr.bf16.mxu0 0
    %1537 = vmatmul.mubr.bf16.gmra.mrb[0].mxu0 %v284
    %v1538 = vpop.f32.mrb[0].mxu0
    %v1539 = vadd.f32 %v1460, %v1538
    %v1540 = vpop.f32.mrb[0].mxu0
    %v1541 = vadd.f32 %v1464, %v1540
    %v1542 = vpop.f32.mrb[0].mxu0
    %v1543 = vadd.f32 %v1460, %v1542
    %v1544 = vpop.f32.mrb[0].mxu0
    %v1545 = vadd.f32 %v1464, %v1544
    %1546 = vdwg.mxu0
    %1547 = vmatprep.subr.bf16.mxu0 0
    %1548 = vmatpush1.bf16.msra.mxu0 %v1494
    %1549 = vmatprep.subr.bf16.mxu0 0
    %1550 = vmatpush1.bf16.msra.mxu0 %v1497
    %1551 = vmatprep.subr.bf16.mxu0 0
    %1552 = vmatpush1.bf16.msra.mxu0 0
    %1553 = vmatprep.subr.bf16.mxu0 0
    %1554 = vmatpush1.bf16.msra.mxu0 0
    %1555 = vmatprep.subr.bf16.mxu0 0
    %1556 = vmatpush1.bf16.msra.mxu0 0
    %1557 = vmatprep.subr.bf16.mxu0 0
    %1558 = vmatpush1.bf16.msra.mxu0 0
    %1559 = vmatprep.subr.bf16.mxu0 0
    %1560 = vmatpush1.bf16.msra.mxu0 0
    %1561 = vmatprep.subr.bf16.mxu0 0
    %1562 = vmatpush1.bf16.msra.mxu0 0
    %1563 = vmatprep.subr.bf16.mxu0 0
    %1564 = vmatpush1.bf16.msra.mxu0 0
    %1565 = vmatprep.subr.bf16.mxu0 0
    %1566 = vmatpush1.bf16.msra.mxu0 0
    %1567 = vmatprep.subr.bf16.mxu0 0
    %1568 = vmatpush1.bf16.msra.mxu0 0
    %1569 = vmatprep.subr.bf16.mxu0 0
    %1570 = vmatpush1.bf16.msra.mxu0 0
    %1571 = vmatprep.subr.bf16.mxu0 0
    %1572 = vmatpush1.bf16.msra.mxu0 0
    %1573 = vmatprep.subr.bf16.mxu0 0
    %1574 = vmatpush1.bf16.msra.mxu0 0
    %1575 = vmatprep.subr.bf16.mxu0 0
    %1576 = vmatpush1.bf16.msra.mxu0 0
    %1577 = vmatprep.subr.bf16.mxu0 0
    %1578 = vmatpush1.bf16.msra.mxu0 0
    %1579 = vmatprep.mubr.bf16.mxu0 0
    %1580 = vmatmul.mubr.bf16.gmra.mrb[0].mxu0 %v284
    %v1581 = vpop.f32.mrb[0].mxu0
    %v1582 = vadd.f32 %v1468, %v1581
    %v1583 = vpop.f32.mrb[0].mxu0
    %v1584 = vpop.f32.mrb[0].mxu0
    %v1585 = vadd.f32 %v1468, %v1584
    %v1586 = vpop.f32.mrb[0].mxu0
    %1587 = vdwg.mxu0
    %1588 = vst [vmem:[%s7 + $0xc0] sm:$0xff] %v1539
    %1589 = vst [vmem:[%s7 + $0xc8] sm:$0xff] %v1541
    %1590 = vst [vmem:[%s7 + $0xd0] sm:$0xff] %v1582
    %1591 = vst [vmem:[%s7 + $0x1c8] sm:$0xff] %v1543
    %1592 = vst [vmem:[%s7 + $0x1d0] sm:$0xff] %v1545
    %1593 = vst [vmem:[%s7 + $0x1d8] sm:$0xff] %v1585
    %v1594 = vmax.f32 %v1441, %v1539
    %v1595 = vmax.f32 %v1442, %v1541
    %v1596 = vmax.f32 %v1443, %v1582
    %v1597 = vmax.f32 %v1444, %v1543
    %v1598 = vmax.f32 %v1445, %v1545
    %v1599 = vmax.f32 %v1446, %v1585
    %v1600 = vld [vmem:[%s5 + $0x6c] sm:$0xff]
    %v1601 = vld [vmem:[%s5 + $0x74] sm:$0xf]
    %v1602 = vld [vmem:[%s5 + $0xf0] sm:$0xff]
    %v1603 = vld [vmem:[%s5 + $0xf8] sm:$0xf]
    %v1604 = vld [vmem:[%s5 + $0x174] sm:$0xff]
    %v1605 = vld [vmem:[%s5 + $0x17c] sm:$0xf]
    %v1606 = vld [vmem:[%s5 + $0x1f8] sm:$0xff]
    %v1607 = vld [vmem:[%s5 + $0x200] sm:$0xf]
    %v1608 = vld [vmem:[#allocation9 + $0x1b] sm:$0x7]
    %v1610 = vlaneseq
    %v1611 = vshrl.u32 %v1610, 7
    %v1612 = vsub.s32 0, %v1611
    %v1613 = vrot.slane %v1608, %v1612
    %v1614 = vlaneseq
    %v1615 = vshrl.u32 %v1614, 7
    %v1616 = vsub.s32 1, %v1615
    %v1617 = vrot.slane %v1608, %v1616
    %v1618 = vlaneseq
    %v1619 = vshrl.u32 %v1618, 7
    %v1620 = vsub.s32 2, %v1619
    %v1621 = vrot.slane %v1608, %v1620
    %v1633 = vunpack.c.l.b16 %v1600
    %v1634 = vunpack.c.h.b16 %v1600
    %v1635 = vunpack.c.l.b16 %v1601
    %v1636 = vunpack.c.l.b16 %v1602
    %v1637 = vunpack.c.h.b16 %v1602
    %v1638 = vunpack.c.l.b16 %v1603
    %v1639 = vunpack.c.l.b16 %v1604
    %v1640 = vunpack.c.h.b16 %v1604
    %v1641 = vunpack.c.l.b16 %v1605
    %v1642 = vunpack.c.l.b16 %v1606
    %v1643 = vunpack.c.h.b16 %v1606
    %v1644 = vunpack.c.l.b16 %v1607
    %v1645 = vpack.c.b16 %v1636, %v1633
    %v1646 = vpack.c.b16 %v1637, %v1634
    %v1647 = vpack.c.b16 %v1638, %v1635
    %v1648 = vpack.c.b16 %v1642, %v1639
    %v1649 = vpack.c.b16 %v1643, %v1640
    %v1650 = vpack.c.b16 %v1644, %v1641
    %1657 = vmatprep.subr.bf16.mxu0 %v1646
    %1658 = vmatpush1.bf16.msra.mxu0 %v1645
    %1659 = vmatprep.subr.bf16.mxu0 %v1649
    %1660 = vmatpush1.bf16.msra.mxu0 %v1648
    %1661 = vmatprep.subr.bf16.mxu0 0
    %1662 = vmatpush1.bf16.msra.mxu0 0
    %1663 = vmatprep.subr.bf16.mxu0 0
    %1664 = vmatpush1.bf16.msra.mxu0 0
    %1665 = vmatprep.subr.bf16.mxu0 0
    %1666 = vmatpush1.bf16.msra.mxu0 0
    %1667 = vmatprep.subr.bf16.mxu0 0
    %1668 = vmatpush1.bf16.msra.mxu0 0
    %1669 = vmatprep.subr.bf16.mxu0 0
    %1670 = vmatpush1.bf16.msra.mxu0 0
    %1671 = vmatprep.subr.bf16.mxu0 0
    %1672 = vmatpush1.bf16.msra.mxu0 0
    %1673 = vmatprep.subr.bf16.mxu0 0
    %1674 = vmatpush1.bf16.msra.mxu0 0
    %1675 = vmatprep.subr.bf16.mxu0 0
    %1676 = vmatpush1.bf16.msra.mxu0 0
    %1677 = vmatprep.subr.bf16.mxu0 0
    %1678 = vmatpush1.bf16.msra.mxu0 0
    %1679 = vmatprep.subr.bf16.mxu0 0
    %1680 = vmatpush1.bf16.msra.mxu0 0
    %1681 = vmatprep.subr.bf16.mxu0 0
    %1682 = vmatpush1.bf16.msra.mxu0 0
    %1683 = vmatprep.subr.bf16.mxu0 0
    %1684 = vmatpush1.bf16.msra.mxu0 0
    %1685 = vmatprep.subr.bf16.mxu0 0
    %1686 = vmatpush1.bf16.msra.mxu0 0
    %1687 = vmatprep.subr.bf16.mxu0 0
    %1688 = vmatpush1.bf16.msra.mxu0 0
    %1689 = vmatprep.mubr.bf16.mxu0 0
    %1690 = vmatmul.mubr.bf16.gmra.mrb[0].mxu0 %v284
    %v1691 = vpop.f32.mrb[0].mxu0
    %v1692 = vadd.f32 %v1613, %v1691
    %v1693 = vpop.f32.mrb[0].mxu0
    %v1694 = vadd.f32 %v1617, %v1693
    %v1695 = vpop.f32.mrb[0].mxu0
    %v1696 = vadd.f32 %v1613, %v1695
    %v1697 = vpop.f32.mrb[0].mxu0
    %v1698 = vadd.f32 %v1617, %v1697
    %1699 = vdwg.mxu0
    %1700 = vmatprep.subr.bf16.mxu0 0
    %1701 = vmatpush1.bf16.msra.mxu0 %v1647
    %1702 = vmatprep.subr.bf16.mxu0 0
    %1703 = vmatpush1.bf16.msra.mxu0 %v1650
    %1704 = vmatprep.subr.bf16.mxu0 0
    %1705 = vmatpush1.bf16.msra.mxu0 0
    %1706 = vmatprep.subr.bf16.mxu0 0
    %1707 = vmatpush1.bf16.msra.mxu0 0
    %1708 = vmatprep.subr.bf16.mxu0 0
    %1709 = vmatpush1.bf16.msra.mxu0 0
    %1710 = vmatprep.subr.bf16.mxu0 0
    %1711 = vmatpush1.bf16.msra.mxu0 0
    %1712 = vmatprep.subr.bf16.mxu0 0
    %1713 = vmatpush1.bf16.msra.mxu0 0
    %1714 = vmatprep.subr.bf16.mxu0 0
    %1715 = vmatpush1.bf16.msra.mxu0 0
    %1716 = vmatprep.subr.bf16.mxu0 0
    %1717 = vmatpush1.bf16.msra.mxu0 0
    %1718 = vmatprep.subr.bf16.mxu0 0
    %1719 = vmatpush1.bf16.msra.mxu0 0
    %1720 = vmatprep.subr.bf16.mxu0 0
    %1721 = vmatpush1.bf16.msra.mxu0 0
    %1722 = vmatprep.subr.bf16.mxu0 0
    %1723 = vmatpush1.bf16.msra.mxu0 0
    %1724 = vmatprep.subr.bf16.mxu0 0
    %1725 = vmatpush1.bf16.msra.mxu0 0
    %1726 = vmatprep.subr.bf16.mxu0 0
    %1727 = vmatpush1.bf16.msra.mxu0 0
    %1728 = vmatprep.subr.bf16.mxu0 0
    %1729 = vmatpush1.bf16.msra.mxu0 0
    %1730 = vmatprep.subr.bf16.mxu0 0
    %1731 = vmatpush1.bf16.msra.mxu0 0
    %1732 = vmatprep.mubr.bf16.mxu0 0
    %1733 = vmatmul.mubr.bf16.gmra.mrb[0].mxu0 %v284
    %v1734 = vpop.f32.mrb[0].mxu0
    %v1735 = vadd.f32 %v1621, %v1734
    %v1736 = vpop.f32.mrb[0].mxu0
    %v1737 = vpop.f32.mrb[0].mxu0
    %v1738 = vadd.f32 %v1621, %v1737
    %v1739 = vpop.f32.mrb[0].mxu0
    %1740 = vdwg.mxu0
    %1741 = vst [vmem:[%s7 + $0xd8] sm:$0xff] %v1692
    %1742 = vst [vmem:[%s7 + $0xe0] sm:$0xff] %v1694
    %1743 = vst [vmem:[%s7 + $0xe8] sm:$0xff] %v1735
    %1744 = vst [vmem:[%s7 + $0x1e0] sm:$0xff] %v1696
    %1745 = vst [vmem:[%s7 + $0x1e8] sm:$0xff] %v1698
    %1746 = vst [vmem:[%s7 + $0x1f0] sm:$0xff] %v1738
    %v1747 = vmax.f32 %v1594, %v1692
    %v1748 = vmax.f32 %v1595, %v1694
    %v1749 = vmax.f32 %v1596, %v1735
    %v1750 = vmax.f32 %v1597, %v1696
    %v1751 = vmax.f32 %v1598, %v1698
    %v1752 = vmax.f32 %v1599, %v1738
    %v1753 = vld [vmem:[%s5 + $0x78] sm:$0xff]
    %v1754 = vld [vmem:[%s5 + $0x80] sm:$0xf]
    %v1755 = vld [vmem:[%s5 + $0xfc] sm:$0xff]
    %v1756 = vld [vmem:[%s5 + $0x104] sm:$0xf]
    %v1757 = vld [vmem:[%s5 + $0x180] sm:$0xff]
    %v1758 = vld [vmem:[%s5 + $0x188] sm:$0xf]
    %v1759 = vld [vmem:[%s5 + $0x204] sm:$0xff]
    %v1760 = vld [vmem:[%s5 + $0x20c] sm:$0xf]
    %v1761 = vld [vmem:[#allocation9 + $0x1e] sm:$0x7]
    %v1763 = vlaneseq
    %v1764 = vshrl.u32 %v1763, 7
    %v1765 = vsub.s32 0, %v1764
    %v1766 = vrot.slane %v1761, %v1765
    %v1767 = vlaneseq
    %v1768 = vshrl.u32 %v1767, 7
    %v1769 = vsub.s32 1, %v1768
    %v1770 = vrot.slane %v1761, %v1769
    %v1771 = vlaneseq
    %v1772 = vshrl.u32 %v1771, 7
    %v1773 = vsub.s32 2, %v1772
    %v1774 = vrot.slane %v1761, %v1773
    %v1786 = vunpack.c.l.b16 %v1753
    %v1787 = vunpack.c.h.b16 %v1753
    %v1788 = vunpack.c.l.b16 %v1754
    %v1789 = vunpack.c.l.b16 %v1755
    %v1790 = vunpack.c.h.b16 %v1755
    %v1791 = vunpack.c.l.b16 %v1756
    %v1792 = vunpack.c.l.b16 %v1757
    %v1793 = vunpack.c.h.b16 %v1757
    %v1794 = vunpack.c.l.b16 %v1758
    %v1795 = vunpack.c.l.b16 %v1759
    %v1796 = vunpack.c.h.b16 %v1759
    %v1797 = vunpack.c.l.b16 %v1760
    %v1798 = vpack.c.b16 %v1789, %v1786
    %v1799 = vpack.c.b16 %v1790, %v1787
    %v1800 = vpack.c.b16 %v1791, %v1788
    %v1801 = vpack.c.b16 %v1795, %v1792
    %v1802 = vpack.c.b16 %v1796, %v1793
    %v1803 = vpack.c.b16 %v1797, %v1794
    %1810 = vmatprep.subr.bf16.mxu0 %v1799
    %1811 = vmatpush1.bf16.msra.mxu0 %v1798
    %1812 = vmatprep.subr.bf16.mxu0 %v1802
    %1813 = vmatpush1.bf16.msra.mxu0 %v1801
    %1814 = vmatprep.subr.bf16.mxu0 0
    %1815 = vmatpush1.bf16.msra.mxu0 0
    %1816 = vmatprep.subr.bf16.mxu0 0
    %1817 = vmatpush1.bf16.msra.mxu0 0
    %1818 = vmatprep.subr.bf16.mxu0 0
    %1819 = vmatpush1.bf16.msra.mxu0 0
    %1820 = vmatprep.subr.bf16.mxu0 0
    %1821 = vmatpush1.bf16.msra.mxu0 0
    %1822 = vmatprep.subr.bf16.mxu0 0
    %1823 = vmatpush1.bf16.msra.mxu0 0
    %1824 = vmatprep.subr.bf16.mxu0 0
    %1825 = vmatpush1.bf16.msra.mxu0 0
    %1826 = vmatprep.subr.bf16.mxu0 0
    %1827 = vmatpush1.bf16.msra.mxu0 0
    %1828 = vmatprep.subr.bf16.mxu0 0
    %1829 = vmatpush1.bf16.msra.mxu0 0
    %1830 = vmatprep.subr.bf16.mxu0 0
    %1831 = vmatpush1.bf16.msra.mxu0 0
    %1832 = vmatprep.subr.bf16.mxu0 0
    %1833 = vmatpush1.bf16.msra.mxu0 0
    %1834 = vmatprep.subr.bf16.mxu0 0
    %1835 = vmatpush1.bf16.msra.mxu0 0
    %1836 = vmatprep.subr.bf16.mxu0 0
    %1837 = vmatpush1.bf16.msra.mxu0 0
    %1838 = vmatprep.subr.bf16.mxu0 0
    %1839 = vmatpush1.bf16.msra.mxu0 0
    %1840 = vmatprep.subr.bf16.mxu0 0
    %1841 = vmatpush1.bf16.msra.mxu0 0
    %1842 = vmatprep.mubr.bf16.mxu0 0
    %1843 = vmatmul.mubr.bf16.gmra.mrb[0].mxu0 %v284
    %v1844 = vpop.f32.mrb[0].mxu0
    %v1845 = vadd.f32 %v1766, %v1844
    %v1846 = vpop.f32.mrb[0].mxu0
    %v1847 = vadd.f32 %v1770, %v1846
    %v1848 = vpop.f32.mrb[0].mxu0
    %v1849 = vadd.f32 %v1766, %v1848
    %v1850 = vpop.f32.mrb[0].mxu0
    %v1851 = vadd.f32 %v1770, %v1850
    %1852 = vdwg.mxu0
    %1853 = vmatprep.subr.bf16.mxu0 0
    %1854 = vmatpush1.bf16.msra.mxu0 %v1800
    %1855 = vmatprep.subr.bf16.mxu0 0
    %1856 = vmatpush1.bf16.msra.mxu0 %v1803
    %1857 = vmatprep.subr.bf16.mxu0 0
    %1858 = vmatpush1.bf16.msra.mxu0 0
    %1859 = vmatprep.subr.bf16.mxu0 0
    %1860 = vmatpush1.bf16.msra.mxu0 0
    %1861 = vmatprep.subr.bf16.mxu0 0
    %1862 = vmatpush1.bf16.msra.mxu0 0
    %1863 = vmatprep.subr.bf16.mxu0 0
    %1864 = vmatpush1.bf16.msra.mxu0 0
    %1865 = vmatprep.subr.bf16.mxu0 0
    %1866 = vmatpush1.bf16.msra.mxu0 0
    %1867 = vmatprep.subr.bf16.mxu0 0
    %1868 = vmatpush1.bf16.msra.mxu0 0
    %1869 = vmatprep.subr.bf16.mxu0 0
    %1870 = vmatpush1.bf16.msra.mxu0 0
    %1871 = vmatprep.subr.bf16.mxu0 0
    %1872 = vmatpush1.bf16.msra.mxu0 0
    %1873 = vmatprep.subr.bf16.mxu0 0
    %1874 = vmatpush1.bf16.msra.mxu0 0
    %1875 = vmatprep.subr.bf16.mxu0 0
    %1876 = vmatpush1.bf16.msra.mxu0 0
    %1877 = vmatprep.subr.bf16.mxu0 0
    %1878 = vmatpush1.bf16.msra.mxu0 0
    %1879 = vmatprep.subr.bf16.mxu0 0
    %1880 = vmatpush1.bf16.msra.mxu0 0
    %1881 = vmatprep.subr.bf16.mxu0 0
    %1882 = vmatpush1.bf16.msra.mxu0 0
    %1883 = vmatprep.subr.bf16.mxu0 0
    %1884 = vmatpush1.bf16.msra.mxu0 0
    %1885 = vmatprep.mubr.bf16.mxu0 0
    %1886 = vmatmul.mubr.bf16.gmra.mrb[0].mxu0 %v284
    %v1887 = vpop.f32.mrb[0].mxu0
    %v1888 = vadd.f32 %v1774, %v1887
    %v1889 = vpop.f32.mrb[0].mxu0
    %v1890 = vpop.f32.mrb[0].mxu0
    %v1891 = vadd.f32 %v1774, %v1890
    %v1892 = vpop.f32.mrb[0].mxu0
    %1893 = vdwg.mxu0
    %1894 = vst [vmem:[%s7 + $0xf0] sm:$0xff] %v1845
    %1895 = vst [vmem:[%s7 + $0xf8] sm:$0xff] %v1847
    %1896 = vst [vmem:[%s7 + $0x100] sm:$0xff] %v1888
    %1897 = vst [vmem:[%s7 + $0x1f8] sm:$0xff] %v1849
    %1898 = vst [vmem:[%s7 + $0x200] sm:$0xff] %v1851
    %1899 = vst [vmem:[%s7 + $0x208] sm:$0xff] %v1891
    %v1900 = vmax.f32 %v1747, %v1845
    %v1901 = vmax.f32 %v1748, %v1847
    %v1902 = vmax.f32 %v1749, %v1888
    %v1903 = vmax.f32 %v1750, %v1849
    %v1904 = vmax.f32 %v1751, %v1851
    %v1905 = vmax.f32 %v1752, %v1891
    %v1906 = vld [vmem:[%s7] sm:$0xff]
    %v1907 = vld [vmem:[%s7 + $0x8] sm:$0xff]
    %v1908 = vld [vmem:[%s7 + $0x10] sm:$0xff]
    %v1909 = vld [vmem:[%s7 + $0x108] sm:$0xff]
    %v1910 = vld [vmem:[%s7 + $0x110] sm:$0xff]
    %v1911 = vld [vmem:[%s7 + $0x118] sm:$0xff]
    %v1912 = vsub.f32 %v1906, %v1900
    %v1913 = vsub.f32 %v1907, %v1901
    %v1914 = vsub.f32 %v1908, %v1902
    %v1915 = vsub.f32 %v1909, %v1903
    %v1916 = vsub.f32 %v1910, %v1904
    %v1917 = vsub.f32 %v1911, %v1905
    %v1918 = vmul.f32 %v1912, 1.442695
    %v1919 = vpow.pop %v1918
    %v1920 = vmul.f32 %v1913, 1.442695
    %v1921 = vpow.pop %v1920
    %v1922 = vmul.f32 %v1914, 1.442695
    %v1923 = vpow.pop %v1922
    %v1924 = vmul.f32 %v1915, 1.442695
    %v1925 = vpow.pop %v1924
    %v1926 = vmul.f32 %v1916, 1.442695
    %v1927 = vpow.pop %v1926
    %v1928 = vmul.f32 %v1917, 1.442695
    %v1929 = vpow.pop %v1928
    %1930 = vst [vmem:[%s7] sm:$0xff] %v1919
    %1931 = vst [vmem:[%s7 + $0x8] sm:$0xff] %v1921
    %1932 = vst [vmem:[%s7 + $0x10] sm:$0xff] %v1923
    %1933 = vst [vmem:[%s7 + $0x108] sm:$0xff] %v1925
    %1934 = vst [vmem:[%s7 + $0x110] sm:$0xff] %v1927
    %1935 = vst [vmem:[%s7 + $0x118] sm:$0xff] %v1929
    %v1936 = vld [vmem:[%s7 + $0x18] sm:$0xff]
    %v1937 = vld [vmem:[%s7 + $0x20] sm:$0xff]
    %v1938 = vld [vmem:[%s7 + $0x28] sm:$0xff]
    %v1939 = vld [vmem:[%s7 + $0x120] sm:$0xff]
    %v1940 = vld [vmem:[%s7 + $0x128] sm:$0xff]
    %v1941 = vld [vmem:[%s7 + $0x130] sm:$0xff]
    %v1942 = vsub.f32 %v1936, %v1900
    %v1943 = vsub.f32 %v1937, %v1901
    %v1944 = vsub.f32 %v1938, %v1902
    %v1945 = vsub.f32 %v1939, %v1903
    %v1946 = vsub.f32 %v1940, %v1904
    %v1947 = vsub.f32 %v1941, %v1905
    %v1948 = vmul.f32 %v1942, 1.442695
    %v1949 = vpow.pop %v1948
    %v1950 = vmul.f32 %v1943, 1.442695
    %v1951 = vpow.pop %v1950
    %v1952 = vmul.f32 %v1944, 1.442695
    %v1953 = vpow.pop %v1952
    %v1954 = vmul.f32 %v1945, 1.442695
    %v1955 = vpow.pop %v1954
    %v1956 = vmul.f32 %v1946, 1.442695
    %v1957 = vpow.pop %v1956
    %v1958 = vmul.f32 %v1947, 1.442695
    %v1959 = vpow.pop %v1958
    %1960 = vst [vmem:[%s7 + $0x18] sm:$0xff] %v1949
    %1961 = vst [vmem:[%s7 + $0x20] sm:$0xff] %v1951
    %1962 = vst [vmem:[%s7 + $0x28] sm:$0xff] %v1953
    %1963 = vst [vmem:[%s7 + $0x120] sm:$0xff] %v1955
    %1964 = vst [vmem:[%s7 + $0x128] sm:$0xff] %v1957
    %1965 = vst [vmem:[%s7 + $0x130] sm:$0xff] %v1959
    %v1966 = vadd.f32 %v1919, %v1949
    %v1967 = vadd.f32 %v1921, %v1951
    %v1968 = vadd.f32 %v1923, %v1953
    %v1969 = vadd.f32 %v1925, %v1955
    %v1970 = vadd.f32 %v1927, %v1957
    %v1971 = vadd.f32 %v1929, %v1959
    %v1972 = vld [vmem:[%s7 + $0x30] sm:$0xff]
    %v1973 = vld [vmem:[%s7 + $0x38] sm:$0xff]
    %v1974 = vld [vmem:[%s7 + $0x40] sm:$0xff]
    %v1975 = vld [vmem:[%s7 + $0x138] sm:$0xff]
    %v1976 = vld [vmem:[%s7 + $0x140] sm:$0xff]
    %v1977 = vld [vmem:[%s7 + $0x148] sm:$0xff]
    %v1978 = vsub.f32 %v1972, %v1900
    %v1979 = vsub.f32 %v1973, %v1901
    %v1980 = vsub.f32 %v1974, %v1902
    %v1981 = vsub.f32 %v1975, %v1903
    %v1982 = vsub.f32 %v1976, %v1904
    %v1983 = vsub.f32 %v1977, %v1905
    %v1984 = vmul.f32 %v1978, 1.442695
    %v1985 = vpow.pop %v1984
    %v1986 = vmul.f32 %v1979, 1.442695
    %v1987 = vpow.pop %v1986
    %v1988 = vmul.f32 %v1980, 1.442695
    %v1989 = vpow.pop %v1988
    %v1990 = vmul.f32 %v1981, 1.442695
    %v1991 = vpow.pop %v1990
    %v1992 = vmul.f32 %v1982, 1.442695
    %v1993 = vpow.pop %v1992
    %v1994 = vmul.f32 %v1983, 1.442695
    %v1995 = vpow.pop %v1994
    %1996 = vst [vmem:[%s7 + $0x30] sm:$0xff] %v1985
    %1997 = vst [vmem:[%s7 + $0x38] sm:$0xff] %v1987
    %1998 = vst [vmem:[%s7 + $0x40] sm:$0xff] %v1989
    %1999 = vst [vmem:[%s7 + $0x138] sm:$0xff] %v1991
    %2000 = vst [vmem:[%s7 + $0x140] sm:$0xff] %v1993
    %2001 = vst [vmem:[%s7 + $0x148] sm:$0xff] %v1995
    %v2002 = vadd.f32 %v1966, %v1985
    %v2003 = vadd.f32 %v1967, %v1987
    %v2004 = vadd.f32 %v1968, %v1989
    %v2005 = vadd.f32 %v1969, %v1991
    %v2006 = vadd.f32 %v1970, %v1993
    %v2007 = vadd.f32 %v1971, %v1995
    %v2008 = vld [vmem:[%s7 + $0x48] sm:$0xff]
    %v2009 = vld [vmem:[%s7 + $0x50] sm:$0xff]
    %v2010 = vld [vmem:[%s7 + $0x58] sm:$0xff]
    %v2011 = vld [vmem:[%s7 + $0x150] sm:$0xff]
    %v2012 = vld [vmem:[%s7 + $0x158] sm:$0xff]
    %v2013 = vld [vmem:[%s7 + $0x160] sm:$0xff]
    %v2014 = vsub.f32 %v2008, %v1900
    %v2015 = vsub.f32 %v2009, %v1901
    %v2016 = vsub.f32 %v2010, %v1902
    %v2017 = vsub.f32 %v2011, %v1903
    %v2018 = vsub.f32 %v2012, %v1904
    %v2019 = vsub.f32 %v2013, %v1905
    %v2020 = vmul.f32 %v2014, 1.442695
    %v2021 = vpow.pop %v2020
    %v2022 = vmul.f32 %v2015, 1.442695
    %v2023 = vpow.pop %v2022
    %v2024 = vmul.f32 %v2016, 1.442695
    %v2025 = vpow.pop %v2024
    %v2026 = vmul.f32 %v2017, 1.442695
    %v2027 = vpow.pop %v2026
    %v2028 = vmul.f32 %v2018, 1.442695
    %v2029 = vpow.pop %v2028
    %v2030 = vmul.f32 %v2019, 1.442695
    %v2031 = vpow.pop %v2030
    %2032 = vst [vmem:[%s7 + $0x48] sm:$0xff] %v2021
    %2033 = vst [vmem:[%s7 + $0x50] sm:$0xff] %v2023
    %2034 = vst [vmem:[%s7 + $0x58] sm:$0xff] %v2025
    %2035 = vst [vmem:[%s7 + $0x150] sm:$0xff] %v2027
    %2036 = vst [vmem:[%s7 + $0x158] sm:$0xff] %v2029
    %2037 = vst [vmem:[%s7 + $0x160] sm:$0xff] %v2031
    %v2038 = vadd.f32 %v2002, %v2021
    %v2039 = vadd.f32 %v2003, %v2023
    %v2040 = vadd.f32 %v2004, %v2025
    %v2041 = vadd.f32 %v2005, %v2027
    %v2042 = vadd.f32 %v2006, %v2029
    %v2043 = vadd.f32 %v2007, %v2031
    %v2044 = vld [vmem:[%s7 + $0x60] sm:$0xff]
    %v2045 = vld [vmem:[%s7 + $0x68] sm:$0xff]
    %v2046 = vld [vmem:[%s7 + $0x70] sm:$0xff]
    %v2047 = vld [vmem:[%s7 + $0x168] sm:$0xff]
    %v2048 = vld [vmem:[%s7 + $0x170] sm:$0xff]
    %v2049 = vld [vmem:[%s7 + $0x178] sm:$0xff]
    %v2050 = vsub.f32 %v2044, %v1900
    %v2051 = vsub.f32 %v2045, %v1901
    %v2052 = vsub.f32 %v2046, %v1902
    %v2053 = vsub.f32 %v2047, %v1903
    %v2054 = vsub.f32 %v2048, %v1904
    %v2055 = vsub.f32 %v2049, %v1905
    %v2056 = vmul.f32 %v2050, 1.442695
    %v2057 = vpow.pop %v2056
    %v2058 = vmul.f32 %v2051, 1.442695
    %v2059 = vpow.pop %v2058
    %v2060 = vmul.f32 %v2052, 1.442695
    %v2061 = vpow.pop %v2060
    %v2062 = vmul.f32 %v2053, 1.442695
    %v2063 = vpow.pop %v2062
    %v2064 = vmul.f32 %v2054, 1.442695
    %v2065 = vpow.pop %v2064
    %v2066 = vmul.f32 %v2055, 1.442695
    %v2067 = vpow.pop %v2066
    %2068 = vst [vmem:[%s7 + $0x60] sm:$0xff] %v2057
    %2069 = vst [vmem:[%s7 + $0x68] sm:$0xff] %v2059
    %2070 = vst [vmem:[%s7 + $0x70] sm:$0xff] %v2061
    %2071 = vst [vmem:[%s7 + $0x168] sm:$0xff] %v2063
    %2072 = vst [vmem:[%s7 + $0x170] sm:$0xff] %v2065
    %2073 = vst [vmem:[%s7 + $0x178] sm:$0xff] %v2067
    %v2074 = vadd.f32 %v2038, %v2057
    %v2075 = vadd.f32 %v2039, %v2059
    %v2076 = vadd.f32 %v2040, %v2061
    %v2077 = vadd.f32 %v2041, %v2063
    %v2078 = vadd.f32 %v2042, %v2065
    %v2079 = vadd.f32 %v2043, %v2067
    %v2080 = vld [vmem:[%s7 + $0x78] sm:$0xff]
    %v2081 = vld [vmem:[%s7 + $0x80] sm:$0xff]
    %v2082 = vld [vmem:[%s7 + $0x88] sm:$0xff]
    %v2083 = vld [vmem:[%s7 + $0x180] sm:$0xff]
    %v2084 = vld [vmem:[%s7 + $0x188] sm:$0xff]
    %v2085 = vld [vmem:[%s7 + $0x190] sm:$0xff]
    %v2086 = vsub.f32 %v2080, %v1900
    %v2087 = vsub.f32 %v2081, %v1901
    %v2088 = vsub.f32 %v2082, %v1902
    %v2089 = vsub.f32 %v2083, %v1903
    %v2090 = vsub.f32 %v2084, %v1904
    %v2091 = vsub.f32 %v2085, %v1905
    %v2092 = vmul.f32 %v2086, 1.442695
    %v2093 = vpow.pop %v2092
    %v2094 = vmul.f32 %v2087, 1.442695
    %v2095 = vpow.pop %v2094
    %v2096 = vmul.f32 %v2088, 1.442695
    %v2097 = vpow.pop %v2096
    %v2098 = vmul.f32 %v2089, 1.442695
    %v2099 = vpow.pop %v2098
    %v2100 = vmul.f32 %v2090, 1.442695
    %v2101 = vpow.pop %v2100
    %v2102 = vmul.f32 %v2091, 1.442695
    %v2103 = vpow.pop %v2102
    %2104 = vst [vmem:[%s7 + $0x78] sm:$0xff] %v2093
    %2105 = vst [vmem:[%s7 + $0x80] sm:$0xff] %v2095
    %2106 = vst [vmem:[%s7 + $0x88] sm:$0xff] %v2097
    %2107 = vst [vmem:[%s7 + $0x180] sm:$0xff] %v2099
    %2108 = vst [vmem:[%s7 + $0x188] sm:$0xff] %v2101
    %2109 = vst [vmem:[%s7 + $0x190] sm:$0xff] %v2103
    %v2110 = vadd.f32 %v2074, %v2093
    %v2111 = vadd.f32 %v2075, %v2095
    %v2112 = vadd.f32 %v2076, %v2097
    %v2113 = vadd.f32 %v2077, %v2099
    %v2114 = vadd.f32 %v2078, %v2101
    %v2115 = vadd.f32 %v2079, %v2103
    %v2116 = vld [vmem:[%s7 + $0x90] sm:$0xff]
    %v2117 = vld [vmem:[%s7 + $0x98] sm:$0xff]
    %v2118 = vld [vmem:[%s7 + $0xa0] sm:$0xff]
    %v2119 = vld [vmem:[%s7 + $0x198] sm:$0xff]
    %v2120 = vld [vmem:[%s7 + $0x1a0] sm:$0xff]
    %v2121 = vld [vmem:[%s7 + $0x1a8] sm:$0xff]
    %v2122 = vsub.f32 %v2116, %v1900
    %v2123 = vsub.f32 %v2117, %v1901
    %v2124 = vsub.f32 %v2118, %v1902
    %v2125 = vsub.f32 %v2119, %v1903
    %v2126 = vsub.f32 %v2120, %v1904
    %v2127 = vsub.f32 %v2121, %v1905
    %v2128 = vmul.f32 %v2122, 1.442695
    %v2129 = vpow.pop %v2128
    %v2130 = vmul.f32 %v2123, 1.442695
    %v2131 = vpow.pop %v2130
    %v2132 = vmul.f32 %v2124, 1.442695
    %v2133 = vpow.pop %v2132
    %v2134 = vmul.f32 %v2125, 1.442695
    %v2135 = vpow.pop %v2134
    %v2136 = vmul.f32 %v2126, 1.442695
    %v2137 = vpow.pop %v2136
    %v2138 = vmul.f32 %v2127, 1.442695
    %v2139 = vpow.pop %v2138
    %2140 = vst [vmem:[%s7 + $0x90] sm:$0xff] %v2129
    %2141 = vst [vmem:[%s7 + $0x98] sm:$0xff] %v2131
    %2142 = vst [vmem:[%s7 + $0xa0] sm:$0xff] %v2133
    %2143 = vst [vmem:[%s7 + $0x198] sm:$0xff] %v2135
    %2144 = vst [vmem:[%s7 + $0x1a0] sm:$0xff] %v2137
    %2145 = vst [vmem:[%s7 + $0x1a8] sm:$0xff] %v2139
    %v2146 = vadd.f32 %v2110, %v2129
    %v2147 = vadd.f32 %v2111, %v2131
    %v2148 = vadd.f32 %v2112, %v2133
    %v2149 = vadd.f32 %v2113, %v2135
    %v2150 = vadd.f32 %v2114, %v2137
    %v2151 = vadd.f32 %v2115, %v2139
    %v2152 = vld [vmem:[%s7 + $0xa8] sm:$0xff]
    %v2153 = vld [vmem:[%s7 + $0xb0] sm:$0xff]
    %v2154 = vld [vmem:[%s7 + $0xb8] sm:$0xff]
    %v2155 = vld [vmem:[%s7 + $0x1b0] sm:$0xff]
    %v2156 = vld [vmem:[%s7 + $0x1b8] sm:$0xff]
    %v2157 = vld [vmem:[%s7 + $0x1c0] sm:$0xff]
    %v2158 = vsub.f32 %v2152, %v1900
    %v2159 = vsub.f32 %v2153, %v1901
    %v2160 = vsub.f32 %v2154, %v1902
    %v2161 = vsub.f32 %v2155, %v1903
    %v2162 = vsub.f32 %v2156, %v1904
    %v2163 = vsub.f32 %v2157, %v1905
    %v2164 = vmul.f32 %v2158, 1.442695
    %v2165 = vpow.pop %v2164
    %v2166 = vmul.f32 %v2159, 1.442695
    %v2167 = vpow.pop %v2166
    %v2168 = vmul.f32 %v2160, 1.442695
    %v2169 = vpow.pop %v2168
    %v2170 = vmul.f32 %v2161, 1.442695
    %v2171 = vpow.pop %v2170
    %v2172 = vmul.f32 %v2162, 1.442695
    %v2173 = vpow.pop %v2172
    %v2174 = vmul.f32 %v2163, 1.442695
    %v2175 = vpow.pop %v2174
    %2176 = vst [vmem:[%s7 + $0xa8] sm:$0xff] %v2165
    %2177 = vst [vmem:[%s7 + $0xb0] sm:$0xff] %v2167
    %2178 = vst [vmem:[%s7 + $0xb8] sm:$0xff] %v2169
    %2179 = vst [vmem:[%s7 + $0x1b0] sm:$0xff] %v2171
    %2180 = vst [vmem:[%s7 + $0x1b8] sm:$0xff] %v2173
    %2181 = vst [vmem:[%s7 + $0x1c0] sm:$0xff] %v2175
    %v2182 = vadd.f32 %v2146, %v2165
    %v2183 = vadd.f32 %v2147, %v2167
    %v2184 = vadd.f32 %v2148, %v2169
    %v2185 = vadd.f32 %v2149, %v2171
    %v2186 = vadd.f32 %v2150, %v2173
    %v2187 = vadd.f32 %v2151, %v2175
    %v2188 = vld [vmem:[%s7 + $0xc0] sm:$0xff]
    %v2189 = vld [vmem:[%s7 + $0xc8] sm:$0xff]
    %v2190 = vld [vmem:[%s7 + $0xd0] sm:$0xff]
    %v2191 = vld [vmem:[%s7 + $0x1c8] sm:$0xff]
    %v2192 = vld [vmem:[%s7 + $0x1d0] sm:$0xff]
    %v2193 = vld [vmem:[%s7 + $0x1d8] sm:$0xff]
    %v2194 = vsub.f32 %v2188, %v1900
    %v2195 = vsub.f32 %v2189, %v1901
    %v2196 = vsub.f32 %v2190, %v1902
    %v2197 = vsub.f32 %v2191, %v1903
    %v2198 = vsub.f32 %v2192, %v1904
    %v2199 = vsub.f32 %v2193, %v1905
    %v2200 = vmul.f32 %v2194, 1.442695
    %v2201 = vpow.pop %v2200
    %v2202 = vmul.f32 %v2195, 1.442695
    %v2203 = vpow.pop %v2202
    %v2204 = vmul.f32 %v2196, 1.442695
    %v2205 = vpow.pop %v2204
    %v2206 = vmul.f32 %v2197, 1.442695
    %v2207 = vpow.pop %v2206
    %v2208 = vmul.f32 %v2198, 1.442695
    %v2209 = vpow.pop %v2208
    %v2210 = vmul.f32 %v2199, 1.442695
    %v2211 = vpow.pop %v2210
    %2212 = vst [vmem:[%s7 + $0xc0] sm:$0xff] %v2201
    %2213 = vst [vmem:[%s7 + $0xc8] sm:$0xff] %v2203
    %2214 = vst [vmem:[%s7 + $0xd0] sm:$0xff] %v2205
    %2215 = vst [vmem:[%s7 + $0x1c8] sm:$0xff] %v2207
    %2216 = vst [vmem:[%s7 + $0x1d0] sm:$0xff] %v2209
    %2217 = vst [vmem:[%s7 + $0x1d8] sm:$0xff] %v2211
    %v2218 = vadd.f32 %v2182, %v2201
    %v2219 = vadd.f32 %v2183, %v2203
    %v2220 = vadd.f32 %v2184, %v2205
    %v2221 = vadd.f32 %v2185, %v2207
    %v2222 = vadd.f32 %v2186, %v2209
    %v2223 = vadd.f32 %v2187, %v2211
    %v2224 = vld [vmem:[%s7 + $0xd8] sm:$0xff]
    %v2225 = vld [vmem:[%s7 + $0xe0] sm:$0xff]
    %v2226 = vld [vmem:[%s7 + $0xe8] sm:$0xff]
    %v2227 = vld [vmem:[%s7 + $0x1e0] sm:$0xff]
    %v2228 = vld [vmem:[%s7 + $0x1e8] sm:$0xff]
    %v2229 = vld [vmem:[%s7 + $0x1f0] sm:$0xff]
    %v2230 = vsub.f32 %v2224, %v1900
    %v2231 = vsub.f32 %v2225, %v1901
    %v2232 = vsub.f32 %v2226, %v1902
    %v2233 = vsub.f32 %v2227, %v1903
    %v2234 = vsub.f32 %v2228, %v1904
    %v2235 = vsub.f32 %v2229, %v1905
    %v2236 = vmul.f32 %v2230, 1.442695
    %v2237 = vpow.pop %v2236
    %v2238 = vmul.f32 %v2231, 1.442695
    %v2239 = vpow.pop %v2238
    %v2240 = vmul.f32 %v2232, 1.442695
    %v2241 = vpow.pop %v2240
    %v2242 = vmul.f32 %v2233, 1.442695
    %v2243 = vpow.pop %v2242
    %v2244 = vmul.f32 %v2234, 1.442695
    %v2245 = vpow.pop %v2244
    %v2246 = vmul.f32 %v2235, 1.442695
    %v2247 = vpow.pop %v2246
    %2248 = vst [vmem:[%s7 + $0xd8] sm:$0xff] %v2237
    %2249 = vst [vmem:[%s7 + $0xe0] sm:$0xff] %v2239
    %2250 = vst [vmem:[%s7 + $0xe8] sm:$0xff] %v2241
    %2251 = vst [vmem:[%s7 + $0x1e0] sm:$0xff] %v2243
    %2252 = vst [vmem:[%s7 + $0x1e8] sm:$0xff] %v2245
    %2253 = vst [vmem:[%s7 + $0x1f0] sm:$0xff] %v2247
    %v2254 = vadd.f32 %v2218, %v2237
    %v2255 = vadd.f32 %v2219, %v2239
    %v2256 = vadd.f32 %v2220, %v2241
    %v2257 = vadd.f32 %v2221, %v2243
    %v2258 = vadd.f32 %v2222, %v2245
    %v2259 = vadd.f32 %v2223, %v2247
    %v2260 = vld [vmem:[%s7 + $0xf0] sm:$0xff]
    %v2261 = vld [vmem:[%s7 + $0xf8] sm:$0xff]
    %v2262 = vld [vmem:[%s7 + $0x100] sm:$0xff]
    %v2263 = vld [vmem:[%s7 + $0x1f8] sm:$0xff]
    %v2264 = vld [vmem:[%s7 + $0x200] sm:$0xff]
    %v2265 = vld [vmem:[%s7 + $0x208] sm:$0xff]
    %v2266 = vsub.f32 %v2260, %v1900
    %v2267 = vsub.f32 %v2261, %v1901
    %v2268 = vsub.f32 %v2262, %v1902
    %v2269 = vsub.f32 %v2263, %v1903
    %v2270 = vsub.f32 %v2264, %v1904
    %v2271 = vsub.f32 %v2265, %v1905
    %v2272 = vmul.f32 %v2266, 1.442695
    %v2273 = vpow.pop %v2272
    %v2274 = vmul.f32 %v2267, 1.442695
    %v2275 = vpow.pop %v2274
    %v2276 = vmul.f32 %v2268, 1.442695
    %v2277 = vpow.pop %v2276
    %v2278 = vmul.f32 %v2269, 1.442695
    %v2279 = vpow.pop %v2278
    %v2280 = vmul.f32 %v2270, 1.442695
    %v2281 = vpow.pop %v2280
    %v2282 = vmul.f32 %v2271, 1.442695
    %v2283 = vpow.pop %v2282
    %2284 = vst [vmem:[%s7 + $0xf0] sm:$0xff] %v2273
    %2285 = vst [vmem:[%s7 + $0xf8] sm:$0xff] %v2275
    %2286 = vst [vmem:[%s7 + $0x100] sm:$0xff] %v2277
    %2287 = vst [vmem:[%s7 + $0x1f8] sm:$0xff] %v2279
    %2288 = vst [vmem:[%s7 + $0x200] sm:$0xff] %v2281
    %2289 = vst [vmem:[%s7 + $0x208] sm:$0xff] %v2283
    %v2290 = vadd.f32 %v2254, %v2273
    %v2291 = vadd.f32 %v2255, %v2275
    %v2292 = vadd.f32 %v2256, %v2277
    %v2293 = vadd.f32 %v2257, %v2279
    %v2294 = vadd.f32 %v2258, %v2281
    %v2295 = vadd.f32 %v2259, %v2283
    %v2296 = vrcp.pop %v2290
    %v2297 = vrcp.pop %v2291
    %v2298 = vrcp.pop %v2292
    %v2299 = vrcp.pop %v2293
    %v2300 = vrcp.pop %v2294
    %v2301 = vrcp.pop %v2295
    %v2302 = vmul.f32 %v2290, %v2296
    %v2303 = vmul.f32 %v2291, %v2297
    %v2304 = vmul.f32 %v2292, %v2298
    %v2305 = vmul.f32 %v2293, %v2299
    %v2306 = vmul.f32 %v2294, %v2300
    %v2307 = vmul.f32 %v2295, %v2301
    %v2308 = vsub.f32 2.0, %v2302
    %v2309 = vsub.f32 2.0, %v2303
    %v2310 = vsub.f32 2.0, %v2304
    %v2311 = vsub.f32 2.0, %v2305
    %v2312 = vsub.f32 2.0, %v2306
    %v2313 = vsub.f32 2.0, %v2307
    %v2314 = vmul.f32 %v2296, %v2308
    %v2315 = vmul.f32 %v2297, %v2309
    %v2316 = vmul.f32 %v2298, %v2310
    %v2317 = vmul.f32 %v2299, %v2311
    %v2318 = vmul.f32 %v2300, %v2312
    %v2319 = vmul.f32 %v2301, %v2313
    %v2320 = vld [vmem:[%s7] sm:$0xff]
    %v2321 = vld [vmem:[%s7 + $0x8] sm:$0xff]
    %v2322 = vld [vmem:[%s7 + $0x10] sm:$0xff]
    %v2323 = vld [vmem:[%s7 + $0x108] sm:$0xff]
    %v2324 = vld [vmem:[%s7 + $0x110] sm:$0xff]
    %v2325 = vld [vmem:[%s7 + $0x118] sm:$0xff]
    %v2326 = vmul.f32 %v2320, %v2314
    %v2327 = vmul.f32 %v2321, %v2315
    %v2328 = vmul.f32 %v2322, %v2316
    %v2329 = vmul.f32 %v2323, %v2317
    %v2330 = vmul.f32 %v2324, %v2318
    %v2331 = vmul.f32 %v2325, %v2319
    %2332 = vst [vmem:[%s7] sm:$0xff] %v2326
    %2333 = vst [vmem:[%s7 + $0x8] sm:$0xff] %v2327
    %2334 = vst [vmem:[%s7 + $0x10] sm:$0xff] %v2328
    %2335 = vst [vmem:[%s7 + $0x108] sm:$0xff] %v2329
    %2336 = vst [vmem:[%s7 + $0x110] sm:$0xff] %v2330
    %2337 = vst [vmem:[%s7 + $0x118] sm:$0xff] %v2331
    %v2338 = vld [vmem:[%s7 + $0x18] sm:$0xff]
    %v2339 = vld [vmem:[%s7 + $0x20] sm:$0xff]
    %v2340 = vld [vmem:[%s7 + $0x28] sm:$0xff]
    %v2341 = vld [vmem:[%s7 + $0x120] sm:$0xff]
    %v2342 = vld [vmem:[%s7 + $0x128] sm:$0xff]
    %v2343 = vld [vmem:[%s7 + $0x130] sm:$0xff]
    %v2344 = vmul.f32 %v2338, %v2314
    %v2345 = vmul.f32 %v2339, %v2315
    %v2346 = vmul.f32 %v2340, %v2316
    %v2347 = vmul.f32 %v2341, %v2317
    %v2348 = vmul.f32 %v2342, %v2318
    %v2349 = vmul.f32 %v2343, %v2319
    %2350 = vst [vmem:[%s7 + $0x18] sm:$0xff] %v2344
    %2351 = vst [vmem:[%s7 + $0x20] sm:$0xff] %v2345
    %2352 = vst [vmem:[%s7 + $0x28] sm:$0xff] %v2346
    %2353 = vst [vmem:[%s7 + $0x120] sm:$0xff] %v2347
    %2354 = vst [vmem:[%s7 + $0x128] sm:$0xff] %v2348
    %2355 = vst [vmem:[%s7 + $0x130] sm:$0xff] %v2349
    %v2356 = vld [vmem:[%s7 + $0x30] sm:$0xff]
    %v2357 = vld [vmem:[%s7 + $0x38] sm:$0xff]
    %v2358 = vld [vmem:[%s7 + $0x40] sm:$0xff]
    %v2359 = vld [vmem:[%s7 + $0x138] sm:$0xff]
    %v2360 = vld [vmem:[%s7 + $0x140] sm:$0xff]
    %v2361 = vld [vmem:[%s7 + $0x148] sm:$0xff]
    %v2362 = vmul.f32 %v2356, %v2314
    %v2363 = vmul.f32 %v2357, %v2315
    %v2364 = vmul.f32 %v2358, %v2316
    %v2365 = vmul.f32 %v2359, %v2317
    %v2366 = vmul.f32 %v2360, %v2318
    %v2367 = vmul.f32 %v2361, %v2319
    %2368 = vst [vmem:[%s7 + $0x30] sm:$0xff] %v2362
    %2369 = vst [vmem:[%s7 + $0x38] sm:$0xff] %v2363
    %2370 = vst [vmem:[%s7 + $0x40] sm:$0xff] %v2364
    %2371 = vst [vmem:[%s7 + $0x138] sm:$0xff] %v2365
    %2372 = vst [vmem:[%s7 + $0x140] sm:$0xff] %v2366
    %2373 = vst [vmem:[%s7 + $0x148] sm:$0xff] %v2367
    %v2374 = vld [vmem:[%s7 + $0x48] sm:$0xff]
    %v2375 = vld [vmem:[%s7 + $0x50] sm:$0xff]
    %v2376 = vld [vmem:[%s7 + $0x58] sm:$0xff]
    %v2377 = vld [vmem:[%s7 + $0x150] sm:$0xff]
    %v2378 = vld [vmem:[%s7 + $0x158] sm:$0xff]
    %v2379 = vld [vmem:[%s7 + $0x160] sm:$0xff]
    %v2380 = vmul.f32 %v2374, %v2314
    %v2381 = vmul.f32 %v2375, %v2315
    %v2382 = vmul.f32 %v2376, %v2316
    %v2383 = vmul.f32 %v2377, %v2317
    %v2384 = vmul.f32 %v2378, %v2318
    %v2385 = vmul.f32 %v2379, %v2319
    %2386 = vst [vmem:[%s7 + $0x48] sm:$0xff] %v2380
    %2387 = vst [vmem:[%s7 + $0x50] sm:$0xff] %v2381
    %2388 = vst [vmem:[%s7 + $0x58] sm:$0xff] %v2382
    %2389 = vst [vmem:[%s7 + $0x150] sm:$0xff] %v2383
    %2390 = vst [vmem:[%s7 + $0x158] sm:$0xff] %v2384
    %2391 = vst [vmem:[%s7 + $0x160] sm:$0xff] %v2385
    %v2392 = vld [vmem:[%s7 + $0x60] sm:$0xff]
    %v2393 = vld [vmem:[%s7 + $0x68] sm:$0xff]
    %v2394 = vld [vmem:[%s7 + $0x70] sm:$0xff]
    %v2395 = vld [vmem:[%s7 + $0x168] sm:$0xff]
    %v2396 = vld [vmem:[%s7 + $0x170] sm:$0xff]
    %v2397 = vld [vmem:[%s7 + $0x178] sm:$0xff]
    %v2398 = vmul.f32 %v2392, %v2314
    %v2399 = vmul.f32 %v2393, %v2315
    %v2400 = vmul.f32 %v2394, %v2316
    %v2401 = vmul.f32 %v2395, %v2317
    %v2402 = vmul.f32 %v2396, %v2318
    %v2403 = vmul.f32 %v2397, %v2319
    %2404 = vst [vmem:[%s7 + $0x60] sm:$0xff] %v2398
    %2405 = vst [vmem:[%s7 + $0x68] sm:$0xff] %v2399
    %2406 = vst [vmem:[%s7 + $0x70] sm:$0xff] %v2400
    %2407 = vst [vmem:[%s7 + $0x168] sm:$0xff] %v2401
    %2408 = vst [vmem:[%s7 + $0x170] sm:$0xff] %v2402
    %2409 = vst [vmem:[%s7 + $0x178] sm:$0xff] %v2403
    %v2410 = vld [vmem:[%s7 + $0x78] sm:$0xff]
    %v2411 = vld [vmem:[%s7 + $0x80] sm:$0xff]
    %v2412 = vld [vmem:[%s7 + $0x88] sm:$0xff]
    %v2413 = vld [vmem:[%s7 + $0x180] sm:$0xff]
    %v2414 = vld [vmem:[%s7 + $0x188] sm:$0xff]
    %v2415 = vld [vmem:[%s7 + $0x190] sm:$0xff]
    %v2416 = vmul.f32 %v2410, %v2314
    %v2417 = vmul.f32 %v2411, %v2315
    %v2418 = vmul.f32 %v2412, %v2316
    %v2419 = vmul.f32 %v2413, %v2317
    %v2420 = vmul.f32 %v2414, %v2318
    %v2421 = vmul.f32 %v2415, %v2319
    %2422 = vst [vmem:[%s7 + $0x78] sm:$0xff] %v2416
    %2423 = vst [vmem:[%s7 + $0x80] sm:$0xff] %v2417
    %2424 = vst [vmem:[%s7 + $0x88] sm:$0xff] %v2418
    %2425 = vst [vmem:[%s7 + $0x180] sm:$0xff] %v2419
    %2426 = vst [vmem:[%s7 + $0x188] sm:$0xff] %v2420
    %2427 = vst [vmem:[%s7 + $0x190] sm:$0xff] %v2421
    %v2428 = vld [vmem:[%s7 + $0x90] sm:$0xff]
    %v2429 = vld [vmem:[%s7 + $0x98] sm:$0xff]
    %v2430 = vld [vmem:[%s7 + $0xa0] sm:$0xff]
    %v2431 = vld [vmem:[%s7 + $0x198] sm:$0xff]
    %v2432 = vld [vmem:[%s7 + $0x1a0] sm:$0xff]
    %v2433 = vld [vmem:[%s7 + $0x1a8] sm:$0xff]
    %v2434 = vmul.f32 %v2428, %v2314
    %v2435 = vmul.f32 %v2429, %v2315
    %v2436 = vmul.f32 %v2430, %v2316
    %v2437 = vmul.f32 %v2431, %v2317
    %v2438 = vmul.f32 %v2432, %v2318
    %v2439 = vmul.f32 %v2433, %v2319
    %2440 = vst [vmem:[%s7 + $0x90] sm:$0xff] %v2434
    %2441 = vst [vmem:[%s7 + $0x98] sm:$0xff] %v2435
    %2442 = vst [vmem:[%s7 + $0xa0] sm:$0xff] %v2436
    %2443 = vst [vmem:[%s7 + $0x198] sm:$0xff] %v2437
    %2444 = vst [vmem:[%s7 + $0x1a0] sm:$0xff] %v2438
    %2445 = vst [vmem:[%s7 + $0x1a8] sm:$0xff] %v2439
    %v2446 = vld [vmem:[%s7 + $0xa8] sm:$0xff]
    %v2447 = vld [vmem:[%s7 + $0xb0] sm:$0xff]
    %v2448 = vld [vmem:[%s7 + $0xb8] sm:$0xff]
    %v2449 = vld [vmem:[%s7 + $0x1b0] sm:$0xff]
    %v2450 = vld [vmem:[%s7 + $0x1b8] sm:$0xff]
    %v2451 = vld [vmem:[%s7 + $0x1c0] sm:$0xff]
    %v2452 = vmul.f32 %v2446, %v2314
    %v2453 = vmul.f32 %v2447, %v2315
    %v2454 = vmul.f32 %v2448, %v2316
    %v2455 = vmul.f32 %v2449, %v2317
    %v2456 = vmul.f32 %v2450, %v2318
    %v2457 = vmul.f32 %v2451, %v2319
    %2458 = vst [vmem:[%s7 + $0xa8] sm:$0xff] %v2452
    %2459 = vst [vmem:[%s7 + $0xb0] sm:$0xff] %v2453
    %2460 = vst [vmem:[%s7 + $0xb8] sm:$0xff] %v2454
    %2461 = vst [vmem:[%s7 + $0x1b0] sm:$0xff] %v2455
    %2462 = vst [vmem:[%s7 + $0x1b8] sm:$0xff] %v2456
    %2463 = vst [vmem:[%s7 + $0x1c0] sm:$0xff] %v2457
    %v2464 = vld [vmem:[%s7 + $0xc0] sm:$0xff]
    %v2465 = vld [vmem:[%s7 + $0xc8] sm:$0xff]
    %v2466 = vld [vmem:[%s7 + $0xd0] sm:$0xff]
    %v2467 = vld [vmem:[%s7 + $0x1c8] sm:$0xff]
    %v2468 = vld [vmem:[%s7 + $0x1d0] sm:$0xff]
    %v2469 = vld [vmem:[%s7 + $0x1d8] sm:$0xff]
    %v2470 = vmul.f32 %v2464, %v2314
    %v2471 = vmul.f32 %v2465, %v2315
    %v2472 = vmul.f32 %v2466, %v2316
    %v2473 = vmul.f32 %v2467, %v2317
    %v2474 = vmul.f32 %v2468, %v2318
    %v2475 = vmul.f32 %v2469, %v2319
    %2476 = vst [vmem:[%s7 + $0xc0] sm:$0xff] %v2470
    %2477 = vst [vmem:[%s7 + $0xc8] sm:$0xff] %v2471
    %2478 = vst [vmem:[%s7 + $0xd0] sm:$0xff] %v2472
    %2479 = vst [vmem:[%s7 + $0x1c8] sm:$0xff] %v2473
    %2480 = vst [vmem:[%s7 + $0x1d0] sm:$0xff] %v2474
    %2481 = vst [vmem:[%s7 + $0x1d8] sm:$0xff] %v2475
    %v2482 = vld [vmem:[%s7 + $0xd8] sm:$0xff]
    %v2483 = vld [vmem:[%s7 + $0xe0] sm:$0xff]
    %v2484 = vld [vmem:[%s7 + $0xe8] sm:$0xff]
    %v2485 = vld [vmem:[%s7 + $0x1e0] sm:$0xff]
    %v2486 = vld [vmem:[%s7 + $0x1e8] sm:$0xff]
    %v2487 = vld [vmem:[%s7 + $0x1f0] sm:$0xff]
    %v2488 = vmul.f32 %v2482, %v2314
    %v2489 = vmul.f32 %v2483, %v2315
    %v2490 = vmul.f32 %v2484, %v2316
    %v2491 = vmul.f32 %v2485, %v2317
    %v2492 = vmul.f32 %v2486, %v2318
    %v2493 = vmul.f32 %v2487, %v2319
    %2494 = vst [vmem:[%s7 + $0xd8] sm:$0xff] %v2488
    %2495 = vst [vmem:[%s7 + $0xe0] sm:$0xff] %v2489
    %2496 = vst [vmem:[%s7 + $0xe8] sm:$0xff] %v2490
    %2497 = vst [vmem:[%s7 + $0x1e0] sm:$0xff] %v2491
    %2498 = vst [vmem:[%s7 + $0x1e8] sm:$0xff] %v2492
    %2499 = vst [vmem:[%s7 + $0x1f0] sm:$0xff] %v2493
    %v2500 = vld [vmem:[%s7 + $0xf0] sm:$0xff]
    %v2501 = vld [vmem:[%s7 + $0xf8] sm:$0xff]
    %v2502 = vld [vmem:[%s7 + $0x100] sm:$0xff]
    %v2503 = vld [vmem:[%s7 + $0x1f8] sm:$0xff]
    %v2504 = vld [vmem:[%s7 + $0x200] sm:$0xff]
    %v2505 = vld [vmem:[%s7 + $0x208] sm:$0xff]
    %v2506 = vmul.f32 %v2500, %v2314
    %v2507 = vmul.f32 %v2501, %v2315
    %v2508 = vmul.f32 %v2502, %v2316
    %v2509 = vmul.f32 %v2503, %v2317
    %v2510 = vmul.f32 %v2504, %v2318
    %v2511 = vmul.f32 %v2505, %v2319
    %2512 = vst [vmem:[%s7 + $0xf0] sm:$0xff] %v2506
    %2513 = vst [vmem:[%s7 + $0xf8] sm:$0xff] %v2507
    %2514 = vst [vmem:[%s7 + $0x100] sm:$0xff] %v2508
    %2515 = vst [vmem:[%s7 + $0x1f8] sm:$0xff] %v2509
    %2516 = vst [vmem:[%s7 + $0x200] sm:$0xff] %v2510
    %2517 = vst [vmem:[%s7 + $0x208] sm:$0xff] %v2511
    // Predicated region
    $region50: #{_forward.1} parent=1 // pred_check
      _
    $region51: #{_forward.1} parent=1 // pred_check_branch
      %2519 = sbr.rel (0) target = $region53
    $region52: #{_forward.1} parent=1 // pred_region
      _
    $region53: #{_forward.1} parent=1 // pred_fallthru
      _
    // Predicated region
    $region54: #{_forward.1} parent=1 // pred_check
      _
    $region55: #{_forward.1} parent=1 // pred_check_branch
      %2521 = sbr.rel (0) target = $region57
    $region56: #{_forward.1} parent=1 // pred_region
      _
    $region57: #{_forward.1} parent=1 // pred_fallthru
      _
    %2522 = vsyncpa [#allocation3], 1
    %2523 = vsyncpa [#allocation5], 1
    %2524 = vsyncpa [#allocation8], 1

// kernel: _forward.1
$region0: #{_forward.1}
  #allocation0 [shape = 'u32[]', space=smem, size = 0x4, offset = 0x4, fixed_abs, tag = 'smem constant byte address 0x4 - core index']
  #allocation1 [shape = 'u32[144,128]{1,0:T(1,128)}', space=vmem, size = 0x12000, scoped, tag = 'internal scratch']
  %s0 = inlined_call_operand.vmem [shape: f32[16,16], index: 0, kind: input, shape index: {}]
  %s1 = inlined_call_operand.hbm [shape: bf16[16,32], index: 1, kind: input, shape index: {}]
  %s2 = inlined_call_operand.hbm [shape: f32[1,32], index: 2, kind: input, shape index: {}]
  %s3 = inlined_call_operand.hbm [shape: bf16[32,32], index: 3, kind: input, shape index: {}]
  %s4 = inlined_call_operand.hbm [shape: f32[1,32], index: 4, kind: input, shape index: {}]
  %s5 = inlined_call_operand.vmem [shape: bf16[32,4224], index: 5, kind: input, shape index: {}]
  %s6 = inlined_call_operand.hbm [shape: f32[1,4224], index: 6, kind: input, shape index: {}]
  %s7 = inlined_call_operand.vmem [shape: f32[16,4224], index: 7, kind: output, shape index: {}]
  %s8 = sld [smem:[#allocation0]]
  $region58: #{_forward.1} parent=0
    _
  %s10 = ssub.s32 1, %s8
  %s11 = scalar_select 0, %s10, %s8
  $region1: #{_forward.1} parent=0
    #allocation2 [shape = 'u8[4096]{0}', space=vmem, size = 0x1000, scoped, tag = 'input window, operand 1, single buffered']
    #allocation3 [shape = 's32[1]{0}', space=sflag, size = 0x4, scoped, tag = 'scoped memory for _forward.1']
    #allocation4 [shape = 'u8[512]{0}', space=vmem, size = 0x400, scoped, tag = 'input window, operand 2, single buffered']
    #allocation5 [shape = 's32[1]{0}', space=sflag, size = 0x4, scoped, tag = 'scoped memory for _forward.1']
    #allocation6 [shape = 'u8[8192]{0}', space=vmem, size = 0x2000, scoped, tag = 'input window, operand 3, single buffered']
    #allocation7 [shape = 'u8[512]{0}', space=vmem, size = 0x400, scoped, tag = 'input window, operand 4, single buffered']
    #allocation8 [shape = 's32[1]{0}', space=sflag, size = 0x4, scoped, tag = 'scoped memory for _forward.1']
    #allocation9 [shape = 'u8[16896]{0}', space=vmem, size = 0x4400, scoped, tag = 'input window, operand 6, single buffered']
    %12 = vsyncpa [#allocation3], 0
    %13 = vsyncpa [#allocation5], 0
    %14 = vsyncpa [#allocation8], 0
    // Predicated region
    $region2: #{_forward.1} parent=1 // pred_check
      _
    $region3: #{_forward.1} parent=1 // pred_check_branch
      %16 = sbr.rel (0) target = $region5
    $region4: #{_forward.1} parent=1 // pred_region
      _
    $region5: #{_forward.1} parent=1 // pred_fallthru
      _
    // Predicated region
    $region6: #{_forward.1} parent=1 // pred_check
      _
    $region7: #{_forward.1} parent=1 // pred_check_branch
      %18 = sbr.rel (0) target = $region9
    $region8: #{_forward.1} parent=1 // pred_region
      %s20 = ssub.s32 128, 128
      %21 = vsyncadd [#allocation3], %s20
      %s22 = sshll.u32 [#allocation2], 4
      %s23 = int_to_ptr.vmem [resolvable:$true] %s22
      %28 = dma.hbm_to_vmem [thread:$0]  %s1, 128, %s23, [#allocation3], 64, 64, 4
    $region9: #{_forward.1} parent=1 // pred_fallthru
      _
    // Predicated region
    $region10: #{_forward.1} parent=1 // pred_check
      _
    $region11: #{_forward.1} parent=1 // pred_check_branch
      %30 = sbr.rel (0) target = $region13
    $region12: #{_forward.1} parent=1 // pred_region
      %s32 = ssub.s32 16, 16
      %33 = vsyncadd [#allocation5], %s32
      %s35 = sshll.u32 [#allocation4], 4
      %s36 = int_to_ptr.vmem [resolvable:$true] %s35
      %38 = dma.hbm_to_vmem [thread:$0]  %s2, 16, %s36, [#allocation5]
    $region13: #{_forward.1} parent=1 // pred_fallthru
      _
    // Predicated region
    $region14: #{_forward.1} parent=1 // pred_check
      _
    $region15: #{_forward.1} parent=1 // pred_check_branch
      %40 = sbr.rel (0) target = $region17
    $region16: #{_forward.1} parent=1 // pred_region
      %s42 = ssub.s32 256, 256
      %43 = vsyncadd [#allocation5], %s42
      %s44 = sshll.u32 [#allocation6], 4
      %s45 = int_to_ptr.vmem [resolvable:$true] %s44
      %50 = dma.hbm_to_vmem [thread:$0]  %s3, 256, %s45, [#allocation5], 64, 64, 4
    $region17: #{_forward.1} parent=1 // pred_fallthru
      _
    // Predicated region
    $region18: #{_forward.1} parent=1 // pred_check
      _
    $region19: #{_forward.1} parent=1 // pred_check_branch
      %52 = sbr.rel (0) target = $region21
    $region20: #{_forward.1} parent=1 // pred_region
      %s54 = ssub.s32 16, 16
      %55 = vsyncadd [#allocation8], %s54
      %s57 = sshll.u32 [#allocation7], 4
      %s58 = int_to_ptr.vmem [resolvable:$true] %s57
      %60 = dma.hbm_to_vmem [thread:$0]  %s4, 16, %s58, [#allocation8]
    $region21: #{_forward.1} parent=1 // pred_fallthru
      _
    // Predicated region
    $region22: #{_forward.1} parent=1 // pred_check
      _
    $region23: #{_forward.1} parent=1 // pred_check_branch
      %62 = sbr.rel (0) target = $region25
    $region24: #{_forward.1} parent=1 // pred_region
      _
    $region25: #{_forward.1} parent=1 // pred_fallthru
      _
    // Predicated region
    $region26: #{_forward.1} parent=1 // pred_check
      _
    $region27: #{_forward.1} parent=1 // pred_check_branch
      %64 = sbr.rel (0) target = $region29
    $region28: #{_forward.1} parent=1 // pred_region
      %s66 = ssub.s32 528, 528
      %67 = vsyncadd [#allocation8], %s66
      %s69 = sshll.u32 [#allocation9], 4
      %s70 = int_to_ptr.vmem [resolvable:$true] %s69
      %72 = dma.hbm_to_vmem [thread:$0]  %s6, 528, %s70, [#allocation8]
    $region29: #{_forward.1} parent=1 // pred_fallthru
      _
    // Predicated region
    $region30: #{_forward.1} parent=1 // pred_check
      _
    $region31: #{_forward.1} parent=1 // pred_check_branch
      %74 = sbr.rel (0) target = $region33
    $region32: #{_forward.1} parent=1 // pred_region
      %75 = dma.done [#allocation3], 128
    $region33: #{_forward.1} parent=1 // pred_fallthru
      _
    // Predicated region
    $region34: #{_forward.1} parent=1 // pred_check
      _
    $region35: #{_forward.1} parent=1 // pred_check_branch
      %77 = sbr.rel (0) target = $region37
    $region36: #{_forward.1} parent=1 // pred_region
      %78 = dma.done [#allocation5], 16
    $region37: #{_forward.1} parent=1 // pred_fallthru
      _
    // Predicated region
    $region38: #{_forward.1} parent=1 // pred_check
      _
    $region39: #{_forward.1} parent=1 // pred_check_branch
      %80 = sbr.rel (0) target = $region41
    $region40: #{_forward.1} parent=1 // pred_region
      %81 = dma.done [#allocation5], 256
    $region41: #{_forward.1} parent=1 // pred_fallthru
      _
    // Predicated region
    $region42: #{_forward.1} parent=1 // pred_check
      _
    $region43: #{_forward.1} parent=1 // pred_check_branch
      %83 = sbr.rel (0) target = $region45
    $region44: #{_forward.1} parent=1 // pred_region
      %84 = dma.done [#allocation8], 16
    $region45: #{_forward.1} parent=1 // pred_fallthru
      _
    // Predicated region
    $region46: #{_forward.1} parent=1 // pred_check
      _
    $region47: #{_forward.1} parent=1 // pred_check_branch
      %86 = sbr.rel (0) target = $region49
    $region48: #{_forward.1} parent=1 // pred_region
      %87 = dma.done [#allocation8], 528
    $region49: #{_forward.1} parent=1 // pred_fallthru
      _
    %v89 = vld [vmem:[%s0] sm:$0xff]
    %v90 = vld [vmem:[%s0 + $0x8] sm:$0xff]
    %v91 = vpack.c.bf16 %v90, %v89
    %v92 = vld [vmem:[#allocation2] sm:$0xf]
    %v93 = vld [vmem:[#allocation2 + $0x4] sm:$0xf]
    %v94 = vld [vmem:[#allocation4] sm:$0x1]
    %v96 = vlaneseq
    %v97 = vshrl.u32 %v96, 7
    %v98 = vsub.s32 0, %v97
    %v99 = vrot.slane %v94, %v98
    %v103 = vunpack.c.l.b16 %v92
    %v104 = vunpack.c.l.b16 %v93
    %v105 = vpack.c.b16 %v104, %v103
    %vm107 = vcmask 130048
    %v109 = vsel %vm107, %v91, 0
    %111 = vmatprep.subr.bf16.mxu0 0
    %112 = vmatpush1.bf16.msra.mxu0 %v105
    %113 = vmatprep.subr.bf16.mxu0 0
    %114 = vmatpush1.bf16.msra.mxu0 0
    %115 = vmatprep.subr.bf16.mxu0 0
    %116 = vmatpush1.bf16.msra.mxu0 0
    %117 = vmatprep.subr.bf16.mxu0 0
    %118 = vmatpush1.bf16.msra.mxu0 0
    %119 = vmatprep.subr.bf16.mxu0 0
    %120 = vmatpush1.bf16.msra.mxu0 0
    %121 = vmatprep.subr.bf16.mxu0 0
    %122 = vmatpush1.bf16.msra.mxu0 0
    %123 = vmatprep.subr.bf16.mxu0 0
    %124 = vmatpush1.bf16.msra.mxu0 0
    %125 = vmatprep.subr.bf16.mxu0 0
    %126 = vmatpush1.bf16.msra.mxu0 0
    %127 = vmatprep.subr.bf16.mxu0 0
    %128 = vmatpush1.bf16.msra.mxu0 0
    %129 = vmatprep.subr.bf16.mxu0 0
    %130 = vmatpush1.bf16.msra.mxu0 0
    %131 = vmatprep.subr.bf16.mxu0 0
    %132 = vmatpush1.bf16.msra.mxu0 0
    %133 = vmatprep.subr.bf16.mxu0 0
    %134 = vmatpush1.bf16.msra.mxu0 0
    %135 = vmatprep.subr.bf16.mxu0 0
    %136 = vmatpush1.bf16.msra.mxu0 0
    %137 = vmatprep.subr.bf16.mxu0 0
    %138 = vmatpush1.bf16.msra.mxu0 0
    %139 = vmatprep.subr.bf16.mxu0 0
    %140 = vmatpush1.bf16.msra.mxu0 0
    %141 = vmatprep.subr.bf16.mxu0 0
    %142 = vmatpush1.bf16.msra.mxu0 0
    %143 = vmatprep.mubr.bf16.mxu0 0
    %144 = vmatmul.mubr.bf16.gmra.mrb[0].mxu0 %v109
    %v145 = vpop.f32.mrb[0].mxu0
    %v146 = vadd.f32 %v99, %v145
    %v147 = vpop.f32.mrb[0].mxu0
    %v148 = vpop.f32.mrb[0].mxu0
    %v149 = vadd.f32 %v99, %v148
    %v150 = vpop.f32.mrb[0].mxu0
    %151 = vdwg.mxu0
    %v152 = vmax.f32 %v146, 0.0
    %v153 = vmax.f32 %v149, 0.0
    %v154 = vpack.c.bf16 %v153, %v152
    %v155 = vld [vmem:[#allocation6] sm:$0xf]
    %v156 = vld [vmem:[#allocation6 + $0x4] sm:$0xf]
    %v157 = vld [vmem:[#allocation6 + $0x8] sm:$0xf]
    %v158 = vld [vmem:[#allocation6 + $0xc] sm:$0xf]
    %v159 = vld [vmem:[#allocation7] sm:$0x1]
    %v161 = vlaneseq
    %v162 = vshrl.u32 %v161, 7
    %v163 = vsub.s32 0, %v162
    %v164 = vrot.slane %v159, %v163
    %v170 = vunpack.c.l.b16 %v155
    %v171 = vunpack.c.l.b16 %v156
    %v172 = vunpack.c.l.b16 %v157
    %v173 = vunpack.c.l.b16 %v158
    %v174 = vpack.c.b16 %v171, %v170
    %v175 = vpack.c.b16 %v173, %v172
    %vm178 = vcmask 261120
    %v180 = vsel %vm178, %v154, 0
    %182 = vmatprep.subr.bf16.mxu0 0
    %183 = vmatpush1.bf16.msra.mxu0 %v174
    %184 = vmatprep.subr.bf16.mxu0 0
    %185 = vmatpush1.bf16.msra.mxu0 %v175
    %186 = vmatprep.subr.bf16.mxu0 0
    %187 = vmatpush1.bf16.msra.mxu0 0
    %188 = vmatprep.subr.bf16.mxu0 0
    %189 = vmatpush1.bf16.msra.mxu0 0
    %190 = vmatprep.subr.bf16.mxu0 0
    %191 = vmatpush1.bf16.msra.mxu0 0
    %192 = vmatprep.subr.bf16.mxu0 0
    %193 = vmatpush1.bf16.msra.mxu0 0
    %194 = vmatprep.subr.bf16.mxu0 0
    %195 = vmatpush1.bf16.msra.mxu0 0
    %196 = vmatprep.subr.bf16.mxu0 0
    %197 = vmatpush1.bf16.msra.mxu0 0
    %198 = vmatprep.subr.bf16.mxu0 0
    %199 = vmatpush1.bf16.msra.mxu0 0
    %200 = vmatprep.subr.bf16.mxu0 0
    %201 = vmatpush1.bf16.msra.mxu0 0
    %202 = vmatprep.subr.bf16.mxu0 0
    %203 = vmatpush1.bf16.msra.mxu0 0
    %204 = vmatprep.subr.bf16.mxu0 0
    %205 = vmatpush1.bf16.msra.mxu0 0
    %206 = vmatprep.subr.bf16.mxu0 0
    %207 = vmatpush1.bf16.msra.mxu0 0
    %208 = vmatprep.subr.bf16.mxu0 0
    %209 = vmatpush1.bf16.msra.mxu0 0
    %210 = vmatprep.subr.bf16.mxu0 0
    %211 = vmatpush1.bf16.msra.mxu0 0
    %212 = vmatprep.subr.bf16.mxu0 0
    %213 = vmatpush1.bf16.msra.mxu0 0
    %214 = vmatprep.mubr.bf16.mxu0 0
    %215 = vmatmul.mubr.bf16.gmra.mrb[0].mxu0 %v180
    %v216 = vpop.f32.mrb[0].mxu0
    %v217 = vadd.f32 %v164, %v216
    %v218 = vpop.f32.mrb[0].mxu0
    %v219 = vpop.f32.mrb[0].mxu0
    %v220 = vadd.f32 %v164, %v219
    %v221 = vpop.f32.mrb[0].mxu0
    %222 = vdwg.mxu0
    %v223 = vmax.f32 %v217, 0.0
    %v224 = vmax.f32 %v220, 0.0
    %v225 = vpack.c.bf16 %v224, %v223
    %v226 = vld [vmem:[%s5] sm:$0xff]
    %v227 = vld [vmem:[%s5 + $0x8] sm:$0xf]
    %v228 = vld [vmem:[%s5 + $0x84] sm:$0xff]
    %v229 = vld [vmem:[%s5 + $0x8c] sm:$0xf]
    %v230 = vld [vmem:[%s5 + $0x108] sm:$0xff]
    %v231 = vld [vmem:[%s5 + $0x110] sm:$0xf]
    %v232 = vld [vmem:[%s5 + $0x18c] sm:$0xff]
    %v233 = vld [vmem:[%s5 + $0x194] sm:$0xf]
    %v234 = vld [vmem:[#allocation9] sm:$0x7]
    %v236 = vlaneseq
    %v237 = vshrl.u32 %v236, 7
    %v238 = vsub.s32 0, %v237
    %v239 = vrot.slane %v234, %v238
    %v240 = vlaneseq
    %v241 = vshrl.u32 %v240, 7
    %v242 = vsub.s32 1, %v241
    %v243 = vrot.slane %v234, %v242
    %v244 = vlaneseq
    %v245 = vshrl.u32 %v244, 7
    %v246 = vsub.s32 2, %v245
    %v247 = vrot.slane %v234, %v246
    %v259 = vunpack.c.l.b16 %v226
    %v260 = vunpack.c.h.b16 %v226
    %v261 = vunpack.c.l.b16 %v227
    %v262 = vunpack.c.l.b16 %v228
    %v263 = vunpack.c.h.b16 %v228
    %v264 = vunpack.c.l.b16 %v229
    %v265 = vunpack.c.l.b16 %v230
    %v266 = vunpack.c.h.b16 %v230
    %v267 = vunpack.c.l.b16 %v231
    %v268 = vunpack.c.l.b16 %v232
    %v269 = vunpack.c.h.b16 %v232
    %v270 = vunpack.c.l.b16 %v233
    %v271 = vpack.c.b16 %v262, %v259
    %v272 = vpack.c.b16 %v263, %v260
    %v273 = vpack.c.b16 %v264, %v261
    %v274 = vpack.c.b16 %v268, %v265
    %v275 = vpack.c.b16 %v269, %v266
    %v276 = vpack.c.b16 %v270, %v267
    %v284 = vsel %vm178, %v225, 0
    %286 = vmatprep.subr.bf16.mxu0 %v272
    %287 = vmatpush1.bf16.msra.mxu0 %v271
    %288 = vmatprep.subr.bf16.mxu0 %v275
    %289 = vmatpush1.bf16.msra.mxu0 %v274
    %290 = vmatprep.subr.bf16.mxu0 0
    %291 = vmatpush1.bf16.msra.mxu0 0
    %292 = vmatprep.subr.bf16.mxu0 0
    %293 = vmatpush1.bf16.msra.mxu0 0
    %294 = vmatprep.subr.bf16.mxu0 0
    %295 = vmatpush1.bf16.msra.mxu0 0
    %296 = vmatprep.subr.bf16.mxu0 0
    %297 = vmatpush1.bf16.msra.mxu0 0
    %298 = vmatprep.subr.bf16.mxu0 0
    %299 = vmatpush1.bf16.msra.mxu0 0
    %300 = vmatprep.subr.bf16.mxu0 0
    %301 = vmatpush1.bf16.msra.mxu0 0
    %302 = vmatprep.subr.bf16.mxu0 0
    %303 = vmatpush1.bf16.msra.mxu0 0
    %304 = vmatprep.subr.bf16.mxu0 0
    %305 = vmatpush1.bf16.msra.mxu0 0
    %306 = vmatprep.subr.bf16.mxu0 0
    %307 = vmatpush1.bf16.msra.mxu0 0
    %308 = vmatprep.subr.bf16.mxu0 0
    %309 = vmatpush1.bf16.msra.mxu0 0
    %310 = vmatprep.subr.bf16.mxu0 0
    %311 = vmatpush1.bf16.msra.mxu0 0
    %312 = vmatprep.subr.bf16.mxu0 0
    %313 = vmatpush1.bf16.msra.mxu0 0
    %314 = vmatprep.subr.bf16.mxu0 0
    %315 = vmatpush1.bf16.msra.mxu0 0
    %316 = vmatprep.subr.bf16.mxu0 0
    %317 = vmatpush1.bf16.msra.mxu0 0
    %318 = vmatprep.mubr.bf16.mxu0 0
    %319 = vmatmul.mubr.bf16.gmra.mrb[0].mxu0 %v284
    %v320 = vpop.f32.mrb[0].mxu0
    %v321 = vadd.f32 %v239, %v320
    %v322 = vpop.f32.mrb[0].mxu0
    %v323 = vadd.f32 %v243, %v322
    %v324 = vpop.f32.mrb[0].mxu0
    %v325 = vadd.f32 %v239, %v324
    %v326 = vpop.f32.mrb[0].mxu0
    %v327 = vadd.f32 %v243, %v326
    %328 = vdwg.mxu0
    %329 = vmatprep.subr.bf16.mxu0 0
    %330 = vmatpush1.bf16.msra.mxu0 %v273
    %331 = vmatprep.subr.bf16.mxu0 0
    %332 = vmatpush1.bf16.msra.mxu0 %v276
    %333 = vmatprep.subr.bf16.mxu0 0
    %334 = vmatpush1.bf16.msra.mxu0 0
    %335 = vmatprep.subr.bf16.mxu0 0
    %336 = vmatpush1.bf16.msra.mxu0 0
    %337 = vmatprep.subr.bf16.mxu0 0
    %338 = vmatpush1.bf16.msra.mxu0 0
    %339 = vmatprep.subr.bf16.mxu0 0
    %340 = vmatpush1.bf16.msra.mxu0 0
    %341 = vmatprep.subr.bf16.mxu0 0
    %342 = vmatpush1.bf16.msra.mxu0 0
    %343 = vmatprep.subr.bf16.mxu0 0
    %344 = vmatpush1.bf16.msra.mxu0 0
    %345 = vmatprep.subr.bf16.mxu0 0
    %346 = vmatpush1.bf16.msra.mxu0 0
    %347 = vmatprep.subr.bf16.mxu0 0
    %348 = vmatpush1.bf16.msra.mxu0 0
    %349 = vmatprep.subr.bf16.mxu0 0
    %350 = vmatpush1.bf16.msra.mxu0 0
    %351 = vmatprep.subr.bf16.mxu0 0
    %352 = vmatpush1.bf16.msra.mxu0 0
    %353 = vmatprep.subr.bf16.mxu0 0
    %354 = vmatpush1.bf16.msra.mxu0 0
    %355 = vmatprep.subr.bf16.mxu0 0
    %356 = vmatpush1.bf16.msra.mxu0 0
    %357 = vmatprep.subr.bf16.mxu0 0
    %358 = vmatpush1.bf16.msra.mxu0 0
    %359 = vmatprep.subr.bf16.mxu0 0
    %360 = vmatpush1.bf16.msra.mxu0 0
    %361 = vmatprep.mubr.bf16.mxu0 0
    %362 = vmatmul.mubr.bf16.gmra.mrb[0].mxu0 %v284
    %v363 = vpop.f32.mrb[0].mxu0
    %v364 = vadd.f32 %v247, %v363
    %v365 = vpop.f32.mrb[0].mxu0
    %v366 = vpop.f32.mrb[0].mxu0
    %v367 = vadd.f32 %v247, %v366
    %v368 = vpop.f32.mrb[0].mxu0
    %369 = vdwg.mxu0
    %370 = vst [vmem:[%s7] sm:$0xff] %v321
    %371 = vst [vmem:[%s7 + $0x8] sm:$0xff] %v323
    %372 = vst [vmem:[%s7 + $0x10] sm:$0xff] %v364
    %373 = vst [vmem:[%s7 + $0x108] sm:$0xff] %v325
    %374 = vst [vmem:[%s7 + $0x110] sm:$0xff] %v327
    %375 = vst [vmem:[%s7 + $0x118] sm:$0xff] %v367
    %v376 = vld [vmem:[%s5 + $0xc] sm:$0xff]
    %v377 = vld [vmem:[%s5 + $0x14] sm:$0xf]
    %v378 = vld [vmem:[%s5 + $0x90] sm:$0xff]
    %v379 = vld [vmem:[%s5 + $0x98] sm:$0xf]
    %v380 = vld [vmem:[%s5 + $0x114] sm:$0xff]
    %v381 = vld [vmem:[%s5 + $0x11c] sm:$0xf]
    %v382 = vld [vmem:[%s5 + $0x198] sm:$0xff]
    %v383 = vld [vmem:[%s5 + $0x1a0] sm:$0xf]
    %v384 = vld [vmem:[#allocation9 + $0x3] sm:$0x7]
    %v386 = vlaneseq
    %v387 = vshrl.u32 %v386, 7
    %v388 = vsub.s32 0, %v387
    %v389 = vrot.slane %v384, %v388
    %v390 = vlaneseq
    %v391 = vshrl.u32 %v390, 7
    %v392 = vsub.s32 1, %v391
    %v393 = vrot.slane %v384, %v392
    %v394 = vlaneseq
    %v395 = vshrl.u32 %v394, 7
    %v396 = vsub.s32 2, %v395
    %v397 = vrot.slane %v384, %v396
    %v409 = vunpack.c.l.b16 %v376
    %v410 = vunpack.c.h.b16 %v376
    %v411 = vunpack.c.l.b16 %v377
    %v412 = vunpack.c.l.b16 %v378
    %v413 = vunpack.c.h.b16 %v378
    %v414 = vunpack.c.l.b16 %v379
    %v415 = vunpack.c.l.b16 %v380
    %v416 = vunpack.c.h.b16 %v380
    %v417 = vunpack.c.l.b16 %v381
    %v418 = vunpack.c.l.b16 %v382
    %v419 = vunpack.c.h.b16 %v382
    %v420 = vunpack.c.l.b16 %v383
    %v421 = vpack.c.b16 %v412, %v409
    %v422 = vpack.c.b16 %v413, %v410
    %v423 = vpack.c.b16 %v414, %v411
    %v424 = vpack.c.b16 %v418, %v415
    %v425 = vpack.c.b16 %v419, %v416
    %v426 = vpack.c.b16 %v420, %v417
    %433 = vmatprep.subr.bf16.mxu0 %v422
    %434 = vmatpush1.bf16.msra.mxu0 %v421
    %435 = vmatprep.subr.bf16.mxu0 %v425
    %436 = vmatpush1.bf16.msra.mxu0 %v424
    %437 = vmatprep.subr.bf16.mxu0 0
    %438 = vmatpush1.bf16.msra.mxu0 0
    %439 = vmatprep.subr.bf16.mxu0 0
    %440 = vmatpush1.bf16.msra.mxu0 0
    %441 = vmatprep.subr.bf16.mxu0 0
    %442 = vmatpush1.bf16.msra.mxu0 0
    %443 = vmatprep.subr.bf16.mxu0 0
    %444 = vmatpush1.bf16.msra.mxu0 0
    %445 = vmatprep.subr.bf16.mxu0 0
    %446 = vmatpush1.bf16.msra.mxu0 0
    %447 = vmatprep.subr.bf16.mxu0 0
    %448 = vmatpush1.bf16.msra.mxu0 0
    %449 = vmatprep.subr.bf16.mxu0 0
    %450 = vmatpush1.bf16.msra.mxu0 0
    %451 = vmatprep.subr.bf16.mxu0 0
    %452 = vmatpush1.bf16.msra.mxu0 0
    %453 = vmatprep.subr.bf16.mxu0 0
    %454 = vmatpush1.bf16.msra.mxu0 0
    %455 = vmatprep.subr.bf16.mxu0 0
    %456 = vmatpush1.bf16.msra.mxu0 0
    %457 = vmatprep.subr.bf16.mxu0 0
    %458 = vmatpush1.bf16.msra.mxu0 0
    %459 = vmatprep.subr.bf16.mxu0 0
    %460 = vmatpush1.bf16.msra.mxu0 0
    %461 = vmatprep.subr.bf16.mxu0 0
    %462 = vmatpush1.bf16.msra.mxu0 0
    %463 = vmatprep.subr.bf16.mxu0 0
    %464 = vmatpush1.bf16.msra.mxu0 0
    %465 = vmatprep.mubr.bf16.mxu0 0
    %466 = vmatmul.mubr.bf16.gmra.mrb[0].mxu0 %v284
    %v467 = vpop.f32.mrb[0].mxu0
    %v468 = vadd.f32 %v389, %v467
    %v469 = vpop.f32.mrb[0].mxu0
    %v470 = vadd.f32 %v393, %v469
    %v471 = vpop.f32.mrb[0].mxu0
    %v472 = vadd.f32 %v389, %v471
    %v473 = vpop.f32.mrb[0].mxu0
    %v474 = vadd.f32 %v393, %v473
    %475 = vdwg.mxu0
    %476 = vmatprep.subr.bf16.mxu0 0
    %477 = vmatpush1.bf16.msra.mxu0 %v423
    %478 = vmatprep.subr.bf16.mxu0 0
    %479 = vmatpush1.bf16.msra.mxu0 %v426
    %480 = vmatprep.subr.bf16.mxu0 0
    %481 = vmatpush1.bf16.msra.mxu0 0
    %482 = vmatprep.subr.bf16.mxu0 0
    %483 = vmatpush1.bf16.msra.mxu0 0
    %484 = vmatprep.subr.bf16.mxu0 0
    %485 = vmatpush1.bf16.msra.mxu0 0
    %486 = vmatprep.subr.bf16.mxu0 0
    %487 = vmatpush1.bf16.msra.mxu0 0
    %488 = vmatprep.subr.bf16.mxu0 0
    %489 = vmatpush1.bf16.msra.mxu0 0
    %490 = vmatprep.subr.bf16.mxu0 0
    %491 = vmatpush1.bf16.msra.mxu0 0
    %492 = vmatprep.subr.bf16.mxu0 0
    %493 = vmatpush1.bf16.msra.mxu0 0
    %494 = vmatprep.subr.bf16.mxu0 0
    %495 = vmatpush1.bf16.msra.mxu0 0
    %496 = vmatprep.subr.bf16.mxu0 0
    %497 = vmatpush1.bf16.msra.mxu0 0
    %498 = vmatprep.subr.bf16.mxu0 0
    %499 = vmatpush1.bf16.msra.mxu0 0
    %500 = vmatprep.subr.bf16.mxu0 0
    %501 = vmatpush1.bf16.msra.mxu0 0
    %502 = vmatprep.subr.bf16.mxu0 0
    %503 = vmatpush1.bf16.msra.mxu0 0
    %504 = vmatprep.subr.bf16.mxu0 0
    %505 = vmatpush1.bf16.msra.mxu0 0
    %506 = vmatprep.subr.bf16.mxu0 0
    %507 = vmatpush1.bf16.msra.mxu0 0
    %508 = vmatprep.mubr.bf16.mxu0 0
    %509 = vmatmul.mubr.bf16.gmra.mrb[0].mxu0 %v284
    %v510 = vpop.f32.mrb[0].mxu0
    %v511 = vadd.f32 %v397, %v510
    %v512 = vpop.f32.mrb[0].mxu0
    %v513 = vpop.f32.mrb[0].mxu0
    %v514 = vadd.f32 %v397, %v513
    %v515 = vpop.f32.mrb[0].mxu0
    %516 = vdwg.mxu0
    %517 = vst [vmem:[%s7 + $0x18] sm:$0xff] %v468
    %518 = vst [vmem:[%s7 + $0x20] sm:$0xff] %v470
    %519 = vst [vmem:[%s7 + $0x28] sm:$0xff] %v511
    %520 = vst [vmem:[%s7 + $0x120] sm:$0xff] %v472
    %521 = vst [vmem:[%s7 + $0x128] sm:$0xff] %v474
    %522 = vst [vmem:[%s7 + $0x130] sm:$0xff] %v514
    %v523 = vmax.f32 %v321, %v468
    %v524 = vmax.f32 %v323, %v470
    %v525 = vmax.f32 %v364, %v511
    %v526 = vmax.f32 %v325, %v472
    %v527 = vmax.f32 %v327, %v474
    %v528 = vmax.f32 %v367, %v514
    %v529 = vld [vmem:[%s5 + $0x18] sm:$0xff]
    %v530 = vld [vmem:[%s5 + $0x20] sm:$0xf]
    %v531 = vld [vmem:[%s5 + $0x9c] sm:$0xff]
    %v532 = vld [vmem:[%s5 + $0xa4] sm:$0xf]
    %v533 = vld [vmem:[%s5 + $0x120] sm:$0xff]
    %v534 = vld [vmem:[%s5 + $0x128] sm:$0xf]
    %v535 = vld [vmem:[%s5 + $0x1a4] sm:$0xff]
    %v536 = vld [vmem:[%s5 + $0x1ac] sm:$0xf]
    %v537 = vld [vmem:[#allocation9 + $0x6] sm:$0x7]
    %v539 = vlaneseq
    %v540 = vshrl.u32 %v539, 7
    %v541 = vsub.s32 0, %v540
    %v542 = vrot.slane %v537, %v541
    %v543 = vlaneseq
    %v544 = vshrl.u32 %v543, 7
    %v545 = vsub.s32 1, %v544
    %v546 = vrot.slane %v537, %v545
    %v547 = vlaneseq
    %v548 = vshrl.u32 %v547, 7
    %v549 = vsub.s32 2, %v548
    %v550 = vrot.slane %v537, %v549
    %v562 = vunpack.c.l.b16 %v529
    %v563 = vunpack.c.h.b16 %v529
    %v564 = vunpack.c.l.b16 %v530
    %v565 = vunpack.c.l.b16 %v531
    %v566 = vunpack.c.h.b16 %v531
    %v567 = vunpack.c.l.b16 %v532
    %v568 = vunpack.c.l.b16 %v533
    %v569 = vunpack.c.h.b16 %v533
    %v570 = vunpack.c.l.b16 %v534
    %v571 = vunpack.c.l.b16 %v535
    %v572 = vunpack.c.h.b16 %v535
    %v573 = vunpack.c.l.b16 %v536
    %v574 = vpack.c.b16 %v565, %v562
    %v575 = vpack.c.b16 %v566, %v563
    %v576 = vpack.c.b16 %v567, %v564
    %v577 = vpack.c.b16 %v571, %v568
    %v578 = vpack.c.b16 %v572, %v569
    %v579 = vpack.c.b16 %v573, %v570
    %586 = vmatprep.subr.bf16.mxu0 %v575
    %587 = vmatpush1.bf16.msra.mxu0 %v574
    %588 = vmatprep.subr.bf16.mxu0 %v578
    %589 = vmatpush1.bf16.msra.mxu0 %v577
    %590 = vmatprep.subr.bf16.mxu0 0
    %591 = vmatpush1.bf16.msra.mxu0 0
    %592 = vmatprep.subr.bf16.mxu0 0
    %593 = vmatpush1.bf16.msra.mxu0 0
    %594 = vmatprep.subr.bf16.mxu0 0
    %595 = vmatpush1.bf16.msra.mxu0 0
    %596 = vmatprep.subr.bf16.mxu0 0
    %597 = vmatpush1.bf16.msra.mxu0 0
    %598 = vmatprep.subr.bf16.mxu0 0
    %599 = vmatpush1.bf16.msra.mxu0 0
    %600 = vmatprep.subr.bf16.mxu0 0
    %601 = vmatpush1.bf16.msra.mxu0 0
    %602 = vmatprep.subr.bf16.mxu0 0
    %603 = vmatpush1.bf16.msra.mxu0 0
    %604 = vmatprep.subr.bf16.mxu0 0
    %605 = vmatpush1.bf16.msra.mxu0 0
    %606 = vmatprep.subr.bf16.mxu0 0
    %607 = vmatpush1.bf16.msra.mxu0 0
    %608 = vmatprep.subr.bf16.mxu0 0
    %609 = vmatpush1.bf16.msra.mxu0 0
    %610 = vmatprep.subr.bf16.mxu0 0
    %611 = vmatpush1.bf16.msra.mxu0 0
    %612 = vmatprep.subr.bf16.mxu0 0
    %613 = vmatpush1.bf16.msra.mxu0 0
    %614 = vmatprep.subr.bf16.mxu0 0
    %615 = vmatpush1.bf16.msra.mxu0 0
    %616 = vmatprep.subr.bf16.mxu0 0
    %617 = vmatpush1.bf16.msra.mxu0 0
    %618 = vmatprep.mubr.bf16.mxu0 0
    %619 = vmatmul.mubr.bf16.gmra.mrb[0].mxu0 %v284
    %v620 = vpop.f32.mrb[0].mxu0
    %v621 = vadd.f32 %v542, %v620
    %v622 = vpop.f32.mrb[0].mxu0
    %v623 = vadd.f32 %v546, %v622
    %v624 = vpop.f32.mrb[0].mxu0
    %v625 = vadd.f32 %v542, %v624
    %v626 = vpop.f32.mrb[0].mxu0
    %v627 = vadd.f32 %v546, %v626
    %628 = vdwg.mxu0
    %629 = vmatprep.subr.bf16.mxu0 0
    %630 = vmatpush1.bf16.msra.mxu0 %v576
    %631 = vmatprep.subr.bf16.mxu0 0
    %632 = vmatpush1.bf16.msra.mxu0 %v579
    %633 = vmatprep.subr.bf16.mxu0 0
    %634 = vmatpush1.bf16.msra.mxu0 0
    %635 = vmatprep.subr.bf16.mxu0 0
    %636 = vmatpush1.bf16.msra.mxu0 0
    %637 = vmatprep.subr.bf16.mxu0 0
    %638 = vmatpush1.bf16.msra.mxu0 0
    %639 = vmatprep.subr.bf16.mxu0 0
    %640 = vmatpush1.bf16.msra.mxu0 0
    %641 = vmatprep.subr.bf16.mxu0 0
    %642 = vmatpush1.bf16.msra.mxu0 0
    %643 = vmatprep.subr.bf16.mxu0 0
    %644 = vmatpush1.bf16.msra.mxu0 0
    %645 = vmatprep.subr.bf16.mxu0 0
    %646 = vmatpush1.bf16.msra.mxu0 0
    %647 = vmatprep.subr.bf16.mxu0 0
    %648 = vmatpush1.bf16.msra.mxu0 0
    %649 = vmatprep.subr.bf16.mxu0 0
    %650 = vmatpush1.bf16.msra.mxu0 0
    %651 = vmatprep.subr.bf16.mxu0 0
    %652 = vmatpush1.bf16.msra.mxu0 0
    %653 = vmatprep.subr.bf16.mxu0 0
    %654 = vmatpush1.bf16.msra.mxu0 0
    %655 = vmatprep.subr.bf16.mxu0 0
    %656 = vmatpush1.bf16.msra.mxu0 0
    %657 = vmatprep.subr.bf16.mxu0 0
    %658 = vmatpush1.bf16.msra.mxu0 0
    %659 = vmatprep.subr.bf16.mxu0 0
    %660 = vmatpush1.bf16.msra.mxu0 0
    %661 = vmatprep.mubr.bf16.mxu0 0
    %662 = vmatmul.mubr.bf16.gmra.mrb[0].mxu0 %v284
    %v663 = vpop.f32.mrb[0].mxu0
    %v664 = vadd.f32 %v550, %v663
    %v665 = vpop.f32.mrb[0].mxu0
    %v666 = vpop.f32.mrb[0].mxu0
    %v667 = vadd.f32 %v550, %v666
    %v668 = vpop.f32.mrb[0].mxu0
    %669 = vdwg.mxu0
    %670 = vst [vmem:[%s7 + $0x30] sm:$0xff] %v621
    %671 = vst [vmem:[%s7 + $0x38] sm:$0xff] %v623
    %672 = vst [vmem:[%s7 + $0x40] sm:$0xff] %v664
    %673 = vst [vmem:[%s7 + $0x138] sm:$0xff] %v625
    %674 = vst [vmem:[%s7 + $0x140] sm:$0xff] %v627
    %675 = vst [vmem:[%s7 + $0x148] sm:$0xff] %v667
    %v676 = vmax.f32 %v523, %v621
    %v677 = vmax.f32 %v524, %v623
    %v678 = vmax.f32 %v525, %v664
    %v679 = vmax.f32 %v526, %v625
    %v680 = vmax.f32 %v527, %v627
    %v681 = vmax.f32 %v528, %v667
    %v682 = vld [vmem:[%s5 + $0x24] sm:$0xff]
    %v683 = vld [vmem:[%s5 + $0x2c] sm:$0xf]
    %v684 = vld [vmem:[%s5 + $0xa8] sm:$0xff]
    %v685 = vld [vmem:[%s5 + $0xb0] sm:$0xf]
    %v686 = vld [vmem:[%s5 + $0x12c] sm:$0xff]
    %v687 = vld [vmem:[%s5 + $0x134] sm:$0xf]
    %v688 = vld [vmem:[%s5 + $0x1b0] sm:$0xff]
    %v689 = vld [vmem:[%s5 + $0x1b8] sm:$0xf]
    %v690 = vld [vmem:[#allocation9 + $0x9] sm:$0x7]
    %v692 = vlaneseq
    %v693 = vshrl.u32 %v692, 7
    %v694 = vsub.s32 0, %v693
    %v695 = vrot.slane %v690, %v694
    %v696 = vlaneseq
    %v697 = vshrl.u32 %v696, 7
    %v698 = vsub.s32 1, %v697
    %v699 = vrot.slane %v690, %v698
    %v700 = vlaneseq
    %v701 = vshrl.u32 %v700, 7
    %v702 = vsub.s32 2, %v701
    %v703 = vrot.slane %v690, %v702
    %v715 = vunpack.c.l.b16 %v682
    %v716 = vunpack.c.h.b16 %v682
    %v717 = vunpack.c.l.b16 %v683
    %v718 = vunpack.c.l.b16 %v684
    %v719 = vunpack.c.h.b16 %v684
    %v720 = vunpack.c.l.b16 %v685
    %v721 = vunpack.c.l.b16 %v686
    %v722 = vunpack.c.h.b16 %v686
    %v723 = vunpack.c.l.b16 %v687
    %v724 = vunpack.c.l.b16 %v688
    %v725 = vunpack.c.h.b16 %v688
    %v726 = vunpack.c.l.b16 %v689
    %v727 = vpack.c.b16 %v718, %v715
    %v728 = vpack.c.b16 %v719, %v716
    %v729 = vpack.c.b16 %v720, %v717
    %v730 = vpack.c.b16 %v724, %v721
    %v731 = vpack.c.b16 %v725, %v722
    %v732 = vpack.c.b16 %v726, %v723
    %739 = vmatprep.subr.bf16.mxu0 %v728
    %740 = vmatpush1.bf16.msra.mxu0 %v727
    %741 = vmatprep.subr.bf16.mxu0 %v731
    %742 = vmatpush1.bf16.msra.mxu0 %v730
    %743 = vmatprep.subr.bf16.mxu0 0
    %744 = vmatpush1.bf16.msra.mxu0 0
    %745 = vmatprep.subr.bf16.mxu0 0
    %746 = vmatpush1.bf16.msra.mxu0 0
    %747 = vmatprep.subr.bf16.mxu0 0
    %748 = vmatpush1.bf16.msra.mxu0 0
    %749 = vmatprep.subr.bf16.mxu0 0
    %750 = vmatpush1.bf16.msra.mxu0 0
    %751 = vmatprep.subr.bf16.mxu0 0
    %752 = vmatpush1.bf16.msra.mxu0 0
    %753 = vmatprep.subr.bf16.mxu0 0
    %754 = vmatpush1.bf16.msra.mxu0 0
    %755 = vmatprep.subr.bf16.mxu0 0
    %756 = vmatpush1.bf16.msra.mxu0 0
    %757 = vmatprep.subr.bf16.mxu0 0
    %758 = vmatpush1.bf16.msra.mxu0 0
    %759 = vmatprep.subr.bf16.mxu0 0
    %760 = vmatpush1.bf16.msra.mxu0 0
    %761 = vmatprep.subr.bf16.mxu0 0
    %762 = vmatpush1.bf16.msra.mxu0 0
    %763 = vmatprep.subr.bf16.mxu0 0
    %764 = vmatpush1.bf16.msra.mxu0 0
    %765 = vmatprep.subr.bf16.mxu0 0
    %766 = vmatpush1.bf16.msra.mxu0 0
    %767 = vmatprep.subr.bf16.mxu0 0
    %768 = vmatpush1.bf16.msra.mxu0 0
    %769 = vmatprep.subr.bf16.mxu0 0
    %770 = vmatpush1.bf16.msra.mxu0 0
    %771 = vmatprep.mubr.bf16.mxu0 0
    %772 = vmatmul.mubr.bf16.gmra.mrb[0].mxu0 %v284
    %v773 = vpop.f32.mrb[0].mxu0
    %v774 = vadd.f32 %v695, %v773
    %v775 = vpop.f32.mrb[0].mxu0
    %v776 = vadd.f32 %v699, %v775
    %v777 = vpop.f32.mrb[0].mxu0
    %v778 = vadd.f32 %v695, %v777
    %v779 = vpop.f32.mrb[0].mxu0
    %v780 = vadd.f32 %v699, %v779
    %781 = vdwg.mxu0
    %782 = vmatprep.subr.bf16.mxu0 0
    %783 = vmatpush1.bf16.msra.mxu0 %v729
    %784 = vmatprep.subr.bf16.mxu0 0
    %785 = vmatpush1.bf16.msra.mxu0 %v732
    %786 = vmatprep.subr.bf16.mxu0 0
    %787 = vmatpush1.bf16.msra.mxu0 0
    %788 = vmatprep.subr.bf16.mxu0 0
    %789 = vmatpush1.bf16.msra.mxu0 0
    %790 = vmatprep.subr.bf16.mxu0 0
    %791 = vmatpush1.bf16.msra.mxu0 0
    %792 = vmatprep.subr.bf16.mxu0 0
    %793 = vmatpush1.bf16.msra.mxu0 0
    %794 = vmatprep.subr.bf16.mxu0 0
    %795 = vmatpush1.bf16.msra.mxu0 0
    %796 = vmatprep.subr.bf16.mxu0 0
    %797 = vmatpush1.bf16.msra.mxu0 0
    %798 = vmatprep.subr.bf16.mxu0 0
    %799 = vmatpush1.bf16.msra.mxu0 0
    %800 = vmatprep.subr.bf16.mxu0 0
    %801 = vmatpush1.bf16.msra.mxu0 0
    %802 = vmatprep.subr.bf16.mxu0 0
    %803 = vmatpush1.bf16.msra.mxu0 0
    %804 = vmatprep.subr.bf16.mxu0 0
    %805 = vmatpush1.bf16.msra.mxu0 0
    %806 = vmatprep.subr.bf16.mxu0 0
    %807 = vmatpush1.bf16.msra.mxu0 0
    %808 = vmatprep.subr.bf16.mxu0 0
    %809 = vmatpush1.bf16.msra.mxu0 0
    %810 = vmatprep.subr.bf16.mxu0 0
    %811 = vmatpush1.bf16.msra.mxu0 0
    %812 = vmatprep.subr.bf16.mxu0 0
    %813 = vmatpush1.bf16.msra.mxu0 0
    %814 = vmatprep.mubr.bf16.mxu0 0
    %815 = vmatmul.mubr.bf16.gmra.mrb[0].mxu0 %v284
    %v816 = vpop.f32.mrb[0].mxu0
    %v817 = vadd.f32 %v703, %v816
    %v818 = vpop.f32.mrb[0].mxu0
    %v819 = vpop.f32.mrb[0].mxu0
    %v820 = vadd.f32 %v703, %v819
    %v821 = vpop.f32.mrb[0].mxu0
    %822 = vdwg.mxu0
    %823 = vst [vmem:[%s7 + $0x48] sm:$0xff] %v774
    %824 = vst [vmem:[%s7 + $0x50] sm:$0xff] %v776
    %825 = vst [vmem:[%s7 + $0x58] sm:$0xff] %v817
    %826 = vst [vmem:[%s7 + $0x150] sm:$0xff] %v778
    %827 = vst [vmem:[%s7 + $0x158] sm:$0xff] %v780
    %828 = vst [vmem:[%s7 + $0x160] sm:$0xff] %v820
    %v829 = vmax.f32 %v676, %v774
    %v830 = vmax.f32 %v677, %v776
    %v831 = vmax.f32 %v678, %v817
    %v832 = vmax.f32 %v679, %v778
    %v833 = vmax.f32 %v680, %v780
    %v834 = vmax.f32 %v681, %v820
    %v835 = vld [vmem:[%s5 + $0x30] sm:$0xff]
    %v836 = vld [vmem:[%s5 + $0x38] sm:$0xf]
    %v837 = vld [vmem:[%s5 + $0xb4] sm:$0xff]
    %v838 = vld [vmem:[%s5 + $0xbc] sm:$0xf]
    %v839 = vld [vmem:[%s5 + $0x138] sm:$0xff]
    %v840 = vld [vmem:[%s5 + $0x140] sm:$0xf]
    %v841 = vld [vmem:[%s5 + $0x1bc] sm:$0xff]
    %v842 = vld [vmem:[%s5 + $0x1c4] sm:$0xf]
    %v843 = vld [vmem:[#allocation9 + $0xc] sm:$0x7]
    %v845 = vlaneseq
    %v846 = vshrl.u32 %v845, 7
    %v847 = vsub.s32 0, %v846
    %v848 = vrot.slane %v843, %v847
    %v849 = vlaneseq
    %v850 = vshrl.u32 %v849, 7
    %v851 = vsub.s32 1, %v850
    %v852 = vrot.slane %v843, %v851
    %v853 = vlaneseq
    %v854 = vshrl.u32 %v853, 7
    %v855 = vsub.s32 2, %v854
    %v856 = vrot.slane %v843, %v855
    %v868 = vunpack.c.l.b16 %v835
    %v869 = vunpack.c.h.b16 %v835
    %v870 = vunpack.c.l.b16 %v836
    %v871 = vunpack.c.l.b16 %v837
    %v872 = vunpack.c.h.b16 %v837
    %v873 = vunpack.c.l.b16 %v838
    %v874 = vunpack.c.l.b16 %v839
    %v875 = vunpack.c.h.b16 %v839
    %v876 = vunpack.c.l.b16 %v840
    %v877 = vunpack.c.l.b16 %v841
    %v878 = vunpack.c.h.b16 %v841
    %v879 = vunpack.c.l.b16 %v842
    %v880 = vpack.c.b16 %v871, %v868
    %v881 = vpack.c.b16 %v872, %v869
    %v882 = vpack.c.b16 %v873, %v870
    %v883 = vpack.c.b16 %v877, %v874
    %v884 = vpack.c.b16 %v878, %v875
    %v885 = vpack.c.b16 %v879, %v876
    %892 = vmatprep.subr.bf16.mxu0 %v881
    %893 = vmatpush1.bf16.msra.mxu0 %v880
    %894 = vmatprep.subr.bf16.mxu0 %v884
    %895 = vmatpush1.bf16.msra.mxu0 %v883
    %896 = vmatprep.subr.bf16.mxu0 0
    %897 = vmatpush1.bf16.msra.mxu0 0
    %898 = vmatprep.subr.bf16.mxu0 0
    %899 = vmatpush1.bf16.msra.mxu0 0
    %900 = vmatprep.subr.bf16.mxu0 0
    %901 = vmatpush1.bf16.msra.mxu0 0
    %902 = vmatprep.subr.bf16.mxu0 0
    %903 = vmatpush1.bf16.msra.mxu0 0
    %904 = vmatprep.subr.bf16.mxu0 0
    %905 = vmatpush1.bf16.msra.mxu0 0
    %906 = vmatprep.subr.bf16.mxu0 0
    %907 = vmatpush1.bf16.msra.mxu0 0
    %908 = vmatprep.subr.bf16.mxu0 0
    %909 = vmatpush1.bf16.msra.mxu0 0
    %910 = vmatprep.subr.bf16.mxu0 0
    %911 = vmatpush1.bf16.msra.mxu0 0
    %912 = vmatprep.subr.bf16.mxu0 0
    %913 = vmatpush1.bf16.msra.mxu0 0
    %914 = vmatprep.subr.bf16.mxu0 0
    %915 = vmatpush1.bf16.msra.mxu0 0
    %916 = vmatprep.subr.bf16.mxu0 0
    %917 = vmatpush1.bf16.msra.mxu0 0
    %918 = vmatprep.subr.bf16.mxu0 0
    %919 = vmatpush1.bf16.msra.mxu0 0
    %920 = vmatprep.subr.bf16.mxu0 0
    %921 = vmatpush1.bf16.msra.mxu0 0
    %922 = vmatprep.subr.bf16.mxu0 0
    %923 = vmatpush1.bf16.msra.mxu0 0
    %924 = vmatprep.mubr.bf16.mxu0 0
    %925 = vmatmul.mubr.bf16.gmra.mrb[0].mxu0 %v284
    %v926 = vpop.f32.mrb[0].mxu0
    %v927 = vadd.f32 %v848, %v926
    %v928 = vpop.f32.mrb[0].mxu0
    %v929 = vadd.f32 %v852, %v928
    %v930 = vpop.f32.mrb[0].mxu0
    %v931 = vadd.f32 %v848, %v930
    %v932 = vpop.f32.mrb[0].mxu0
    %v933 = vadd.f32 %v852, %v932
    %934 = vdwg.mxu0
    %935 = vmatprep.subr.bf16.mxu0 0
    %936 = vmatpush1.bf16.msra.mxu0 %v882
    %937 = vmatprep.subr.bf16.mxu0 0
    %938 = vmatpush1.bf16.msra.mxu0 %v885
    %939 = vmatprep.subr.bf16.mxu0 0
    %940 = vmatpush1.bf16.msra.mxu0 0
    %941 = vmatprep.subr.bf16.mxu0 0
    %942 = vmatpush1.bf16.msra.mxu0 0
    %943 = vmatprep.subr.bf16.mxu0 0
    %944 = vmatpush1.bf16.msra.mxu0 0
    %945 = vmatprep.subr.bf16.mxu0 0
    %946 = vmatpush1.bf16.msra.mxu0 0
    %947 = vmatprep.subr.bf16.mxu0 0
    %948 = vmatpush1.bf16.msra.mxu0 0
    %949 = vmatprep.subr.bf16.mxu0 0
    %950 = vmatpush1.bf16.msra.mxu0 0
    %951 = vmatprep.subr.bf16.mxu0 0
    %952 = vmatpush1.bf16.msra.mxu0 0
    %953 = vmatprep.subr.bf16.mxu0 0
    %954 = vmatpush1.bf16.msra.mxu0 0
    %955 = vmatprep.subr.bf16.mxu0 0
    %956 = vmatpush1.bf16.msra.mxu0 0
    %957 = vmatprep.subr.bf16.mxu0 0
    %958 = vmatpush1.bf16.msra.mxu0 0
    %959 = vmatprep.subr.bf16.mxu0 0
    %960 = vmatpush1.bf16.msra.mxu0 0
    %961 = vmatprep.subr.bf16.mxu0 0
    %962 = vmatpush1.bf16.msra.mxu0 0
    %963 = vmatprep.subr.bf16.mxu0 0
    %964 = vmatpush1.bf16.msra.mxu0 0
    %965 = vmatprep.subr.bf16.mxu0 0
    %966 = vmatpush1.bf16.msra.mxu0 0
    %967 = vmatprep.mubr.bf16.mxu0 0
    %968 = vmatmul.mubr.bf16.gmra.mrb[0].mxu0 %v284
    %v969 = vpop.f32.mrb[0].mxu0
    %v970 = vadd.f32 %v856, %v969
    %v971 = vpop.f32.mrb[0].mxu0
    %v972 = vpop.f32.mrb[0].mxu0
    %v973 = vadd.f32 %v856, %v972
    %v974 = vpop.f32.mrb[0].mxu0
    %975 = vdwg.mxu0
    %976 = vst [vmem:[%s7 + $0x60] sm:$0xff] %v927
    %977 = vst [vmem:[%s7 + $0x68] sm:$0xff] %v929
    %978 = vst [vmem:[%s7 + $0x70] sm:$0xff] %v970
    %979 = vst [vmem:[%s7 + $0x168] sm:$0xff] %v931
    %980 = vst [vmem:[%s7 + $0x170] sm:$0xff] %v933
    %981 = vst [vmem:[%s7 + $0x178] sm:$0xff] %v973
    %v982 = vmax.f32 %v829, %v927
    %v983 = vmax.f32 %v830, %v929
    %v984 = vmax.f32 %v831, %v970
    %v985 = vmax.f32 %v832, %v931
    %v986 = vmax.f32 %v833, %v933
    %v987 = vmax.f32 %v834, %v973
    %v988 = vld [vmem:[%s5 + $0x3c] sm:$0xff]
    %v989 = vld [vmem:[%s5 + $0x44] sm:$0xf]
    %v990 = vld [vmem:[%s5 + $0xc0] sm:$0xff]
    %v991 = vld [vmem:[%s5 + $0xc8] sm:$0xf]
    %v992 = vld [vmem:[%s5 + $0x144] sm:$0xff]
    %v993 = vld [vmem:[%s5 + $0x14c] sm:$0xf]
    %v994 = vld [vmem:[%s5 + $0x1c8] sm:$0xff]
    %v995 = vld [vmem:[%s5 + $0x1d0] sm:$0xf]
    %v996 = vld [vmem:[#allocation9 + $0xf] sm:$0x7]
    %v998 = vlaneseq
    %v999 = vshrl.u32 %v998, 7
    %v1000 = vsub.s32 0, %v999
    %v1001 = vrot.slane %v996, %v1000
    %v1002 = vlaneseq
    %v1003 = vshrl.u32 %v1002, 7
    %v1004 = vsub.s32 1, %v1003
    %v1005 = vrot.slane %v996, %v1004
    %v1006 = vlaneseq
    %v1007 = vshrl.u32 %v1006, 7
    %v1008 = vsub.s32 2, %v1007
    %v1009 = vrot.slane %v996, %v1008
    %v1021 = vunpack.c.l.b16 %v988
    %v1022 = vunpack.c.h.b16 %v988
    %v1023 = vunpack.c.l.b16 %v989
    %v1024 = vunpack.c.l.b16 %v990
    %v1025 = vunpack.c.h.b16 %v990
    %v1026 = vunpack.c.l.b16 %v991
    %v1027 = vunpack.c.l.b16 %v992
    %v1028 = vunpack.c.h.b16 %v992
    %v1029 = vunpack.c.l.b16 %v993
    %v1030 = vunpack.c.l.b16 %v994
    %v1031 = vunpack.c.h.b16 %v994
    %v1032 = vunpack.c.l.b16 %v995
    %v1033 = vpack.c.b16 %v1024, %v1021
    %v1034 = vpack.c.b16 %v1025, %v1022
    %v1035 = vpack.c.b16 %v1026, %v1023
    %v1036 = vpack.c.b16 %v1030, %v1027
    %v1037 = vpack.c.b16 %v1031, %v1028
    %v1038 = vpack.c.b16 %v1032, %v1029
    %1045 = vmatprep.subr.bf16.mxu0 %v1034
    %1046 = vmatpush1.bf16.msra.mxu0 %v1033
    %1047 = vmatprep.subr.bf16.mxu0 %v1037
    %1048 = vmatpush1.bf16.msra.mxu0 %v1036
    %1049 = vmatprep.subr.bf16.mxu0 0
    %1050 = vmatpush1.bf16.msra.mxu0 0
    %1051 = vmatprep.subr.bf16.mxu0 0
    %1052 = vmatpush1.bf16.msra.mxu0 0
    %1053 = vmatprep.subr.bf16.mxu0 0
    %1054 = vmatpush1.bf16.msra.mxu0 0
    %1055 = vmatprep.subr.bf16.mxu0 0
    %1056 = vmatpush1.bf16.msra.mxu0 0
    %1057 = vmatprep.subr.bf16.mxu0 0
    %1058 = vmatpush1.bf16.msra.mxu0 0
    %1059 = vmatprep.subr.bf16.mxu0 0
    %1060 = vmatpush1.bf16.msra.mxu0 0
    %1061 = vmatprep.subr.bf16.mxu0 0
    %1062 = vmatpush1.bf16.msra.mxu0 0
    %1063 = vmatprep.subr.bf16.mxu0 0
    %1064 = vmatpush1.bf16.msra.mxu0 0
    %1065 = vmatprep.subr.bf16.mxu0 0
    %1066 = vmatpush1.bf16.msra.mxu0 0
    %1067 = vmatprep.subr.bf16.mxu0 0
    %1068 = vmatpush1.bf16.msra.mxu0 0
    %1069 = vmatprep.subr.bf16.mxu0 0
    %1070 = vmatpush1.bf16.msra.mxu0 0
    %1071 = vmatprep.subr.bf16.mxu0 0
    %1072 = vmatpush1.bf16.msra.mxu0 0
    %1073 = vmatprep.subr.bf16.mxu0 0
    %1074 = vmatpush1.bf16.msra.mxu0 0
    %1075 = vmatprep.subr.bf16.mxu0 0
    %1076 = vmatpush1.bf16.msra.mxu0 0
    %1077 = vmatprep.mubr.bf16.mxu0 0
    %1078 = vmatmul.mubr.bf16.gmra.mrb[0].mxu0 %v284
    %v1079 = vpop.f32.mrb[0].mxu0
    %v1080 = vadd.f32 %v1001, %v1079
    %v1081 = vpop.f32.mrb[0].mxu0
    %v1082 = vadd.f32 %v1005, %v1081
    %v1083 = vpop.f32.mrb[0].mxu0
    %v1084 = vadd.f32 %v1001, %v1083
    %v1085 = vpop.f32.mrb[0].mxu0
    %v1086 = vadd.f32 %v1005, %v1085
    %1087 = vdwg.mxu0
    %1088 = vmatprep.subr.bf16.mxu0 0
    %1089 = vmatpush1.bf16.msra.mxu0 %v1035
    %1090 = vmatprep.subr.bf16.mxu0 0
    %1091 = vmatpush1.bf16.msra.mxu0 %v1038
    %1092 = vmatprep.subr.bf16.mxu0 0
    %1093 = vmatpush1.bf16.msra.mxu0 0
    %1094 = vmatprep.subr.bf16.mxu0 0
    %1095 = vmatpush1.bf16.msra.mxu0 0
    %1096 = vmatprep.subr.bf16.mxu0 0
    %1097 = vmatpush1.bf16.msra.mxu0 0
    %1098 = vmatprep.subr.bf16.mxu0 0
    %1099 = vmatpush1.bf16.msra.mxu0 0
    %1100 = vmatprep.subr.bf16.mxu0 0
    %1101 = vmatpush1.bf16.msra.mxu0 0
    %1102 = vmatprep.subr.bf16.mxu0 0
    %1103 = vmatpush1.bf16.msra.mxu0 0
    %1104 = vmatprep.subr.bf16.mxu0 0
    %1105 = vmatpush1.bf16.msra.mxu0 0
    %1106 = vmatprep.subr.bf16.mxu0 0
    %1107 = vmatpush1.bf16.msra.mxu0 0
    %1108 = vmatprep.subr.bf16.mxu0 0
    %1109 = vmatpush1.bf16.msra.mxu0 0
    %1110 = vmatprep.subr.bf16.mxu0 0
    %1111 = vmatpush1.bf16.msra.mxu0 0
    %1112 = vmatprep.subr.bf16.mxu0 0
    %1113 = vmatpush1.bf16.msra.mxu0 0
    %1114 = vmatprep.subr.bf16.mxu0 0
    %1115 = vmatpush1.bf16.msra.mxu0 0
    %1116 = vmatprep.subr.bf16.mxu0 0
    %1117 = vmatpush1.bf16.msra.mxu0 0
    %1118 = vmatprep.subr.bf16.mxu0 0
    %1119 = vmatpush1.bf16.msra.mxu0 0
    %1120 = vmatprep.mubr.bf16.mxu0 0
    %1121 = vmatmul.mubr.bf16.gmra.mrb[0].mxu0 %v284
    %v1122 = vpop.f32.mrb[0].mxu0
    %v1123 = vadd.f32 %v1009, %v1122
    %v1124 = vpop.f32.mrb[0].mxu0
    %v1125 = vpop.f32.mrb[0].mxu0
    %v1126 = vadd.f32 %v1009, %v1125
    %v1127 = vpop.f32.mrb[0].mxu0
    %1128 = vdwg.mxu0
    %1129 = vst [vmem:[%s7 + $0x78] sm:$0xff] %v1080
    %1130 = vst [vmem:[%s7 + $0x80] sm:$0xff] %v1082
    %1131 = vst [vmem:[%s7 + $0x88] sm:$0xff] %v1123
    %1132 = vst [vmem:[%s7 + $0x180] sm:$0xff] %v1084
    %1133 = vst [vmem:[%s7 + $0x188] sm:$0xff] %v1086
    %1134 = vst [vmem:[%s7 + $0x190] sm:$0xff] %v1126
    %v1135 = vmax.f32 %v982, %v1080
    %v1136 = vmax.f32 %v983, %v1082
    %v1137 = vmax.f32 %v984, %v1123
    %v1138 = vmax.f32 %v985, %v1084
    %v1139 = vmax.f32 %v986, %v1086
    %v1140 = vmax.f32 %v987, %v1126
    %v1141 = vld [vmem:[%s5 + $0x48] sm:$0xff]
    %v1142 = vld [vmem:[%s5 + $0x50] sm:$0xf]
    %v1143 = vld [vmem:[%s5 + $0xcc] sm:$0xff]
    %v1144 = vld [vmem:[%s5 + $0xd4] sm:$0xf]
    %v1145 = vld [vmem:[%s5 + $0x150] sm:$0xff]
    %v1146 = vld [vmem:[%s5 + $0x158] sm:$0xf]
    %v1147 = vld [vmem:[%s5 + $0x1d4] sm:$0xff]
    %v1148 = vld [vmem:[%s5 + $0x1dc] sm:$0xf]
    %v1149 = vld [vmem:[#allocation9 + $0x12] sm:$0x7]
    %v1151 = vlaneseq
    %v1152 = vshrl.u32 %v1151, 7
    %v1153 = vsub.s32 0, %v1152
    %v1154 = vrot.slane %v1149, %v1153
    %v1155 = vlaneseq
    %v1156 = vshrl.u32 %v1155, 7
    %v1157 = vsub.s32 1, %v1156
    %v1158 = vrot.slane %v1149, %v1157
    %v1159 = vlaneseq
    %v1160 = vshrl.u32 %v1159, 7
    %v1161 = vsub.s32 2, %v1160
    %v1162 = vrot.slane %v1149, %v1161
    %v1174 = vunpack.c.l.b16 %v1141
    %v1175 = vunpack.c.h.b16 %v1141
    %v1176 = vunpack.c.l.b16 %v1142
    %v1177 = vunpack.c.l.b16 %v1143
    %v1178 = vunpack.c.h.b16 %v1143
    %v1179 = vunpack.c.l.b16 %v1144
    %v1180 = vunpack.c.l.b16 %v1145
    %v1181 = vunpack.c.h.b16 %v1145
    %v1182 = vunpack.c.l.b16 %v1146
    %v1183 = vunpack.c.l.b16 %v1147
    %v1184 = vunpack.c.h.b16 %v1147
    %v1185 = vunpack.c.l.b16 %v1148
    %v1186 = vpack.c.b16 %v1177, %v1174
    %v1187 = vpack.c.b16 %v1178, %v1175
    %v1188 = vpack.c.b16 %v1179, %v1176
    %v1189 = vpack.c.b16 %v1183, %v1180
    %v1190 = vpack.c.b16 %v1184, %v1181
    %v1191 = vpack.c.b16 %v1185, %v1182
    %1198 = vmatprep.subr.bf16.mxu0 %v1187
    %1199 = vmatpush1.bf16.msra.mxu0 %v1186
    %1200 = vmatprep.subr.bf16.mxu0 %v1190
    %1201 = vmatpush1.bf16.msra.mxu0 %v1189
    %1202 = vmatprep.subr.bf16.mxu0 0
    %1203 = vmatpush1.bf16.msra.mxu0 0
    %1204 = vmatprep.subr.bf16.mxu0 0
    %1205 = vmatpush1.bf16.msra.mxu0 0
    %1206 = vmatprep.subr.bf16.mxu0 0
    %1207 = vmatpush1.bf16.msra.mxu0 0
    %1208 = vmatprep.subr.bf16.mxu0 0
    %1209 = vmatpush1.bf16.msra.mxu0 0
    %1210 = vmatprep.subr.bf16.mxu0 0
    %1211 = vmatpush1.bf16.msra.mxu0 0
    %1212 = vmatprep.subr.bf16.mxu0 0
    %1213 = vmatpush1.bf16.msra.mxu0 0
    %1214 = vmatprep.subr.bf16.mxu0 0
    %1215 = vmatpush1.bf16.msra.mxu0 0
    %1216 = vmatprep.subr.bf16.mxu0 0
    %1217 = vmatpush1.bf16.msra.mxu0 0
    %1218 = vmatprep.subr.bf16.mxu0 0
    %1219 = vmatpush1.bf16.msra.mxu0 0
    %1220 = vmatprep.subr.bf16.mxu0 0
    %1221 = vmatpush1.bf16.msra.mxu0 0
    %1222 = vmatprep.subr.bf16.mxu0 0
    %1223 = vmatpush1.bf16.msra.mxu0 0
    %1224 = vmatprep.subr.bf16.mxu0 0
    %1225 = vmatpush1.bf16.msra.mxu0 0
    %1226 = vmatprep.subr.bf16.mxu0 0
    %1227 = vmatpush1.bf16.msra.mxu0 0
    %1228 = vmatprep.subr.bf16.mxu0 0
    %1229 = vmatpush1.bf16.msra.mxu0 0
    %1230 = vmatprep.mubr.bf16.mxu0 0
    %1231 = vmatmul.mubr.bf16.gmra.mrb[0].mxu0 %v284
    %v1232 = vpop.f32.mrb[0].mxu0
    %v1233 = vadd.f32 %v1154, %v1232
    %v1234 = vpop.f32.mrb[0].mxu0
    %v1235 = vadd.f32 %v1158, %v1234
    %v1236 = vpop.f32.mrb[0].mxu0
    %v1237 = vadd.f32 %v1154, %v1236
    %v1238 = vpop.f32.mrb[0].mxu0
    %v1239 = vadd.f32 %v1158, %v1238
    %1240 = vdwg.mxu0
    %1241 = vmatprep.subr.bf16.mxu0 0
    %1242 = vmatpush1.bf16.msra.mxu0 %v1188
    %1243 = vmatprep.subr.bf16.mxu0 0
    %1244 = vmatpush1.bf16.msra.mxu0 %v1191
    %1245 = vmatprep.subr.bf16.mxu0 0
    %1246 = vmatpush1.bf16.msra.mxu0 0
    %1247 = vmatprep.subr.bf16.mxu0 0
    %1248 = vmatpush1.bf16.msra.mxu0 0
    %1249 = vmatprep.subr.bf16.mxu0 0
    %1250 = vmatpush1.bf16.msra.mxu0 0
    %1251 = vmatprep.subr.bf16.mxu0 0
    %1252 = vmatpush1.bf16.msra.mxu0 0
    %1253 = vmatprep.subr.bf16.mxu0 0
    %1254 = vmatpush1.bf16.msra.mxu0 0
    %1255 = vmatprep.subr.bf16.mxu0 0
    %1256 = vmatpush1.bf16.msra.mxu0 0
    %1257 = vmatprep.subr.bf16.mxu0 0
    %1258 = vmatpush1.bf16.msra.mxu0 0
    %1259 = vmatprep.subr.bf16.mxu0 0
    %1260 = vmatpush1.bf16.msra.mxu0 0
    %1261 = vmatprep.subr.bf16.mxu0 0
    %1262 = vmatpush1.bf16.msra.mxu0 0
    %1263 = vmatprep.subr.bf16.mxu0 0
    %1264 = vmatpush1.bf16.msra.mxu0 0
    %1265 = vmatprep.subr.bf16.mxu0 0
    %1266 = vmatpush1.bf16.msra.mxu0 0
    %1267 = vmatprep.subr.bf16.mxu0 0
    %1268 = vmatpush1.bf16.msra.mxu0 0
    %1269 = vmatprep.subr.bf16.mxu0 0
    %1270 = vmatpush1.bf16.msra.mxu0 0
    %1271 = vmatprep.subr.bf16.mxu0 0
    %1272 = vmatpush1.bf16.msra.mxu0 0
    %1273 = vmatprep.mubr.bf16.mxu0 0
    %1274 = vmatmul.mubr.bf16.gmra.mrb[0].mxu0 %v284
    %v1275 = vpop.f32.mrb[0].mxu0
    %v1276 = vadd.f32 %v1162, %v1275
    %v1277 = vpop.f32.mrb[0].mxu0
    %v1278 = vpop.f32.mrb[0].mxu0
    %v1279 = vadd.f32 %v1162, %v1278
    %v1280 = vpop.f32.mrb[0].mxu0
    %1281 = vdwg.mxu0
    %1282 = vst [vmem:[%s7 + $0x90] sm:$0xff] %v1233
    %1283 = vst [vmem:[%s7 + $0x98] sm:$0xff] %v1235
    %1284 = vst [vmem:[%s7 + $0xa0] sm:$0xff] %v1276
    %1285 = vst [vmem:[%s7 + $0x198] sm:$0xff] %v1237
    %1286 = vst [vmem:[%s7 + $0x1a0] sm:$0xff] %v1239
    %1287 = vst [vmem:[%s7 + $0x1a8] sm:$0xff] %v1279
    %v1288 = vmax.f32 %v1135, %v1233
    %v1289 = vmax.f32 %v1136, %v1235
    %v1290 = vmax.f32 %v1137, %v1276
    %v1291 = vmax.f32 %v1138, %v1237
    %v1292 = vmax.f32 %v1139, %v1239
    %v1293 = vmax.f32 %v1140, %v1279
    %v1294 = vld [vmem:[%s5 + $0x54] sm:$0xff]
    %v1295 = vld [vmem:[%s5 + $0x5c] sm:$0xf]
    %v1296 = vld [vmem:[%s5 + $0xd8] sm:$0xff]
    %v1297 = vld [vmem:[%s5 + $0xe0] sm:$0xf]
    %v1298 = vld [vmem:[%s5 + $0x15c] sm:$0xff]
    %v1299 = vld [vmem:[%s5 + $0x164] sm:$0xf]
    %v1300 = vld [vmem:[%s5 + $0x1e0] sm:$0xff]
    %v1301 = vld [vmem:[%s5 + $0x1e8] sm:$0xf]
    %v1302 = vld [vmem:[#allocation9 + $0x15] sm:$0x7]
    %v1304 = vlaneseq
    %v1305 = vshrl.u32 %v1304, 7
    %v1306 = vsub.s32 0, %v1305
    %v1307 = vrot.slane %v1302, %v1306
    %v1308 = vlaneseq
    %v1309 = vshrl.u32 %v1308, 7
    %v1310 = vsub.s32 1, %v1309
    %v1311 = vrot.slane %v1302, %v1310
    %v1312 = vlaneseq
    %v1313 = vshrl.u32 %v1312, 7
    %v1314 = vsub.s32 2, %v1313
    %v1315 = vrot.slane %v1302, %v1314
    %v1327 = vunpack.c.l.b16 %v1294
    %v1328 = vunpack.c.h.b16 %v1294
    %v1329 = vunpack.c.l.b16 %v1295
    %v1330 = vunpack.c.l.b16 %v1296
    %v1331 = vunpack.c.h.b16 %v1296
    %v1332 = vunpack.c.l.b16 %v1297
    %v1333 = vunpack.c.l.b16 %v1298
    %v1334 = vunpack.c.h.b16 %v1298
    %v1335 = vunpack.c.l.b16 %v1299
    %v1336 = vunpack.c.l.b16 %v1300
    %v1337 = vunpack.c.h.b16 %v1300
    %v1338 = vunpack.c.l.b16 %v1301
    %v1339 = vpack.c.b16 %v1330, %v1327
    %v1340 = vpack.c.b16 %v1331, %v1328
    %v1341 = vpack.c.b16 %v1332, %v1329
    %v1342 = vpack.c.b16 %v1336, %v1333
    %v1343 = vpack.c.b16 %v1337, %v1334
    %v1344 = vpack.c.b16 %v1338, %v1335
    %1351 = vmatprep.subr.bf16.mxu0 %v1340
    %1352 = vmatpush1.bf16.msra.mxu0 %v1339
    %1353 = vmatprep.subr.bf16.mxu0 %v1343
    %1354 = vmatpush1.bf16.msra.mxu0 %v1342
    %1355 = vmatprep.subr.bf16.mxu0 0
    %1356 = vmatpush1.bf16.msra.mxu0 0
    %1357 = vmatprep.subr.bf16.mxu0 0
    %1358 = vmatpush1.bf16.msra.mxu0 0
    %1359 = vmatprep.subr.bf16.mxu0 0
    %1360 = vmatpush1.bf16.msra.mxu0 0
    %1361 = vmatprep.subr.bf16.mxu0 0
    %1362 = vmatpush1.bf16.msra.mxu0 0
    %1363 = vmatprep.subr.bf16.mxu0 0
    %1364 = vmatpush1.bf16.msra.mxu0 0
    %1365 = vmatprep.subr.bf16.mxu0 0
    %1366 = vmatpush1.bf16.msra.mxu0 0
    %1367 = vmatprep.subr.bf16.mxu0 0
    %1368 = vmatpush1.bf16.msra.mxu0 0
    %1369 = vmatprep.subr.bf16.mxu0 0
    %1370 = vmatpush1.bf16.msra.mxu0 0
    %1371 = vmatprep.subr.bf16.mxu0 0
    %1372 = vmatpush1.bf16.msra.mxu0 0
    %1373 = vmatprep.subr.bf16.mxu0 0
    %1374 = vmatpush1.bf16.msra.mxu0 0
    %1375 = vmatprep.subr.bf16.mxu0 0
    %1376 = vmatpush1.bf16.msra.mxu0 0
    %1377 = vmatprep.subr.bf16.mxu0 0
    %1378 = vmatpush1.bf16.msra.mxu0 0
    %1379 = vmatprep.subr.bf16.mxu0 0
    %1380 = vmatpush1.bf16.msra.mxu0 0
    %1381 = vmatprep.subr.bf16.mxu0 0
    %1382 = vmatpush1.bf16.msra.mxu0 0
    %1383 = vmatprep.mubr.bf16.mxu0 0
    %1384 = vmatmul.mubr.bf16.gmra.mrb[0].mxu0 %v284
    %v1385 = vpop.f32.mrb[0].mxu0
    %v1386 = vadd.f32 %v1307, %v1385
    %v1387 = vpop.f32.mrb[0].mxu0
    %v1388 = vadd.f32 %v1311, %v1387
    %v1389 = vpop.f32.mrb[0].mxu0
    %v1390 = vadd.f32 %v1307, %v1389
    %v1391 = vpop.f32.mrb[0].mxu0
    %v1392 = vadd.f32 %v1311, %v1391
    %1393 = vdwg.mxu0
    %1394 = vmatprep.subr.bf16.mxu0 0
    %1395 = vmatpush1.bf16.msra.mxu0 %v1341
    %1396 = vmatprep.subr.bf16.mxu0 0
    %1397 = vmatpush1.bf16.msra.mxu0 %v1344
    %1398 = vmatprep.subr.bf16.mxu0 0
    %1399 = vmatpush1.bf16.msra.mxu0 0
    %1400 = vmatprep.subr.bf16.mxu0 0
    %1401 = vmatpush1.bf16.msra.mxu0 0
    %1402 = vmatprep.subr.bf16.mxu0 0
    %1403 = vmatpush1.bf16.msra.mxu0 0
    %1404 = vmatprep.subr.bf16.mxu0 0
    %1405 = vmatpush1.bf16.msra.mxu0 0
    %1406 = vmatprep.subr.bf16.mxu0 0
    %1407 = vmatpush1.bf16.msra.mxu0 0
    %1408 = vmatprep.subr.bf16.mxu0 0
    %1409 = vmatpush1.bf16.msra.mxu0 0
    %1410 = vmatprep.subr.bf16.mxu0 0
    %1411 = vmatpush1.bf16.msra.mxu0 0
    %1412 = vmatprep.subr.bf16.mxu0 0
    %1413 = vmatpush1.bf16.msra.mxu0 0
    %1414 = vmatprep.subr.bf16.mxu0 0
    %1415 = vmatpush1.bf16.msra.mxu0 0
    %1416 = vmatprep.subr.bf16.mxu0 0
    %1417 = vmatpush1.bf16.msra.mxu0 0
    %1418 = vmatprep.subr.bf16.mxu0 0
    %1419 = vmatpush1.bf16.msra.mxu0 0
    %1420 = vmatprep.subr.bf16.mxu0 0
    %1421 = vmatpush1.bf16.msra.mxu0 0
    %1422 = vmatprep.subr.bf16.mxu0 0
    %1423 = vmatpush1.bf16.msra.mxu0 0
    %1424 = vmatprep.subr.bf16.mxu0 0
    %1425 = vmatpush1.bf16.msra.mxu0 0
    %1426 = vmatprep.mubr.bf16.mxu0 0
    %1427 = vmatmul.mubr.bf16.gmra.mrb[0].mxu0 %v284
    %v1428 = vpop.f32.mrb[0].mxu0
    %v1429 = vadd.f32 %v1315, %v1428
    %v1430 = vpop.f32.mrb[0].mxu0
    %v1431 = vpop.f32.mrb[0].mxu0
    %v1432 = vadd.f32 %v1315, %v1431
    %v1433 = vpop.f32.mrb[0].mxu0
    %1434 = vdwg.mxu0
    %1435 = vst [vmem:[%s7 + $0xa8] sm:$0xff] %v1386
    %1436 = vst [vmem:[%s7 + $0xb0] sm:$0xff] %v1388
    %1437 = vst [vmem:[%s7 + $0xb8] sm:$0xff] %v1429
    %1438 = vst [vmem:[%s7 + $0x1b0] sm:$0xff] %v1390
    %1439 = vst [vmem:[%s7 + $0x1b8] sm:$0xff] %v1392
    %1440 = vst [vmem:[%s7 + $0x1c0] sm:$0xff] %v1432
    %v1441 = vmax.f32 %v1288, %v1386
    %v1442 = vmax.f32 %v1289, %v1388
    %v1443 = vmax.f32 %v1290, %v1429
    %v1444 = vmax.f32 %v1291, %v1390
    %v1445 = vmax.f32 %v1292, %v1392
    %v1446 = vmax.f32 %v1293, %v1432
    %v1447 = vld [vmem:[%s5 + $0x60] sm:$0xff]
    %v1448 = vld [vmem:[%s5 + $0x68] sm:$0xf]
    %v1449 = vld [vmem:[%s5 + $0xe4] sm:$0xff]
    %v1450 = vld [vmem:[%s5 + $0xec] sm:$0xf]
    %v1451 = vld [vmem:[%s5 + $0x168] sm:$0xff]
    %v1452 = vld [vmem:[%s5 + $0x170] sm:$0xf]
    %v1453 = vld [vmem:[%s5 + $0x1ec] sm:$0xff]
    %v1454 = vld [vmem:[%s5 + $0x1f4] sm:$0xf]
    %v1455 = vld [vmem:[#allocation9 + $0x18] sm:$0x7]
    %v1457 = vlaneseq
    %v1458 = vshrl.u32 %v1457, 7
    %v1459 = vsub.s32 0, %v1458
    %v1460 = vrot.slane %v1455, %v1459
    %v1461 = vlaneseq
    %v1462 = vshrl.u32 %v1461, 7
    %v1463 = vsub.s32 1, %v1462
    %v1464 = vrot.slane %v1455, %v1463
    %v1465 = vlaneseq
    %v1466 = vshrl.u32 %v1465, 7
    %v1467 = vsub.s32 2, %v1466
    %v1468 = vrot.slane %v1455, %v1467
    %v1480 = vunpack.c.l.b16 %v1447
    %v1481 = vunpack.c.h.b16 %v1447
    %v1482 = vunpack.c.l.b16 %v1448
    %v1483 = vunpack.c.l.b16 %v1449
    %v1484 = vunpack.c.h.b16 %v1449
    %v1485 = vunpack.c.l.b16 %v1450
    %v1486 = vunpack.c.l.b16 %v1451
    %v1487 = vunpack.c.h.b16 %v1451
    %v1488 = vunpack.c.l.b16 %v1452
    %v1489 = vunpack.c.l.b16 %v1453
    %v1490 = vunpack.c.h.b16 %v1453
    %v1491 = vunpack.c.l.b16 %v1454
    %v1492 = vpack.c.b16 %v1483, %v1480
    %v1493 = vpack.c.b16 %v1484, %v1481
    %v1494 = vpack.c.b16 %v1485, %v1482
    %v1495 = vpack.c.b16 %v1489, %v1486
    %v1496 = vpack.c.b16 %v1490, %v1487
    %v1497 = vpack.c.b16 %v1491, %v1488
    %1504 = vmatprep.subr.bf16.mxu0 %v1493
    %1505 = vmatpush1.bf16.msra.mxu0 %v1492
    %1506 = vmatprep.subr.bf16.mxu0 %v1496
    %1507 = vmatpush1.bf16.msra.mxu0 %v1495
    %1508 = vmatprep.subr.bf16.mxu0 0
    %1509 = vmatpush1.bf16.msra.mxu0 0
    %1510 = vmatprep.subr.bf16.mxu0 0
    %1511 = vmatpush1.bf16.msra.mxu0 0
    %1512 = vmatprep.subr.bf16.mxu0 0
    %1513 = vmatpush1.bf16.msra.mxu0 0
    %1514 = vmatprep.subr.bf16.mxu0 0
    %1515 = vmatpush1.bf16.msra.mxu0 0
    %1516 = vmatprep.subr.bf16.mxu0 0
    %1517 = vmatpush1.bf16.msra.mxu0 0
    %1518 = vmatprep.subr.bf16.mxu0 0
    %1519 = vmatpush1.bf16.msra.mxu0 0
    %1520 = vmatprep.subr.bf16.mxu0 0
    %1521 = vmatpush1.bf16.msra.mxu0 0
    %1522 = vmatprep.subr.bf16.mxu0 0
    %1523 = vmatpush1.bf16.msra.mxu0 0
    %1524 = vmatprep.subr.bf16.mxu0 0
    %1525 = vmatpush1.bf16.msra.mxu0 0
    %1526 = vmatprep.subr.bf16.mxu0 0
    %1527 = vmatpush1.bf16.msra.mxu0 0
    %1528 = vmatprep.subr.bf16.mxu0 0
    %1529 = vmatpush1.bf16.msra.mxu0 0
    %1530 = vmatprep.subr.bf16.mxu0 0
    %1531 = vmatpush1.bf16.msra.mxu0 0
    %1532 = vmatprep.subr.bf16.mxu0 0
    %1533 = vmatpush1.bf16.msra.mxu0 0
    %1534 = vmatprep.subr.bf16.mxu0 0
    %1535 = vmatpush1.bf16.msra.mxu0 0
    %1536 = vmatprep.mubr.bf16.mxu0 0
    %1537 = vmatmul.mubr.bf16.gmra.mrb[0].mxu0 %v284
    %v1538 = vpop.f32.mrb[0].mxu0
    %v1539 = vadd.f32 %v1460, %v1538
    %v1540 = vpop.f32.mrb[0].mxu0
    %v1541 = vadd.f32 %v1464, %v1540
    %v1542 = vpop.f32.mrb[0].mxu0
    %v1543 = vadd.f32 %v1460, %v1542
    %v1544 = vpop.f32.mrb[0].mxu0
    %v1545 = vadd.f32 %v1464, %v1544
    %1546 = vdwg.mxu0
    %1547 = vmatprep.subr.bf16.mxu0 0
    %1548 = vmatpush1.bf16.msra.mxu0 %v1494
    %1549 = vmatprep.subr.bf16.mxu0 0
    %1550 = vmatpush1.bf16.msra.mxu0 %v1497
    %1551 = vmatprep.subr.bf16.mxu0 0
    %1552 = vmatpush1.bf16.msra.mxu0 0
    %1553 = vmatprep.subr.bf16.mxu0 0
    %1554 = vmatpush1.bf16.msra.mxu0 0
    %1555 = vmatprep.subr.bf16.mxu0 0
    %1556 = vmatpush1.bf16.msra.mxu0 0
    %1557 = vmatprep.subr.bf16.mxu0 0
    %1558 = vmatpush1.bf16.msra.mxu0 0
    %1559 = vmatprep.subr.bf16.mxu0 0
    %1560 = vmatpush1.bf16.msra.mxu0 0
    %1561 = vmatprep.subr.bf16.mxu0 0
    %1562 = vmatpush1.bf16.msra.mxu0 0
    %1563 = vmatprep.subr.bf16.mxu0 0
    %1564 = vmatpush1.bf16.msra.mxu0 0
    %1565 = vmatprep.subr.bf16.mxu0 0
    %1566 = vmatpush1.bf16.msra.mxu0 0
    %1567 = vmatprep.subr.bf16.mxu0 0
    %1568 = vmatpush1.bf16.msra.mxu0 0
    %1569 = vmatprep.subr.bf16.mxu0 0
    %1570 = vmatpush1.bf16.msra.mxu0 0
    %1571 = vmatprep.subr.bf16.mxu0 0
    %1572 = vmatpush1.bf16.msra.mxu0 0
    %1573 = vmatprep.subr.bf16.mxu0 0
    %1574 = vmatpush1.bf16.msra.mxu0 0
    %1575 = vmatprep.subr.bf16.mxu0 0
    %1576 = vmatpush1.bf16.msra.mxu0 0
    %1577 = vmatprep.subr.bf16.mxu0 0
    %1578 = vmatpush1.bf16.msra.mxu0 0
    %1579 = vmatprep.mubr.bf16.mxu0 0
    %1580 = vmatmul.mubr.bf16.gmra.mrb[0].mxu0 %v284
    %v1581 = vpop.f32.mrb[0].mxu0
    %v1582 = vadd.f32 %v1468, %v1581
    %v1583 = vpop.f32.mrb[0].mxu0
    %v1584 = vpop.f32.mrb[0].mxu0
    %v1585 = vadd.f32 %v1468, %v1584
    %v1586 = vpop.f32.mrb[0].mxu0
    %1587 = vdwg.mxu0
    %1588 = vst [vmem:[%s7 + $0xc0] sm:$0xff] %v1539
    %1589 = vst [vmem:[%s7 + $0xc8] sm:$0xff] %v1541
    %1590 = vst [vmem:[%s7 + $0xd0] sm:$0xff] %v1582
    %1591 = vst [vmem:[%s7 + $0x1c8] sm:$0xff] %v1543
    %1592 = vst [vmem:[%s7 + $0x1d0] sm:$0xff] %v1545
    %1593 = vst [vmem:[%s7 + $0x1d8] sm:$0xff] %v1585
    %v1594 = vmax.f32 %v1441, %v1539
    %v1595 = vmax.f32 %v1442, %v1541
    %v1596 = vmax.f32 %v1443, %v1582
    %v1597 = vmax.f32 %v1444, %v1543
    %v1598 = vmax.f32 %v1445, %v1545
    %v1599 = vmax.f32 %v1446, %v1585
    %v1600 = vld [vmem:[%s5 + $0x6c] sm:$0xff]
    %v1601 = vld [vmem:[%s5 + $0x74] sm:$0xf]
    %v1602 = vld [vmem:[%s5 + $0xf0] sm:$0xff]
    %v1603 = vld [vmem:[%s5 + $0xf8] sm:$0xf]
    %v1604 = vld [vmem:[%s5 + $0x174] sm:$0xff]
    %v1605 = vld [vmem:[%s5 + $0x17c] sm:$0xf]
    %v1606 = vld [vmem:[%s5 + $0x1f8] sm:$0xff]
    %v1607 = vld [vmem:[%s5 + $0x200] sm:$0xf]
    %v1608 = vld [vmem:[#allocation9 + $0x1b] sm:$0x7]
    %v1610 = vlaneseq
    %v1611 = vshrl.u32 %v1610, 7
    %v1612 = vsub.s32 0, %v1611
    %v1613 = vrot.slane %v1608, %v1612
    %v1614 = vlaneseq
    %v1615 = vshrl.u32 %v1614, 7
    %v1616 = vsub.s32 1, %v1615
    %v1617 = vrot.slane %v1608, %v1616
    %v1618 = vlaneseq
    %v1619 = vshrl.u32 %v1618, 7
    %v1620 = vsub.s32 2, %v1619
    %v1621 = vrot.slane %v1608, %v1620
    %v1633 = vunpack.c.l.b16 %v1600
    %v1634 = vunpack.c.h.b16 %v1600
    %v1635 = vunpack.c.l.b16 %v1601
    %v1636 = vunpack.c.l.b16 %v1602
    %v1637 = vunpack.c.h.b16 %v1602
    %v1638 = vunpack.c.l.b16 %v1603
    %v1639 = vunpack.c.l.b16 %v1604
    %v1640 = vunpack.c.h.b16 %v1604
    %v1641 = vunpack.c.l.b16 %v1605
    %v1642 = vunpack.c.l.b16 %v1606
    %v1643 = vunpack.c.h.b16 %v1606
    %v1644 = vunpack.c.l.b16 %v1607
    %v1645 = vpack.c.b16 %v1636, %v1633
    %v1646 = vpack.c.b16 %v1637, %v1634
    %v1647 = vpack.c.b16 %v1638, %v1635
    %v1648 = vpack.c.b16 %v1642, %v1639
    %v1649 = vpack.c.b16 %v1643, %v1640
    %v1650 = vpack.c.b16 %v1644, %v1641
    %1657 = vmatprep.subr.bf16.mxu0 %v1646
    %1658 = vmatpush1.bf16.msra.mxu0 %v1645
    %1659 = vmatprep.subr.bf16.mxu0 %v1649
    %1660 = vmatpush1.bf16.msra.mxu0 %v1648
    %1661 = vmatprep.subr.bf16.mxu0 0
    %1662 = vmatpush1.bf16.msra.mxu0 0
    %1663 = vmatprep.subr.bf16.mxu0 0
    %1664 = vmatpush1.bf16.msra.mxu0 0
    %1665 = vmatprep.subr.bf16.mxu0 0
    %1666 = vmatpush1.bf16.msra.mxu0 0
    %1667 = vmatprep.subr.bf16.mxu0 0
    %1668 = vmatpush1.bf16.msra.mxu0 0
    %1669 = vmatprep.subr.bf16.mxu0 0
    %1670 = vmatpush1.bf16.msra.mxu0 0
    %1671 = vmatprep.subr.bf16.mxu0 0
    %1672 = vmatpush1.bf16.msra.mxu0 0
    %1673 = vmatprep.subr.bf16.mxu0 0
    %1674 = vmatpush1.bf16.msra.mxu0 0
    %1675 = vmatprep.subr.bf16.mxu0 0
    %1676 = vmatpush1.bf16.msra.mxu0 0
    %1677 = vmatprep.subr.bf16.mxu0 0
    %1678 = vmatpush1.bf16.msra.mxu0 0
    %1679 = vmatprep.subr.bf16.mxu0 0
    %1680 = vmatpush1.bf16.msra.mxu0 0
    %1681 = vmatprep.subr.bf16.mxu0 0
    %1682 = vmatpush1.bf16.msra.mxu0 0
    %1683 = vmatprep.subr.bf16.mxu0 0
    %1684 = vmatpush1.bf16.msra.mxu0 0
    %1685 = vmatprep.subr.bf16.mxu0 0
    %1686 = vmatpush1.bf16.msra.mxu0 0
    %1687 = vmatprep.subr.bf16.mxu0 0
    %1688 = vmatpush1.bf16.msra.mxu0 0
    %1689 = vmatprep.mubr.bf16.mxu0 0
    %1690 = vmatmul.mubr.bf16.gmra.mrb[0].mxu0 %v284
    %v1691 = vpop.f32.mrb[0].mxu0
    %v1692 = vadd.f32 %v1613, %v1691
    %v1693 = vpop.f32.mrb[0].mxu0
    %v1694 = vadd.f32 %v1617, %v1693
    %v1695 = vpop.f32.mrb[0].mxu0
    %v1696 = vadd.f32 %v1613, %v1695
    %v1697 = vpop.f32.mrb[0].mxu0
    %v1698 = vadd.f32 %v1617, %v1697
    %1699 = vdwg.mxu0
    %1700 = vmatprep.subr.bf16.mxu0 0
    %1701 = vmatpush1.bf16.msra.mxu0 %v1647
    %1702 = vmatprep.subr.bf16.mxu0 0
    %1703 = vmatpush1.bf16.msra.mxu0 %v1650
    %1704 = vmatprep.subr.bf16.mxu0 0
    %1705 = vmatpush1.bf16.msra.mxu0 0
    %1706 = vmatprep.subr.bf16.mxu0 0
    %1707 = vmatpush1.bf16.msra.mxu0 0
    %1708 = vmatprep.subr.bf16.mxu0 0
    %1709 = vmatpush1.bf16.msra.mxu0 0
    %1710 = vmatprep.subr.bf16.mxu0 0
    %1711 = vmatpush1.bf16.msra.mxu0 0
    %1712 = vmatprep.subr.bf16.mxu0 0
    %1713 = vmatpush1.bf16.msra.mxu0 0
    %1714 = vmatprep.subr.bf16.mxu0 0
    %1715 = vmatpush1.bf16.msra.mxu0 0
    %1716 = vmatprep.subr.bf16.mxu0 0
    %1717 = vmatpush1.bf16.msra.mxu0 0
    %1718 = vmatprep.subr.bf16.mxu0 0
    %1719 = vmatpush1.bf16.msra.mxu0 0
    %1720 = vmatprep.subr.bf16.mxu0 0
    %1721 = vmatpush1.bf16.msra.mxu0 0
    %1722 = vmatprep.subr.bf16.mxu0 0
    %1723 = vmatpush1.bf16.msra.mxu0 0
    %1724 = vmatprep.subr.bf16.mxu0 0
    %1725 = vmatpush1.bf16.msra.mxu0 0
    %1726 = vmatprep.subr.bf16.mxu0 0
    %1727 = vmatpush1.bf16.msra.mxu0 0
    %1728 = vmatprep.subr.bf16.mxu0 0
    %1729 = vmatpush1.bf16.msra.mxu0 0
    %1730 = vmatprep.subr.bf16.mxu0 0
    %1731 = vmatpush1.bf16.msra.mxu0 0
    %1732 = vmatprep.mubr.bf16.mxu0 0
    %1733 = vmatmul.mubr.bf16.gmra.mrb[0].mxu0 %v284
    %v1734 = vpop.f32.mrb[0].mxu0
    %v1735 = vadd.f32 %v1621, %v1734
    %v1736 = vpop.f32.mrb[0].mxu0
    %v1737 = vpop.f32.mrb[0].mxu0
    %v1738 = vadd.f32 %v1621, %v1737
    %v1739 = vpop.f32.mrb[0].mxu0
    %1740 = vdwg.mxu0
    %1741 = vst [vmem:[%s7 + $0xd8] sm:$0xff] %v1692
    %1742 = vst [vmem:[%s7 + $0xe0] sm:$0xff] %v1694
    %1743 = vst [vmem:[%s7 + $0xe8] sm:$0xff] %v1735
    %1744 = vst [vmem:[%s7 + $0x1e0] sm:$0xff] %v1696
    %1745 = vst [vmem:[%s7 + $0x1e8] sm:$0xff] %v1698
    %1746 = vst [vmem:[%s7 + $0x1f0] sm:$0xff] %v1738
    %v1747 = vmax.f32 %v1594, %v1692
    %v1748 = vmax.f32 %v1595, %v1694
    %v1749 = vmax.f32 %v1596, %v1735
    %v1750 = vmax.f32 %v1597, %v1696
    %v1751 = vmax.f32 %v1598, %v1698
    %v1752 = vmax.f32 %v1599, %v1738
    %v1753 = vld [vmem:[%s5 + $0x78] sm:$0xff]
    %v1754 = vld [vmem:[%s5 + $0x80] sm:$0xf]
    %v1755 = vld [vmem:[%s5 + $0xfc] sm:$0xff]
    %v1756 = vld [vmem:[%s5 + $0x104] sm:$0xf]
    %v1757 = vld [vmem:[%s5 + $0x180] sm:$0xff]
    %v1758 = vld [vmem:[%s5 + $0x188] sm:$0xf]
    %v1759 = vld [vmem:[%s5 + $0x204] sm:$0xff]
    %v1760 = vld [vmem:[%s5 + $0x20c] sm:$0xf]
    %v1761 = vld [vmem:[#allocation9 + $0x1e] sm:$0x7]
    %v1763 = vlaneseq
    %v1764 = vshrl.u32 %v1763, 7
    %v1765 = vsub.s32 0, %v1764
    %v1766 = vrot.slane %v1761, %v1765
    %v1767 = vlaneseq
    %v1768 = vshrl.u32 %v1767, 7
    %v1769 = vsub.s32 1, %v1768
    %v1770 = vrot.slane %v1761, %v1769
    %v1771 = vlaneseq
    %v1772 = vshrl.u32 %v1771, 7
    %v1773 = vsub.s32 2, %v1772
    %v1774 = vrot.slane %v1761, %v1773
    %v1786 = vunpack.c.l.b16 %v1753
    %v1787 = vunpack.c.h.b16 %v1753
    %v1788 = vunpack.c.l.b16 %v1754
    %v1789 = vunpack.c.l.b16 %v1755
    %v1790 = vunpack.c.h.b16 %v1755
    %v1791 = vunpack.c.l.b16 %v1756
    %v1792 = vunpack.c.l.b16 %v1757
    %v1793 = vunpack.c.h.b16 %v1757
    %v1794 = vunpack.c.l.b16 %v1758
    %v1795 = vunpack.c.l.b16 %v1759
    %v1796 = vunpack.c.h.b16 %v1759
    %v1797 = vunpack.c.l.b16 %v1760
    %v1798 = vpack.c.b16 %v1789, %v1786
    %v1799 = vpack.c.b16 %v1790, %v1787
    %v1800 = vpack.c.b16 %v1791, %v1788
    %v1801 = vpack.c.b16 %v1795, %v1792
    %v1802 = vpack.c.b16 %v1796, %v1793
    %v1803 = vpack.c.b16 %v1797, %v1794
    %1810 = vmatprep.subr.bf16.mxu0 %v1799
    %1811 = vmatpush1.bf16.msra.mxu0 %v1798
    %1812 = vmatprep.subr.bf16.mxu0 %v1802
    %1813 = vmatpush1.bf16.msra.mxu0 %v1801
    %1814 = vmatprep.subr.bf16.mxu0 0
    %1815 = vmatpush1.bf16.msra.mxu0 0
    %1816 = vmatprep.subr.bf16.mxu0 0
    %1817 = vmatpush1.bf16.msra.mxu0 0
    %1818 = vmatprep.subr.bf16.mxu0 0
    %1819 = vmatpush1.bf16.msra.mxu0 0
    %1820 = vmatprep.subr.bf16.mxu0 0
    %1821 = vmatpush1.bf16.msra.mxu0 0
    %1822 = vmatprep.subr.bf16.mxu0 0
    %1823 = vmatpush1.bf16.msra.mxu0 0
    %1824 = vmatprep.subr.bf16.mxu0 0
    %1825 = vmatpush1.bf16.msra.mxu0 0
    %1826 = vmatprep.subr.bf16.mxu0 0
    %1827 = vmatpush1.bf16.msra.mxu0 0
    %1828 = vmatprep.subr.bf16.mxu0 0
    %1829 = vmatpush1.bf16.msra.mxu0 0
    %1830 = vmatprep.subr.bf16.mxu0 0
    %1831 = vmatpush1.bf16.msra.mxu0 0
    %1832 = vmatprep.subr.bf16.mxu0 0
    %1833 = vmatpush1.bf16.msra.mxu0 0
    %1834 = vmatprep.subr.bf16.mxu0 0
    %1835 = vmatpush1.bf16.msra.mxu0 0
    %1836 = vmatprep.subr.bf16.mxu0 0
    %1837 = vmatpush1.bf16.msra.mxu0 0
    %1838 = vmatprep.subr.bf16.mxu0 0
    %1839 = vmatpush1.bf16.msra.mxu0 0
    %1840 = vmatprep.subr.bf16.mxu0 0
    %1841 = vmatpush1.bf16.msra.mxu0 0
    %1842 = vmatprep.mubr.bf16.mxu0 0
    %1843 = vmatmul.mubr.bf16.gmra.mrb[0].mxu0 %v284
    %v1844 = vpop.f32.mrb[0].mxu0
    %v1845 = vadd.f32 %v1766, %v1844
    %v1846 = vpop.f32.mrb[0].mxu0
    %v1847 = vadd.f32 %v1770, %v1846
    %v1848 = vpop.f32.mrb[0].mxu0
    %v1849 = vadd.f32 %v1766, %v1848
    %v1850 = vpop.f32.mrb[0].mxu0
    %v1851 = vadd.f32 %v1770, %v1850
    %1852 = vdwg.mxu0
    %1853 = vmatprep.subr.bf16.mxu0 0
    %1854 = vmatpush1.bf16.msra.mxu0 %v1800
    %1855 = vmatprep.subr.bf16.mxu0 0
    %1856 = vmatpush1.bf16.msra.mxu0 %v1803
    %1857 = vmatprep.subr.bf16.mxu0 0
    %1858 = vmatpush1.bf16.msra.mxu0 0
    %1859 = vmatprep.subr.bf16.mxu0 0
    %1860 = vmatpush1.bf16.msra.mxu0 0
    %1861 = vmatprep.subr.bf16.mxu0 0
    %1862 = vmatpush1.bf16.msra.mxu0 0
    %1863 = vmatprep.subr.bf16.mxu0 0
    %1864 = vmatpush1.bf16.msra.mxu0 0
    %1865 = vmatprep.subr.bf16.mxu0 0
    %1866 = vmatpush1.bf16.msra.mxu0 0
    %1867 = vmatprep.subr.bf16.mxu0 0
    %1868 = vmatpush1.bf16.msra.mxu0 0
    %1869 = vmatprep.subr.bf16.mxu0 0
    %1870 = vmatpush1.bf16.msra.mxu0 0
    %1871 = vmatprep.subr.bf16.mxu0 0
    %1872 = vmatpush1.bf16.msra.mxu0 0
    %1873 = vmatprep.subr.bf16.mxu0 0
    %1874 = vmatpush1.bf16.msra.mxu0 0
    %1875 = vmatprep.subr.bf16.mxu0 0
    %1876 = vmatpush1.bf16.msra.mxu0 0
    %1877 = vmatprep.subr.bf16.mxu0 0
    %1878 = vmatpush1.bf16.msra.mxu0 0
    %1879 = vmatprep.subr.bf16.mxu0 0
    %1880 = vmatpush1.bf16.msra.mxu0 0
    %1881 = vmatprep.subr.bf16.mxu0 0
    %1882 = vmatpush1.bf16.msra.mxu0 0
    %1883 = vmatprep.subr.bf16.mxu0 0
    %1884 = vmatpush1.bf16.msra.mxu0 0
    %1885 = vmatprep.mubr.bf16.mxu0 0
    %1886 = vmatmul.mubr.bf16.gmra.mrb[0].mxu0 %v284
    %v1887 = vpop.f32.mrb[0].mxu0
    %v1888 = vadd.f32 %v1774, %v1887
    %v1889 = vpop.f32.mrb[0].mxu0
    %v1890 = vpop.f32.mrb[0].mxu0
    %v1891 = vadd.f32 %v1774, %v1890
    %v1892 = vpop.f32.mrb[0].mxu0
    %1893 = vdwg.mxu0
    %1894 = vst [vmem:[%s7 + $0xf0] sm:$0xff] %v1845
    %1895 = vst [vmem:[%s7 + $0xf8] sm:$0xff] %v1847
    %1896 = vst [vmem:[%s7 + $0x100] sm:$0xff] %v1888
    %1897 = vst [vmem:[%s7 + $0x1f8] sm:$0xff] %v1849
    %1898 = vst [vmem:[%s7 + $0x200] sm:$0xff] %v1851
    %1899 = vst [vmem:[%s7 + $0x208] sm:$0xff] %v1891
    %v1900 = vmax.f32 %v1747, %v1845
    %v1901 = vmax.f32 %v1748, %v1847
    %v1902 = vmax.f32 %v1749, %v1888
    %v1903 = vmax.f32 %v1750, %v1849
    %v1904 = vmax.f32 %v1751, %v1851
    %v1905 = vmax.f32 %v1752, %v1891
    %v1906 = vld [vmem:[%s7] sm:$0xff]
    %v1907 = vld [vmem:[%s7 + $0x8] sm:$0xff]
    %v1908 = vld [vmem:[%s7 + $0x10] sm:$0xff]
    %v1909 = vld [vmem:[%s7 + $0x108] sm:$0xff]
    %v1910 = vld [vmem:[%s7 + $0x110] sm:$0xff]
    %v1911 = vld [vmem:[%s7 + $0x118] sm:$0xff]
    %v1912 = vsub.f32 %v1906, %v1900
    %v1913 = vsub.f32 %v1907, %v1901
    %v1914 = vsub.f32 %v1908, %v1902
    %v1915 = vsub.f32 %v1909, %v1903
    %v1916 = vsub.f32 %v1910, %v1904
    %v1917 = vsub.f32 %v1911, %v1905
    %v1918 = vmul.f32 %v1912, 1.442695
    %v1919 = vpow.pop %v1918
    %v1920 = vmul.f32 %v1913, 1.442695
    %v1921 = vpow.pop %v1920
    %v1922 = vmul.f32 %v1914, 1.442695
    %v1923 = vpow.pop %v1922
    %v1924 = vmul.f32 %v1915, 1.442695
    %v1925 = vpow.pop %v1924
    %v1926 = vmul.f32 %v1916, 1.442695
    %v1927 = vpow.pop %v1926
    %v1928 = vmul.f32 %v1917, 1.442695
    %v1929 = vpow.pop %v1928
    %1930 = vst [vmem:[%s7] sm:$0xff] %v1919
    %1931 = vst [vmem:[%s7 + $0x8] sm:$0xff] %v1921
    %1932 = vst [vmem:[%s7 + $0x10] sm:$0xff] %v1923
    %1933 = vst [vmem:[%s7 + $0x108] sm:$0xff] %v1925
    %1934 = vst [vmem:[%s7 + $0x110] sm:$0xff] %v1927
    %1935 = vst [vmem:[%s7 + $0x118] sm:$0xff] %v1929
    %v1936 = vld [vmem:[%s7 + $0x18] sm:$0xff]
    %v1937 = vld [vmem:[%s7 + $0x20] sm:$0xff]
    %v1938 = vld [vmem:[%s7 + $0x28] sm:$0xff]
    %v1939 = vld [vmem:[%s7 + $0x120] sm:$0xff]
    %v1940 = vld [vmem:[%s7 + $0x128] sm:$0xff]
    %v1941 = vld [vmem:[%s7 + $0x130] sm:$0xff]
    %v1942 = vsub.f32 %v1936, %v1900
    %v1943 = vsub.f32 %v1937, %v1901
    %v1944 = vsub.f32 %v1938, %v1902
    %v1945 = vsub.f32 %v1939, %v1903
    %v1946 = vsub.f32 %v1940, %v1904
    %v1947 = vsub.f32 %v1941, %v1905
    %v1948 = vmul.f32 %v1942, 1.442695
    %v1949 = vpow.pop %v1948
    %v1950 = vmul.f32 %v1943, 1.442695
    %v1951 = vpow.pop %v1950
    %v1952 = vmul.f32 %v1944, 1.442695
    %v1953 = vpow.pop %v1952
    %v1954 = vmul.f32 %v1945, 1.442695
    %v1955 = vpow.pop %v1954
    %v1956 = vmul.f32 %v1946, 1.442695
    %v1957 = vpow.pop %v1956
    %v1958 = vmul.f32 %v1947, 1.442695
    %v1959 = vpow.pop %v1958
    %1960 = vst [vmem:[%s7 + $0x18] sm:$0xff] %v1949
    %1961 = vst [vmem:[%s7 + $0x20] sm:$0xff] %v1951
    %1962 = vst [vmem:[%s7 + $0x28] sm:$0xff] %v1953
    %1963 = vst [vmem:[%s7 + $0x120] sm:$0xff] %v1955
    %1964 = vst [vmem:[%s7 + $0x128] sm:$0xff] %v1957
    %1965 = vst [vmem:[%s7 + $0x130] sm:$0xff] %v1959
    %v1966 = vadd.f32 %v1919, %v1949
    %v1967 = vadd.f32 %v1921, %v1951
    %v1968 = vadd.f32 %v1923, %v1953
    %v1969 = vadd.f32 %v1925, %v1955
    %v1970 = vadd.f32 %v1927, %v1957
    %v1971 = vadd.f32 %v1929, %v1959
    %v1972 = vld [vmem:[%s7 + $0x30] sm:$0xff]
    %v1973 = vld [vmem:[%s7 + $0x38] sm:$0xff]
    %v1974 = vld [vmem:[%s7 + $0x40] sm:$0xff]
    %v1975 = vld [vmem:[%s7 + $0x138] sm:$0xff]
    %v1976 = vld [vmem:[%s7 + $0x140] sm:$0xff]
    %v1977 = vld [vmem:[%s7 + $0x148] sm:$0xff]
    %v1978 = vsub.f32 %v1972, %v1900
    %v1979 = vsub.f32 %v1973, %v1901
    %v1980 = vsub.f32 %v1974, %v1902
    %v1981 = vsub.f32 %v1975, %v1903
    %v1982 = vsub.f32 %v1976, %v1904
    %v1983 = vsub.f32 %v1977, %v1905
    %v1984 = vmul.f32 %v1978, 1.442695
    %v1985 = vpow.pop %v1984
    %v1986 = vmul.f32 %v1979, 1.442695
    %v1987 = vpow.pop %v1986
    %v1988 = vmul.f32 %v1980, 1.442695
    %v1989 = vpow.pop %v1988
    %v1990 = vmul.f32 %v1981, 1.442695
    %v1991 = vpow.pop %v1990
    %v1992 = vmul.f32 %v1982, 1.442695
    %v1993 = vpow.pop %v1992
    %v1994 = vmul.f32 %v1983, 1.442695
    %v1995 = vpow.pop %v1994
    %1996 = vst [vmem:[%s7 + $0x30] sm:$0xff] %v1985
    %1997 = vst [vmem:[%s7 + $0x38] sm:$0xff] %v1987
    %1998 = vst [vmem:[%s7 + $0x40] sm:$0xff] %v1989
    %1999 = vst [vmem:[%s7 + $0x138] sm:$0xff] %v1991
    %2000 = vst [vmem:[%s7 + $0x140] sm:$0xff] %v1993
    %2001 = vst [vmem:[%s7 + $0x148] sm:$0xff] %v1995
    %v2002 = vadd.f32 %v1966, %v1985
    %v2003 = vadd.f32 %v1967, %v1987
    %v2004 = vadd.f32 %v1968, %v1989
    %v2005 = vadd.f32 %v1969, %v1991
    %v2006 = vadd.f32 %v1970, %v1993
    %v2007 = vadd.f32 %v1971, %v1995
    %v2008 = vld [vmem:[%s7 + $0x48] sm:$0xff]
    %v2009 = vld [vmem:[%s7 + $0x50] sm:$0xff]
    %v2010 = vld [vmem:[%s7 + $0x58] sm:$0xff]
    %v2011 = vld [vmem:[%s7 + $0x150] sm:$0xff]
    %v2012 = vld [vmem:[%s7 + $0x158] sm:$0xff]
    %v2013 = vld [vmem:[%s7 + $0x160] sm:$0xff]
    %v2014 = vsub.f32 %v2008, %v1900
    %v2015 = vsub.f32 %v2009, %v1901
    %v2016 = vsub.f32 %v2010, %v1902
    %v2017 = vsub.f32 %v2011, %v1903
    %v2018 = vsub.f32 %v2012, %v1904
    %v2019 = vsub.f32 %v2013, %v1905
    %v2020 = vmul.f32 %v2014, 1.442695
    %v2021 = vpow.pop %v2020
    %v2022 = vmul.f32 %v2015, 1.442695
    %v2023 = vpow.pop %v2022
    %v2024 = vmul.f32 %v2016, 1.442695
    %v2025 = vpow.pop %v2024
    %v2026 = vmul.f32 %v2017, 1.442695
    %v2027 = vpow.pop %v2026
    %v2028 = vmul.f32 %v2018, 1.442695
    %v2029 = vpow.pop %v2028
    %v2030 = vmul.f32 %v2019, 1.442695
    %v2031 = vpow.pop %v2030
    %2032 = vst [vmem:[%s7 + $0x48] sm:$0xff] %v2021
    %2033 = vst [vmem:[%s7 + $0x50] sm:$0xff] %v2023
    %2034 = vst [vmem:[%s7 + $0x58] sm:$0xff] %v2025
    %2035 = vst [vmem:[%s7 + $0x150] sm:$0xff] %v2027
    %2036 = vst [vmem:[%s7 + $0x158] sm:$0xff] %v2029
    %2037 = vst [vmem:[%s7 + $0x160] sm:$0xff] %v2031
    %v2038 = vadd.f32 %v2002, %v2021
    %v2039 = vadd.f32 %v2003, %v2023
    %v2040 = vadd.f32 %v2004, %v2025
    %v2041 = vadd.f32 %v2005, %v2027
    %v2042 = vadd.f32 %v2006, %v2029
    %v2043 = vadd.f32 %v2007, %v2031
    %v2044 = vld [vmem:[%s7 + $0x60] sm:$0xff]
    %v2045 = vld [vmem:[%s7 + $0x68] sm:$0xff]
    %v2046 = vld [vmem:[%s7 + $0x70] sm:$0xff]
    %v2047 = vld [vmem:[%s7 + $0x168] sm:$0xff]
    %v2048 = vld [vmem:[%s7 + $0x170] sm:$0xff]
    %v2049 = vld [vmem:[%s7 + $0x178] sm:$0xff]
    %v2050 = vsub.f32 %v2044, %v1900
    %v2051 = vsub.f32 %v2045, %v1901
    %v2052 = vsub.f32 %v2046, %v1902
    %v2053 = vsub.f32 %v2047, %v1903
    %v2054 = vsub.f32 %v2048, %v1904
    %v2055 = vsub.f32 %v2049, %v1905
    %v2056 = vmul.f32 %v2050, 1.442695
    %v2057 = vpow.pop %v2056
    %v2058 = vmul.f32 %v2051, 1.442695
    %v2059 = vpow.pop %v2058
    %v2060 = vmul.f32 %v2052, 1.442695
    %v2061 = vpow.pop %v2060
    %v2062 = vmul.f32 %v2053, 1.442695
    %v2063 = vpow.pop %v2062
    %v2064 = vmul.f32 %v2054, 1.442695
    %v2065 = vpow.pop %v2064
    %v2066 = vmul.f32 %v2055, 1.442695
    %v2067 = vpow.pop %v2066
    %2068 = vst [vmem:[%s7 + $0x60] sm:$0xff] %v2057
    %2069 = vst [vmem:[%s7 + $0x68] sm:$0xff] %v2059
    %2070 = vst [vmem:[%s7 + $0x70] sm:$0xff] %v2061
    %2071 = vst [vmem:[%s7 + $0x168] sm:$0xff] %v2063
    %2072 = vst [vmem:[%s7 + $0x170] sm:$0xff] %v2065
    %2073 = vst [vmem:[%s7 + $0x178] sm:$0xff] %v2067
    %v2074 = vadd.f32 %v2038, %v2057
    %v2075 = vadd.f32 %v2039, %v2059
    %v2076 = vadd.f32 %v2040, %v2061
    %v2077 = vadd.f32 %v2041, %v2063
    %v2078 = vadd.f32 %v2042, %v2065
    %v2079 = vadd.f32 %v2043, %v2067
    %v2080 = vld [vmem:[%s7 + $0x78] sm:$0xff]
    %v2081 = vld [vmem:[%s7 + $0x80] sm:$0xff]
    %v2082 = vld [vmem:[%s7 + $0x88] sm:$0xff]
    %v2083 = vld [vmem:[%s7 + $0x180] sm:$0xff]
    %v2084 = vld [vmem:[%s7 + $0x188] sm:$0xff]
    %v2085 = vld [vmem:[%s7 + $0x190] sm:$0xff]
    %v2086 = vsub.f32 %v2080, %v1900
    %v2087 = vsub.f32 %v2081, %v1901
    %v2088 = vsub.f32 %v2082, %v1902
    %v2089 = vsub.f32 %v2083, %v1903
    %v2090 = vsub.f32 %v2084, %v1904
    %v2091 = vsub.f32 %v2085, %v1905
    %v2092 = vmul.f32 %v2086, 1.442695
    %v2093 = vpow.pop %v2092
    %v2094 = vmul.f32 %v2087, 1.442695
    %v2095 = vpow.pop %v2094
    %v2096 = vmul.f32 %v2088, 1.442695
    %v2097 = vpow.pop %v2096
    %v2098 = vmul.f32 %v2089, 1.442695
    %v2099 = vpow.pop %v2098
    %v2100 = vmul.f32 %v2090, 1.442695
    %v2101 = vpow.pop %v2100
    %v2102 = vmul.f32 %v2091, 1.442695
    %v2103 = vpow.pop %v2102
    %2104 = vst [vmem:[%s7 + $0x78] sm:$0xff] %v2093
    %2105 = vst [vmem:[%s7 + $0x80] sm:$0xff] %v2095
    %2106 = vst [vmem:[%s7 + $0x88] sm:$0xff] %v2097
    %2107 = vst [vmem:[%s7 + $0x180] sm:$0xff] %v2099
    %2108 = vst [vmem:[%s7 + $0x188] sm:$0xff] %v2101
    %2109 = vst [vmem:[%s7 + $0x190] sm:$0xff] %v2103
    %v2110 = vadd.f32 %v2074, %v2093
    %v2111 = vadd.f32 %v2075, %v2095
    %v2112 = vadd.f32 %v2076, %v2097
    %v2113 = vadd.f32 %v2077, %v2099
    %v2114 = vadd.f32 %v2078, %v2101
    %v2115 = vadd.f32 %v2079, %v2103
    %v2116 = vld [vmem:[%s7 + $0x90] sm:$0xff]
    %v2117 = vld [vmem:[%s7 + $0x98] sm:$0xff]
    %v2118 = vld [vmem:[%s7 + $0xa0] sm:$0xff]
    %v2119 = vld [vmem:[%s7 + $0x198] sm:$0xff]
    %v2120 = vld [vmem:[%s7 + $0x1a0] sm:$0xff]
    %v2121 = vld [vmem:[%s7 + $0x1a8] sm:$0xff]
    %v2122 = vsub.f32 %v2116, %v1900
    %v2123 = vsub.f32 %v2117, %v1901
    %v2124 = vsub.f32 %v2118, %v1902
    %v2125 = vsub.f32 %v2119, %v1903
    %v2126 = vsub.f32 %v2120, %v1904
    %v2127 = vsub.f32 %v2121, %v1905
    %v2128 = vmul.f32 %v2122, 1.442695
    %v2129 = vpow.pop %v2128
    %v2130 = vmul.f32 %v2123, 1.442695
    %v2131 = vpow.pop %v2130
    %v2132 = vmul.f32 %v2124, 1.442695
    %v2133 = vpow.pop %v2132
    %v2134 = vmul.f32 %v2125, 1.442695
    %v2135 = vpow.pop %v2134
    %v2136 = vmul.f32 %v2126, 1.442695
    %v2137 = vpow.pop %v2136
    %v2138 = vmul.f32 %v2127, 1.442695
    %v2139 = vpow.pop %v2138
    %2140 = vst [vmem:[%s7 + $0x90] sm:$0xff] %v2129
    %2141 = vst [vmem:[%s7 + $0x98] sm:$0xff] %v2131
    %2142 = vst [vmem:[%s7 + $0xa0] sm:$0xff] %v2133
    %2143 = vst [vmem:[%s7 + $0x198] sm:$0xff] %v2135
    %2144 = vst [vmem:[%s7 + $0x1a0] sm:$0xff] %v2137
    %2145 = vst [vmem:[%s7 + $0x1a8] sm:$0xff] %v2139
    %v2146 = vadd.f32 %v2110, %v2129
    %v2147 = vadd.f32 %v2111, %v2131
    %v2148 = vadd.f32 %v2112, %v2133
    %v2149 = vadd.f32 %v2113, %v2135
    %v2150 = vadd.f32 %v2114, %v2137
    %v2151 = vadd.f32 %v2115, %v2139
    %v2152 = vld [vmem:[%s7 + $0xa8] sm:$0xff]
    %v2153 = vld [vmem:[%s7 + $0xb0] sm:$0xff]
    %v2154 = vld [vmem:[%s7 + $0xb8] sm:$0xff]
    %v2155 = vld [vmem:[%s7 + $0x1b0] sm:$0xff]
    %v2156 = vld [vmem:[%s7 + $0x1b8] sm:$0xff]
    %v2157 = vld [vmem:[%s7 + $0x1c0] sm:$0xff]
    %v2158 = vsub.f32 %v2152, %v1900
    %v2159 = vsub.f32 %v2153, %v1901
    %v2160 = vsub.f32 %v2154, %v1902
    %v2161 = vsub.f32 %v2155, %v1903
    %v2162 = vsub.f32 %v2156, %v1904
    %v2163 = vsub.f32 %v2157, %v1905
    %v2164 = vmul.f32 %v2158, 1.442695
    %v2165 = vpow.pop %v2164
    %v2166 = vmul.f32 %v2159, 1.442695
    %v2167 = vpow.pop %v2166
    %v2168 = vmul.f32 %v2160, 1.442695
    %v2169 = vpow.pop %v2168
    %v2170 = vmul.f32 %v2161, 1.442695
    %v2171 = vpow.pop %v2170
    %v2172 = vmul.f32 %v2162, 1.442695
    %v2173 = vpow.pop %v2172
    %v2174 = vmul.f32 %v2163, 1.442695
    %v2175 = vpow.pop %v2174
    %2176 = vst [vmem:[%s7 + $0xa8] sm:$0xff] %v2165
    %2177 = vst [vmem:[%s7 + $0xb0] sm:$0xff] %v2167
    %2178 = vst [vmem:[%s7 + $0xb8] sm:$0xff] %v2169
    %2179 = vst [vmem:[%s7 + $0x1b0] sm:$0xff] %v2171
    %2180 = vst [vmem:[%s7 + $0x1b8] sm:$0xff] %v2173
    %2181 = vst [vmem:[%s7 + $0x1c0] sm:$0xff] %v2175
    %v2182 = vadd.f32 %v2146, %v2165
    %v2183 = vadd.f32 %v2147, %v2167
    %v2184 = vadd.f32 %v2148, %v2169
    %v2185 = vadd.f32 %v2149, %v2171
    %v2186 = vadd.f32 %v2150, %v2173
    %v2187 = vadd.f32 %v2151, %v2175
    %v2188 = vld [vmem:[%s7 + $0xc0] sm:$0xff]
    %v2189 = vld [vmem:[%s7 + $0xc8] sm:$0xff]
    %v2190 = vld [vmem:[%s7 + $0xd0] sm:$0xff]
    %v2191 = vld [vmem:[%s7 + $0x1c8] sm:$0xff]
    %v2192 = vld [vmem:[%s7 + $0x1d0] sm:$0xff]
    %v2193 = vld [vmem:[%s7 + $0x1d8] sm:$0xff]
    %v2194 = vsub.f32 %v2188, %v1900
    %v2195 = vsub.f32 %v2189, %v1901
    %v2196 = vsub.f32 %v2190, %v1902
    %v2197 = vsub.f32 %v2191, %v1903
    %v2198 = vsub.f32 %v2192, %v1904
    %v2199 = vsub.f32 %v2193, %v1905
    %v2200 = vmul.f32 %v2194, 1.442695
    %v2201 = vpow.pop %v2200
    %v2202 = vmul.f32 %v2195, 1.442695
    %v2203 = vpow.pop %v2202
    %v2204 = vmul.f32 %v2196, 1.442695
    %v2205 = vpow.pop %v2204
    %v2206 = vmul.f32 %v2197, 1.442695
    %v2207 = vpow.pop %v2206
    %v2208 = vmul.f32 %v2198, 1.442695
    %v2209 = vpow.pop %v2208
    %v2210 = vmul.f32 %v2199, 1.442695
    %v2211 = vpow.pop %v2210
    %2212 = vst [vmem:[%s7 + $0xc0] sm:$0xff] %v2201
    %2213 = vst [vmem:[%s7 + $0xc8] sm:$0xff] %v2203
    %2214 = vst [vmem:[%s7 + $0xd0] sm:$0xff] %v2205
    %2215 = vst [vmem:[%s7 + $0x1c8] sm:$0xff] %v2207
    %2216 = vst [vmem:[%s7 + $0x1d0] sm:$0xff] %v2209
    %2217 = vst [vmem:[%s7 + $0x1d8] sm:$0xff] %v2211
    %v2218 = vadd.f32 %v2182, %v2201
    %v2219 = vadd.f32 %v2183, %v2203
    %v2220 = vadd.f32 %v2184, %v2205
    %v2221 = vadd.f32 %v2185, %v2207
    %v2222 = vadd.f32 %v2186, %v2209
    %v2223 = vadd.f32 %v2187, %v2211
    %v2224 = vld [vmem:[%s7 + $0xd8] sm:$0xff]
    %v2225 = vld [vmem:[%s7 + $0xe0] sm:$0xff]
    %v2226 = vld [vmem:[%s7 + $0xe8] sm:$0xff]
    %v2227 = vld [vmem:[%s7 + $0x1e0] sm:$0xff]
    %v2228 = vld [vmem:[%s7 + $0x1e8] sm:$0xff]
    %v2229 = vld [vmem:[%s7 + $0x1f0] sm:$0xff]
    %v2230 = vsub.f32 %v2224, %v1900
    %v2231 = vsub.f32 %v2225, %v1901
    %v2232 = vsub.f32 %v2226, %v1902
    %v2233 = vsub.f32 %v2227, %v1903
    %v2234 = vsub.f32 %v2228, %v1904
    %v2235 = vsub.f32 %v2229, %v1905
    %v2236 = vmul.f32 %v2230, 1.442695
    %v2237 = vpow.pop %v2236
    %v2238 = vmul.f32 %v2231, 1.442695
    %v2239 = vpow.pop %v2238
    %v2240 = vmul.f32 %v2232, 1.442695
    %v2241 = vpow.pop %v2240
    %v2242 = vmul.f32 %v2233, 1.442695
    %v2243 = vpow.pop %v2242
    %v2244 = vmul.f32 %v2234, 1.442695
    %v2245 = vpow.pop %v2244
    %v2246 = vmul.f32 %v2235, 1.442695
    %v2247 = vpow.pop %v2246
    %2248 = vst [vmem:[%s7 + $0xd8] sm:$0xff] %v2237
    %2249 = vst [vmem:[%s7 + $0xe0] sm:$0xff] %v2239
    %2250 = vst [vmem:[%s7 + $0xe8] sm:$0xff] %v2241
    %2251 = vst [vmem:[%s7 + $0x1e0] sm:$0xff] %v2243
    %2252 = vst [vmem:[%s7 + $0x1e8] sm:$0xff] %v2245
    %2253 = vst [vmem:[%s7 + $0x1f0] sm:$0xff] %v2247
    %v2254 = vadd.f32 %v2218, %v2237
    %v2255 = vadd.f32 %v2219, %v2239
    %v2256 = vadd.f32 %v2220, %v2241
    %v2257 = vadd.f32 %v2221, %v2243
    %v2258 = vadd.f32 %v2222, %v2245
    %v2259 = vadd.f32 %v2223, %v2247
    %v2260 = vld [vmem:[%s7 + $0xf0] sm:$0xff]
    %v2261 = vld [vmem:[%s7 + $0xf8] sm:$0xff]
    %v2262 = vld [vmem:[%s7 + $0x100] sm:$0xff]
    %v2263 = vld [vmem:[%s7 + $0x1f8] sm:$0xff]
    %v2264 = vld [vmem:[%s7 + $0x200] sm:$0xff]
    %v2265 = vld [vmem:[%s7 + $0x208] sm:$0xff]
    %v2266 = vsub.f32 %v2260, %v1900
    %v2267 = vsub.f32 %v2261, %v1901
    %v2268 = vsub.f32 %v2262, %v1902
    %v2269 = vsub.f32 %v2263, %v1903
    %v2270 = vsub.f32 %v2264, %v1904
    %v2271 = vsub.f32 %v2265, %v1905
    %v2272 = vmul.f32 %v2266, 1.442695
    %v2273 = vpow.pop %v2272
    %v2274 = vmul.f32 %v2267, 1.442695
    %v2275 = vpow.pop %v2274
    %v2276 = vmul.f32 %v2268, 1.442695
    %v2277 = vpow.pop %v2276
    %v2278 = vmul.f32 %v2269, 1.442695
    %v2279 = vpow.pop %v2278
    %v2280 = vmul.f32 %v2270, 1.442695
    %v2281 = vpow.pop %v2280
    %v2282 = vmul.f32 %v2271, 1.442695
    %v2283 = vpow.pop %v2282
    %2284 = vst [vmem:[%s7 + $0xf0] sm:$0xff] %v2273
    %2285 = vst [vmem:[%s7 + $0xf8] sm:$0xff] %v2275
    %2286 = vst [vmem:[%s7 + $0x100] sm:$0xff] %v2277
    %2287 = vst [vmem:[%s7 + $0x1f8] sm:$0xff] %v2279
    %2288 = vst [vmem:[%s7 + $0x200] sm:$0xff] %v2281
    %2289 = vst [vmem:[%s7 + $0x208] sm:$0xff] %v2283
    %v2290 = vadd.f32 %v2254, %v2273
    %v2291 = vadd.f32 %v2255, %v2275
    %v2292 = vadd.f32 %v2256, %v2277
    %v2293 = vadd.f32 %v2257, %v2279
    %v2294 = vadd.f32 %v2258, %v2281
    %v2295 = vadd.f32 %v2259, %v2283
    %v2296 = vrcp.pop %v2290
    %v2297 = vrcp.pop %v2291
    %v2298 = vrcp.pop %v2292
    %v2299 = vrcp.pop %v2293
    %v2300 = vrcp.pop %v2294
    %v2301 = vrcp.pop %v2295
    %v2302 = vmul.f32 %v2290, %v2296
    %v2303 = vmul.f32 %v2291, %v2297
    %v2304 = vmul.f32 %v2292, %v2298
    %v2305 = vmul.f32 %v2293, %v2299
    %v2306 = vmul.f32 %v2294, %v2300
    %v2307 = vmul.f32 %v2295, %v2301
    %v2308 = vsub.f32 2.0, %v2302
    %v2309 = vsub.f32 2.0, %v2303
    %v2310 = vsub.f32 2.0, %v2304
    %v2311 = vsub.f32 2.0, %v2305
    %v2312 = vsub.f32 2.0, %v2306
    %v2313 = vsub.f32 2.0, %v2307
    %v2314 = vmul.f32 %v2296, %v2308
    %v2315 = vmul.f32 %v2297, %v2309
    %v2316 = vmul.f32 %v2298, %v2310
    %v2317 = vmul.f32 %v2299, %v2311
    %v2318 = vmul.f32 %v2300, %v2312
    %v2319 = vmul.f32 %v2301, %v2313
    %v2320 = vld [vmem:[%s7] sm:$0xff]
    %v2321 = vld [vmem:[%s7 + $0x8] sm:$0xff]
    %v2322 = vld [vmem:[%s7 + $0x10] sm:$0xff]
    %v2323 = vld [vmem:[%s7 + $0x108] sm:$0xff]
    %v2324 = vld [vmem:[%s7 + $0x110] sm:$0xff]
    %v2325 = vld [vmem:[%s7 + $0x118] sm:$0xff]
    %v2326 = vmul.f32 %v2320, %v2314
    %v2327 = vmul.f32 %v2321, %v2315
    %v2328 = vmul.f32 %v2322, %v2316
    %v2329 = vmul.f32 %v2323, %v2317
    %v2330 = vmul.f32 %v2324, %v2318
    %v2331 = vmul.f32 %v2325, %v2319
    %2332 = vst [vmem:[%s7] sm:$0xff] %v2326
    %2333 = vst [vmem:[%s7 + $0x8] sm:$0xff] %v2327
    %2334 = vst [vmem:[%s7 + $0x10] sm:$0xff] %v2328
    %2335 = vst [vmem:[%s7 + $0x108] sm:$0xff] %v2329
    %2336 = vst [vmem:[%s7 + $0x110] sm:$0xff] %v2330
    %2337 = vst [vmem:[%s7 + $0x118] sm:$0xff] %v2331
    %v2338 = vld [vmem:[%s7 + $0x18] sm:$0xff]
    %v2339 = vld [vmem:[%s7 + $0x20] sm:$0xff]
    %v2340 = vld [vmem:[%s7 + $0x28] sm:$0xff]
    %v2341 = vld [vmem:[%s7 + $0x120] sm:$0xff]
    %v2342 = vld [vmem:[%s7 + $0x128] sm:$0xff]
    %v2343 = vld [vmem:[%s7 + $0x130] sm:$0xff]
    %v2344 = vmul.f32 %v2338, %v2314
    %v2345 = vmul.f32 %v2339, %v2315
    %v2346 = vmul.f32 %v2340, %v2316
    %v2347 = vmul.f32 %v2341, %v2317
    %v2348 = vmul.f32 %v2342, %v2318
    %v2349 = vmul.f32 %v2343, %v2319
    %2350 = vst [vmem:[%s7 + $0x18] sm:$0xff] %v2344
    %2351 = vst [vmem:[%s7 + $0x20] sm:$0xff] %v2345
    %2352 = vst [vmem:[%s7 + $0x28] sm:$0xff] %v2346
    %2353 = vst [vmem:[%s7 + $0x120] sm:$0xff] %v2347
    %2354 = vst [vmem:[%s7 + $0x128] sm:$0xff] %v2348
    %2355 = vst [vmem:[%s7 + $0x130] sm:$0xff] %v2349
    %v2356 = vld [vmem:[%s7 + $0x30] sm:$0xff]
    %v2357 = vld [vmem:[%s7 + $0x38] sm:$0xff]
    %v2358 = vld [vmem:[%s7 + $0x40] sm:$0xff]
    %v2359 = vld [vmem:[%s7 + $0x138] sm:$0xff]
    %v2360 = vld [vmem:[%s7 + $0x140] sm:$0xff]
    %v2361 = vld [vmem:[%s7 + $0x148] sm:$0xff]
    %v2362 = vmul.f32 %v2356, %v2314
    %v2363 = vmul.f32 %v2357, %v2315
    %v2364 = vmul.f32 %v2358, %v2316
    %v2365 = vmul.f32 %v2359, %v2317
    %v2366 = vmul.f32 %v2360, %v2318
    %v2367 = vmul.f32 %v2361, %v2319
    %2368 = vst [vmem:[%s7 + $0x30] sm:$0xff] %v2362
    %2369 = vst [vmem:[%s7 + $0x38] sm:$0xff] %v2363
    %2370 = vst [vmem:[%s7 + $0x40] sm:$0xff] %v2364
    %2371 = vst [vmem:[%s7 + $0x138] sm:$0xff] %v2365
    %2372 = vst [vmem:[%s7 + $0x140] sm:$0xff] %v2366
    %2373 = vst [vmem:[%s7 + $0x148] sm:$0xff] %v2367
    %v2374 = vld [vmem:[%s7 + $0x48] sm:$0xff]
    %v2375 = vld [vmem:[%s7 + $0x50] sm:$0xff]
    %v2376 = vld [vmem:[%s7 + $0x58] sm:$0xff]
    %v2377 = vld [vmem:[%s7 + $0x150] sm:$0xff]
    %v2378 = vld [vmem:[%s7 + $0x158] sm:$0xff]
    %v2379 = vld [vmem:[%s7 + $0x160] sm:$0xff]
    %v2380 = vmul.f32 %v2374, %v2314
    %v2381 = vmul.f32 %v2375, %v2315
    %v2382 = vmul.f32 %v2376, %v2316
    %v2383 = vmul.f32 %v2377, %v2317
    %v2384 = vmul.f32 %v2378, %v2318
    %v2385 = vmul.f32 %v2379, %v2319
    %2386 = vst [vmem:[%s7 + $0x48] sm:$0xff] %v2380
    %2387 = vst [vmem:[%s7 + $0x50] sm:$0xff] %v2381
    %2388 = vst [vmem:[%s7 + $0x58] sm:$0xff] %v2382
    %2389 = vst [vmem:[%s7 + $0x150] sm:$0xff] %v2383
    %2390 = vst [vmem:[%s7 + $0x158] sm:$0xff] %v2384
    %2391 = vst [vmem:[%s7 + $0x160] sm:$0xff] %v2385
    %v2392 = vld [vmem:[%s7 + $0x60] sm:$0xff]
    %v2393 = vld [vmem:[%s7 + $0x68] sm:$0xff]
    %v2394 = vld [vmem:[%s7 + $0x70] sm:$0xff]
    %v2395 = vld [vmem:[%s7 + $0x168] sm:$0xff]
    %v2396 = vld [vmem:[%s7 + $0x170] sm:$0xff]
    %v2397 = vld [vmem:[%s7 + $0x178] sm:$0xff]
    %v2398 = vmul.f32 %v2392, %v2314
    %v2399 = vmul.f32 %v2393, %v2315
    %v2400 = vmul.f32 %v2394, %v2316
    %v2401 = vmul.f32 %v2395, %v2317
    %v2402 = vmul.f32 %v2396, %v2318
    %v2403 = vmul.f32 %v2397, %v2319
    %2404 = vst [vmem:[%s7 + $0x60] sm:$0xff] %v2398
    %2405 = vst [vmem:[%s7 + $0x68] sm:$0xff] %v2399
    %2406 = vst [vmem:[%s7 + $0x70] sm:$0xff] %v2400
    %2407 = vst [vmem:[%s7 + $0x168] sm:$0xff] %v2401
    %2408 = vst [vmem:[%s7 + $0x170] sm:$0xff] %v2402
    %2409 = vst [vmem:[%s7 + $0x178] sm:$0xff] %v2403
    %v2410 = vld [vmem:[%s7 + $0x78] sm:$0xff]
    %v2411 = vld [vmem:[%s7 + $0x80] sm:$0xff]
    %v2412 = vld [vmem:[%s7 + $0x88] sm:$0xff]
    %v2413 = vld [vmem:[%s7 + $0x180] sm:$0xff]
    %v2414 = vld [vmem:[%s7 + $0x188] sm:$0xff]
    %v2415 = vld [vmem:[%s7 + $0x190] sm:$0xff]
    %v2416 = vmul.f32 %v2410, %v2314
    %v2417 = vmul.f32 %v2411, %v2315
    %v2418 = vmul.f32 %v2412, %v2316
    %v2419 = vmul.f32 %v2413, %v2317
    %v2420 = vmul.f32 %v2414, %v2318
    %v2421 = vmul.f32 %v2415, %v2319
    %2422 = vst [vmem:[%s7 + $0x78] sm:$0xff] %v2416
    %2423 = vst [vmem:[%s7 + $0x80] sm:$0xff] %v2417
    %2424 = vst [vmem:[%s7 + $0x88] sm:$0xff] %v2418
    %2425 = vst [vmem:[%s7 + $0x180] sm:$0xff] %v2419
    %2426 = vst [vmem:[%s7 + $0x188] sm:$0xff] %v2420
    %2427 = vst [vmem:[%s7 + $0x190] sm:$0xff] %v2421
    %v2428 = vld [vmem:[%s7 + $0x90] sm:$0xff]
    %v2429 = vld [vmem:[%s7 + $0x98] sm:$0xff]
    %v2430 = vld [vmem:[%s7 + $0xa0] sm:$0xff]
    %v2431 = vld [vmem:[%s7 + $0x198] sm:$0xff]
    %v2432 = vld [vmem:[%s7 + $0x1a0] sm:$0xff]
    %v2433 = vld [vmem:[%s7 + $0x1a8] sm:$0xff]
    %v2434 = vmul.f32 %v2428, %v2314
    %v2435 = vmul.f32 %v2429, %v2315
    %v2436 = vmul.f32 %v2430, %v2316
    %v2437 = vmul.f32 %v2431, %v2317
    %v2438 = vmul.f32 %v2432, %v2318
    %v2439 = vmul.f32 %v2433, %v2319
    %2440 = vst [vmem:[%s7 + $0x90] sm:$0xff] %v2434
    %2441 = vst [vmem:[%s7 + $0x98] sm:$0xff] %v2435
    %2442 = vst [vmem:[%s7 + $0xa0] sm:$0xff] %v2436
    %2443 = vst [vmem:[%s7 + $0x198] sm:$0xff] %v2437
    %2444 = vst [vmem:[%s7 + $0x1a0] sm:$0xff] %v2438
    %2445 = vst [vmem:[%s7 + $0x1a8] sm:$0xff] %v2439
    %v2446 = vld [vmem:[%s7 + $0xa8] sm:$0xff]
    %v2447 = vld [vmem:[%s7 + $0xb0] sm:$0xff]
    %v2448 = vld [vmem:[%s7 + $0xb8] sm:$0xff]
    %v2449 = vld [vmem:[%s7 + $0x1b0] sm:$0xff]
    %v2450 = vld [vmem:[%s7 + $0x1b8] sm:$0xff]
    %v2451 = vld [vmem:[%s7 + $0x1c0] sm:$0xff]
    %v2452 = vmul.f32 %v2446, %v2314
    %v2453 = vmul.f32 %v2447, %v2315
    %v2454 = vmul.f32 %v2448, %v2316
    %v2455 = vmul.f32 %v2449, %v2317
    %v2456 = vmul.f32 %v2450, %v2318
    %v2457 = vmul.f32 %v2451, %v2319
    %2458 = vst [vmem:[%s7 + $0xa8] sm:$0xff] %v2452
    %2459 = vst [vmem:[%s7 + $0xb0] sm:$0xff] %v2453
    %2460 = vst [vmem:[%s7 + $0xb8] sm:$0xff] %v2454
    %2461 = vst [vmem:[%s7 + $0x1b0] sm:$0xff] %v2455
    %2462 = vst [vmem:[%s7 + $0x1b8] sm:$0xff] %v2456
    %2463 = vst [vmem:[%s7 + $0x1c0] sm:$0xff] %v2457
    %v2464 = vld [vmem:[%s7 + $0xc0] sm:$0xff]
    %v2465 = vld [vmem:[%s7 + $0xc8] sm:$0xff]
    %v2466 = vld [vmem:[%s7 + $0xd0] sm:$0xff]
    %v2467 = vld [vmem:[%s7 + $0x1c8] sm:$0xff]
    %v2468 = vld [vmem:[%s7 + $0x1d0] sm:$0xff]
    %v2469 = vld [vmem:[%s7 + $0x1d8] sm:$0xff]
    %v2470 = vmul.f32 %v2464, %v2314
    %v2471 = vmul.f32 %v2465, %v2315
    %v2472 = vmul.f32 %v2466, %v2316
    %v2473 = vmul.f32 %v2467, %v2317
    %v2474 = vmul.f32 %v2468, %v2318
    %v2475 = vmul.f32 %v2469, %v2319
    %2476 = vst [vmem:[%s7 + $0xc0] sm:$0xff] %v2470
    %2477 = vst [vmem:[%s7 + $0xc8] sm:$0xff] %v2471
    %2478 = vst [vmem:[%s7 + $0xd0] sm:$0xff] %v2472
    %2479 = vst [vmem:[%s7 + $0x1c8] sm:$0xff] %v2473
    %2480 = vst [vmem:[%s7 + $0x1d0] sm:$0xff] %v2474
    %2481 = vst [vmem:[%s7 + $0x1d8] sm:$0xff] %v2475
    %v2482 = vld [vmem:[%s7 + $0xd8] sm:$0xff]
    %v2483 = vld [vmem:[%s7 + $0xe0] sm:$0xff]
    %v2484 = vld [vmem:[%s7 + $0xe8] sm:$0xff]
    %v2485 = vld [vmem:[%s7 + $0x1e0] sm:$0xff]
    %v2486 = vld [vmem:[%s7 + $0x1e8] sm:$0xff]
    %v2487 = vld [vmem:[%s7 + $0x1f0] sm:$0xff]
    %v2488 = vmul.f32 %v2482, %v2314
    %v2489 = vmul.f32 %v2483, %v2315
    %v2490 = vmul.f32 %v2484, %v2316
    %v2491 = vmul.f32 %v2485, %v2317
    %v2492 = vmul.f32 %v2486, %v2318
    %v2493 = vmul.f32 %v2487, %v2319
    %2494 = vst [vmem:[%s7 + $0xd8] sm:$0xff] %v2488
    %2495 = vst [vmem:[%s7 + $0xe0] sm:$0xff] %v2489
    %2496 = vst [vmem:[%s7 + $0xe8] sm:$0xff] %v2490
    %2497 = vst [vmem:[%s7 + $0x1e0] sm:$0xff] %v2491
    %2498 = vst [vmem:[%s7 + $0x1e8] sm:$0xff] %v2492
    %2499 = vst [vmem:[%s7 + $0x1f0] sm:$0xff] %v2493
    %v2500 = vld [vmem:[%s7 + $0xf0] sm:$0xff]
    %v2501 = vld [vmem:[%s7 + $0xf8] sm:$0xff]
    %v2502 = vld [vmem:[%s7 + $0x100] sm:$0xff]
    %v2503 = vld [vmem:[%s7 + $0x1f8] sm:$0xff]
    %v2504 = vld [vmem:[%s7 + $0x200] sm:$0xff]
    %v2505 = vld [vmem:[%s7 + $0x208] sm:$0xff]
    %v2506 = vmul.f32 %v2500, %v2314
    %v2507 = vmul.f32 %v2501, %v2315
    %v2508 = vmul.f32 %v2502, %v2316
    %v2509 = vmul.f32 %v2503, %v2317
    %v2510 = vmul.f32 %v2504, %v2318
    %v2511 = vmul.f32 %v2505, %v2319
    %2512 = vst [vmem:[%s7 + $0xf0] sm:$0xff] %v2506
    %2513 = vst [vmem:[%s7 + $0xf8] sm:$0xff] %v2507
    %2514 = vst [vmem:[%s7 + $0x100] sm:$0xff] %v2508
    %2515 = vst [vmem:[%s7 + $0x1f8] sm:$0xff] %v2509
    %2516 = vst [vmem:[%s7 + $0x200] sm:$0xff] %v2510
    %2517 = vst [vmem:[%s7 + $0x208] sm:$0xff] %v2511
    // Predicated region
    $region50: #{_forward.1} parent=1 // pred_check
      _
    $region51: #{_forward.1} parent=1 // pred_check_branch
      %2519 = sbr.rel (0) target = $region53
    $region52: #{_forward.1} parent=1 // pred_region
      _
    $region53: #{_forward.1} parent=1 // pred_fallthru
      _
    // Predicated region
    $region54: #{_forward.1} parent=1 // pred_check
      _
    $region55: #{_forward.1} parent=1 // pred_check_branch
      %2521 = sbr.rel (0) target = $region57
    $region56: #{_forward.1} parent=1 // pred_region
      _
    $region57: #{_forward.1} parent=1 // pred_fallthru
      _
    %2522 = vsyncpa [#allocation3], 1
    %2523 = vsyncpa [#allocation5], 1
    %2524 = vsyncpa [#allocation8], 1

</llo_original>
